<compile_context>
chip_gen: v6e
topology: v6e:2x2x1
jax: 0.10.0
libtpu: 0.0.40
codegen_flags: <defaults>
</compile_context>

<pallas_src>
import functools

import jax
import jax.numpy as jnp
from jax import lax
from jax.experimental import pallas as pl
from jax.experimental.pallas import tpu as pltpu

IN_FEATURES = 196608   # fixed by the module definition
OUT_FEATURES = 10


def _linear_kernel(x_ref, w_ref, b_ref, o_ref, acc_ref):
    """One K-tile of y = x @ W.T + b, contracted on the VPU.

    x_ref:   (B, St, 128) f32   activation tile (St = tk // 128)
    w_ref:   (N, St, 128) bf16  weight tile (dense repack of PyTorch (N, K))
    b_ref:   (1, N)       f32   bias
    o_ref:   (B, N)       f32   output block (resident across the whole grid)
    acc_ref: (B, N, 128)  f32   lane-resident partial sums (VMEM scratch)
    """
    k = pl.program_id(0)

    @pl.when(k == 0)
    def _():
        acc_ref[...] = jnp.zeros_like(acc_ref)

    x = x_ref[...]                                        # (B, St, 128) f32
    n_out = w_ref.shape[0]
    for n in range(n_out):                                # static unroll, N = 10
        w_n = w_ref[n].astype(jnp.float32)                # (St, 128)
        # Elementwise product + cross-sublane reduce -> per-lane partials.
        acc_ref[:, n, :] += jnp.sum(x * w_n, axis=1)      # (B, 128)

    @pl.when(k == pl.num_programs(0) - 1)
    def _():
        # Single cross-lane reduction at the very end, bias folded in here.
        y = jnp.sum(acc_ref[...], axis=2) + b_ref[...]    # (B, N)
        o_ref[...] = y.astype(o_ref.dtype)


def pack_weight(w, dtype=jnp.bfloat16):
    """One-time repack of the PyTorch (out, in) weight into a dense,
    padding-free (out, in // 128, 128) layout, down-cast for streaming."""
    n, k = w.shape
    assert k % 128 == 0
    return w.reshape(n, k // 128, 128).astype(dtype)


@functools.partial(jax.jit, static_argnames=("tk",))
def net_forward(x, w_packed, b, *, tk=49152):
    """x: (B, K) f32, w_packed: (N, K//128, 128) bf16 (from pack_weight),
    b: (N,) f32.  Returns (B, N) in x.dtype."""
    B, K = x.shape
    N, S, L = w_packed.shape
    assert L == 128 and S * 128 == K
    assert K % tk == 0 and (tk // 128) % 16 == 0   # bf16 sublane tiling
    st = tk // 128

    # Dense, padding-free activation layout.  (Callers on a hot path should
    # produce x in this (B, K//128, 128) shape directly to avoid the relayout.)
    x_d = x.reshape(B, S, 128)
    b2 = b.reshape(1, N).astype(jnp.float32)

    out = pl.pallas_call(
        _linear_kernel,
        out_shape=jax.ShapeDtypeStruct((B, N), jnp.float32),
        grid_spec=pltpu.PrefetchScalarGridSpec(
            num_scalar_prefetch=0,
            grid=(K // tk,),
            in_specs=[
                pl.BlockSpec((B, st, 128), lambda k: (0, k, 0)),   # x tile
                pl.BlockSpec((N, st, 128), lambda k: (0, k, 0)),   # W tile
                pl.BlockSpec((1, N), lambda k: (0, 0)),            # bias
            ],
            out_specs=pl.BlockSpec((B, N), lambda k: (0, 0)),
            scratch_shapes=[pltpu.VMEM((B, N, 128), jnp.float32)],
        ),
        compiler_params=pltpu.CompilerParams(
            dimension_semantics=("arbitrary",),   # K is a reduction axis
        ),
    )(x_d, w_packed, b2)
    return out.astype(x.dtype)


def init_params(key):
    """Deterministic init matching nn.Linear's U(-1/sqrt(fan_in), 1/sqrt(fan_in))."""
    kw, kb = jax.random.split(key)
    bound = 1.0 / (IN_FEATURES ** 0.5)
    # PyTorch stores weight as (out, in); keep that convention as the source.
    w = jax.random.uniform(
        kw, (OUT_FEATURES, IN_FEATURES), jnp.float32, minval=-bound, maxval=bound
    )
    b = jax.random.uniform(
        kb, (OUT_FEATURES,), jnp.float32, minval=-bound, maxval=bound
    )
    return w, b


if __name__ == "__main__":
    key = jax.random.PRNGKey(0)
    k_params, k_x = jax.random.split(key)

    w, b = init_params(k_params)             # w: (10, 196608) f32, b: (10,) f32
    batch = 2
    x = jax.random.normal(k_x, (batch, IN_FEATURES), jnp.float32)

    # One-time weight repack + bf16 cast (outside the jit; amortized).
    w_packed = pack_weight(w)                # (10, 1536, 128) bf16

    y = jax.block_until_ready(net_forward(x, w_packed, b))
    assert y.shape == (batch, OUT_FEATURES)

    # Exact reference for what the kernel computes (bf16-quantized weights,
    # f32 accumulation).
    w_q = w_packed.astype(jnp.float32).reshape(OUT_FEATURES, IN_FEATURES)
    y_ref = jnp.dot(x, w_q.T, precision=lax.Precision.HIGHEST) + b
    assert jnp.allclose(y, y_ref, atol=1e-3, rtol=1e-3), jnp.max(jnp.abs(y - y_ref))

    # Sanity bound vs. the full-f32 PyTorch module: bf16 weight quantization
    # contributes ~1e-3 absolute error at this fan-in (outputs are O(0.5)).
    y_f32 = jnp.dot(x, w.T, precision=lax.Precision.HIGHEST) + b
    assert jnp.allclose(y, y_f32, atol=2e-2, rtol=2e-2), jnp.max(jnp.abs(y - y_f32))

    print("KERNEL_OK")
</pallas_src>

<mosaic_0001>
module attributes {stable_mosaic.version = 11 : i64} {
  func.func @_linear_kernel(%arg0: i32, %arg1: memref<2x384x128xf32, #tpu.memory_space<vmem>>, %arg2: memref<10x384x128xbf16, #tpu.memory_space<vmem>>, %arg3: memref<1x10xf32, #tpu.memory_space<vmem>>, %arg4: memref<2x10xf32, #tpu.memory_space<vmem>>, %arg5: memref<2x10x128xf32, #tpu.memory_space<vmem>>) attributes {dimension_semantics = [#tpu.dimension_semantics<arbitrary>], iteration_bounds = array<i64: 4>, scalar_prefetch = 0 : i64, scratch_operands = 1 : i64, tpu.core_type = #tpu.core_type<tc>, window_params = [{transform_indices = @transform_0, window_bounds = array<i64: 2, 384, 128>}, {transform_indices = @transform_1, window_bounds = array<i64: 10, 384, 128>}, {pipeline_mode = #tpu.pipeline_mode<synchronous>, transform_indices = @transform_2, window_bounds = array<i64: 1, 10>}, {pipeline_mode = #tpu.pipeline_mode<synchronous>, transform_indices = @transform_3, window_bounds = array<i64: 2, 10>}]} {
    %c0_i32 = arith.constant 0 : i32
    %0 = arith.cmpi eq, %arg0, %c0_i32 : i32
    %1 = arith.extui %0 : i1 to i32
    %c0_i32_0 = arith.constant 0 : i32
    %2 = arith.cmpi ne, %1, %c0_i32_0 : i32
    scf.if %2 {
      %cst_94 = arith.constant 0.000000e+00 : f32
      %137 = vector.broadcast %cst_94 : f32 to vector<2x10x128xf32>
      %c0_95 = arith.constant 0 : index
      %c0_96 = arith.constant 0 : index
      %c0_97 = arith.constant 0 : index
      %138 = vector.load %arg5[%c0_95, %c0_96, %c0_97] : memref<2x10x128xf32, #tpu.memory_space<vmem>>, vector<2x10x128xf32>
      tpu.vector_store %arg5[%c0_95, %c0_96, %c0_97], %137 {strides = array<i32>} : memref<2x10x128xf32, #tpu.memory_space<vmem>>, vector<2x10x128xf32>,
    } else {
    }
    %c0 = arith.constant 0 : index
    %c0_1 = arith.constant 0 : index
    %c0_2 = arith.constant 0 : index
    %3 = vector.load %arg1[%c0, %c0_1, %c0_2] : memref<2x384x128xf32, #tpu.memory_space<vmem>>, vector<2x384x128xf32>
    %c0_3 = arith.constant 0 : index
    %c0_4 = arith.constant 0 : index
    %c0_5 = arith.constant 0 : index
    %4 = vector.load %arg2[%c0_3, %c0_4, %c0_5] : memref<10x384x128xbf16, #tpu.memory_space<vmem>>, vector<1x384x128xbf16>
    %5 = vector.shape_cast %4 : vector<1x384x128xbf16> to vector<384x128xbf16>
    %6 = arith.extf %5 : vector<384x128xbf16> to vector<384x128xf32>
    %c0_6 = arith.constant 0 : index
    %c0_7 = arith.constant 0 : index
    %c0_8 = arith.constant 0 : index
    %7 = vector.load %arg5[%c0_6, %c0_7, %c0_8] : memref<2x10x128xf32, #tpu.memory_space<vmem>>, vector<2x1x128xf32>
    %8 = vector.shape_cast %7 : vector<2x1x128xf32> to vector<2x128xf32>
    %9 = vector.shape_cast %6 : vector<384x128xf32> to vector<1x384x128xf32>
    %10 = vector.broadcast %9 : vector<1x384x128xf32> to vector<2x384x128xf32>
    %11 = arith.mulf %3, %10 : vector<2x384x128xf32>
    %cst = arith.constant dense<0.000000e+00> : vector<2x128xf32>
    %12 = vector.multi_reduction <add>, %11, %cst [1] : vector<2x384x128xf32> to vector<2x128xf32>
    %13 = arith.addf %8, %12 : vector<2x128xf32>
    %c0_9 = arith.constant 0 : index
    %c0_10 = arith.constant 0 : index
    %c0_11 = arith.constant 0 : index
    %14 = vector.load %arg5[%c0_9, %c0_10, %c0_11] : memref<2x10x128xf32, #tpu.memory_space<vmem>>, vector<2x1x128xf32>
    %15 = vector.shape_cast %14 : vector<2x1x128xf32> to vector<2x128xf32>
    %16 = vector.shape_cast %13 : vector<2x128xf32> to vector<2x1x128xf32>
    tpu.vector_store %arg5[%c0_9, %c0_10, %c0_11], %16 {strides = array<i32>} : memref<2x10x128xf32, #tpu.memory_space<vmem>>, vector<2x1x128xf32>,
    %c1 = arith.constant 1 : index
    %c0_12 = arith.constant 0 : index
    %c0_13 = arith.constant 0 : index
    %17 = vector.load %arg2[%c1, %c0_12, %c0_13] : memref<10x384x128xbf16, #tpu.memory_space<vmem>>, vector<1x384x128xbf16>
    %18 = vector.shape_cast %17 : vector<1x384x128xbf16> to vector<384x128xbf16>
    %19 = arith.extf %18 : vector<384x128xbf16> to vector<384x128xf32>
    %c0_14 = arith.constant 0 : index
    %c1_15 = arith.constant 1 : index
    %c0_16 = arith.constant 0 : index
    %20 = vector.load %arg5[%c0_14, %c1_15, %c0_16] : memref<2x10x128xf32, #tpu.memory_space<vmem>>, vector<2x1x128xf32>
    %21 = vector.shape_cast %20 : vector<2x1x128xf32> to vector<2x128xf32>
    %22 = vector.shape_cast %19 : vector<384x128xf32> to vector<1x384x128xf32>
    %23 = vector.broadcast %22 : vector<1x384x128xf32> to vector<2x384x128xf32>
    %24 = arith.mulf %3, %23 : vector<2x384x128xf32>
    %cst_17 = arith.constant dense<0.000000e+00> : vector<2x128xf32>
    %25 = vector.multi_reduction <add>, %24, %cst_17 [1] : vector<2x384x128xf32> to vector<2x128xf32>
    %26 = arith.addf %21, %25 : vector<2x128xf32>
    %c0_18 = arith.constant 0 : index
    %c1_19 = arith.constant 1 : index
    %c0_20 = arith.constant 0 : index
    %27 = vector.load %arg5[%c0_18, %c1_19, %c0_20] : memref<2x10x128xf32, #tpu.memory_space<vmem>>, vector<2x1x128xf32>
    %28 = vector.shape_cast %27 : vector<2x1x128xf32> to vector<2x128xf32>
    %29 = vector.shape_cast %26 : vector<2x128xf32> to vector<2x1x128xf32>
    tpu.vector_store %arg5[%c0_18, %c1_19, %c0_20], %29 {strides = array<i32>} : memref<2x10x128xf32, #tpu.memory_space<vmem>>, vector<2x1x128xf32>,
    %c2 = arith.constant 2 : index
    %c0_21 = arith.constant 0 : index
    %c0_22 = arith.constant 0 : index
    %30 = vector.load %arg2[%c2, %c0_21, %c0_22] : memref<10x384x128xbf16, #tpu.memory_space<vmem>>, vector<1x384x128xbf16>
    %31 = vector.shape_cast %30 : vector<1x384x128xbf16> to vector<384x128xbf16>
    %32 = arith.extf %31 : vector<384x128xbf16> to vector<384x128xf32>
    %c0_23 = arith.constant 0 : index
    %c2_24 = arith.constant 2 : index
    %c0_25 = arith.constant 0 : index
    %33 = vector.load %arg5[%c0_23, %c2_24, %c0_25] : memref<2x10x128xf32, #tpu.memory_space<vmem>>, vector<2x1x128xf32>
    %34 = vector.shape_cast %33 : vector<2x1x128xf32> to vector<2x128xf32>
    %35 = vector.shape_cast %32 : vector<384x128xf32> to vector<1x384x128xf32>
    %36 = vector.broadcast %35 : vector<1x384x128xf32> to vector<2x384x128xf32>
    %37 = arith.mulf %3, %36 : vector<2x384x128xf32>
    %cst_26 = arith.constant dense<0.000000e+00> : vector<2x128xf32>
    %38 = vector.multi_reduction <add>, %37, %cst_26 [1] : vector<2x384x128xf32> to vector<2x128xf32>
    %39 = arith.addf %34, %38 : vector<2x128xf32>
    %c0_27 = arith.constant 0 : index
    %c2_28 = arith.constant 2 : index
    %c0_29 = arith.constant 0 : index
    %40 = vector.load %arg5[%c0_27, %c2_28, %c0_29] : memref<2x10x128xf32, #tpu.memory_space<vmem>>, vector<2x1x128xf32>
    %41 = vector.shape_cast %40 : vector<2x1x128xf32> to vector<2x128xf32>
    %42 = vector.shape_cast %39 : vector<2x128xf32> to vector<2x1x128xf32>
    tpu.vector_store %arg5[%c0_27, %c2_28, %c0_29], %42 {strides = array<i32>} : memref<2x10x128xf32, #tpu.memory_space<vmem>>, vector<2x1x128xf32>,
    %c3 = arith.constant 3 : index
    %c0_30 = arith.constant 0 : index
    %c0_31 = arith.constant 0 : index
    %43 = vector.load %arg2[%c3, %c0_30, %c0_31] : memref<10x384x128xbf16, #tpu.memory_space<vmem>>, vector<1x384x128xbf16>
    %44 = vector.shape_cast %43 : vector<1x384x128xbf16> to vector<384x128xbf16>
    %45 = arith.extf %44 : vector<384x128xbf16> to vector<384x128xf32>
    %c0_32 = arith.constant 0 : index
    %c3_33 = arith.constant 3 : index
    %c0_34 = arith.constant 0 : index
    %46 = vector.load %arg5[%c0_32, %c3_33, %c0_34] : memref<2x10x128xf32, #tpu.memory_space<vmem>>, vector<2x1x128xf32>
    %47 = vector.shape_cast %46 : vector<2x1x128xf32> to vector<2x128xf32>
    %48 = vector.shape_cast %45 : vector<384x128xf32> to vector<1x384x128xf32>
    %49 = vector.broadcast %48 : vector<1x384x128xf32> to vector<2x384x128xf32>
    %50 = arith.mulf %3, %49 : vector<2x384x128xf32>
    %cst_35 = arith.constant dense<0.000000e+00> : vector<2x128xf32>
    %51 = vector.multi_reduction <add>, %50, %cst_35 [1] : vector<2x384x128xf32> to vector<2x128xf32>
    %52 = arith.addf %47, %51 : vector<2x128xf32>
    %c0_36 = arith.constant 0 : index
    %c3_37 = arith.constant 3 : index
    %c0_38 = arith.constant 0 : index
    %53 = vector.load %arg5[%c0_36, %c3_37, %c0_38] : memref<2x10x128xf32, #tpu.memory_space<vmem>>, vector<2x1x128xf32>
    %54 = vector.shape_cast %53 : vector<2x1x128xf32> to vector<2x128xf32>
    %55 = vector.shape_cast %52 : vector<2x128xf32> to vector<2x1x128xf32>
    tpu.vector_store %arg5[%c0_36, %c3_37, %c0_38], %55 {strides = array<i32>} : memref<2x10x128xf32, #tpu.memory_space<vmem>>, vector<2x1x128xf32>,
    %c4 = arith.constant 4 : index
    %c0_39 = arith.constant 0 : index
    %c0_40 = arith.constant 0 : index
    %56 = vector.load %arg2[%c4, %c0_39, %c0_40] : memref<10x384x128xbf16, #tpu.memory_space<vmem>>, vector<1x384x128xbf16>
    %57 = vector.shape_cast %56 : vector<1x384x128xbf16> to vector<384x128xbf16>
    %58 = arith.extf %57 : vector<384x128xbf16> to vector<384x128xf32>
    %c0_41 = arith.constant 0 : index
    %c4_42 = arith.constant 4 : index
    %c0_43 = arith.constant 0 : index
    %59 = vector.load %arg5[%c0_41, %c4_42, %c0_43] : memref<2x10x128xf32, #tpu.memory_space<vmem>>, vector<2x1x128xf32>
    %60 = vector.shape_cast %59 : vector<2x1x128xf32> to vector<2x128xf32>
    %61 = vector.shape_cast %58 : vector<384x128xf32> to vector<1x384x128xf32>
    %62 = vector.broadcast %61 : vector<1x384x128xf32> to vector<2x384x128xf32>
    %63 = arith.mulf %3, %62 : vector<2x384x128xf32>
    %cst_44 = arith.constant dense<0.000000e+00> : vector<2x128xf32>
    %64 = vector.multi_reduction <add>, %63, %cst_44 [1] : vector<2x384x128xf32> to vector<2x128xf32>
    %65 = arith.addf %60, %64 : vector<2x128xf32>
    %c0_45 = arith.constant 0 : index
    %c4_46 = arith.constant 4 : index
    %c0_47 = arith.constant 0 : index
    %66 = vector.load %arg5[%c0_45, %c4_46, %c0_47] : memref<2x10x128xf32, #tpu.memory_space<vmem>>, vector<2x1x128xf32>
    %67 = vector.shape_cast %66 : vector<2x1x128xf32> to vector<2x128xf32>
    %68 = vector.shape_cast %65 : vector<2x128xf32> to vector<2x1x128xf32>
    tpu.vector_store %arg5[%c0_45, %c4_46, %c0_47], %68 {strides = array<i32>} : memref<2x10x128xf32, #tpu.memory_space<vmem>>, vector<2x1x128xf32>,
    %c5 = arith.constant 5 : index
    %c0_48 = arith.constant 0 : index
    %c0_49 = arith.constant 0 : index
    %69 = vector.load %arg2[%c5, %c0_48, %c0_49] : memref<10x384x128xbf16, #tpu.memory_space<vmem>>, vector<1x384x128xbf16>
    %70 = vector.shape_cast %69 : vector<1x384x128xbf16> to vector<384x128xbf16>
    %71 = arith.extf %70 : vector<384x128xbf16> to vector<384x128xf32>
    %c0_50 = arith.constant 0 : index
    %c5_51 = arith.constant 5 : index
    %c0_52 = arith.constant 0 : index
    %72 = vector.load %arg5[%c0_50, %c5_51, %c0_52] : memref<2x10x128xf32, #tpu.memory_space<vmem>>, vector<2x1x128xf32>
    %73 = vector.shape_cast %72 : vector<2x1x128xf32> to vector<2x128xf32>
    %74 = vector.shape_cast %71 : vector<384x128xf32> to vector<1x384x128xf32>
    %75 = vector.broadcast %74 : vector<1x384x128xf32> to vector<2x384x128xf32>
    %76 = arith.mulf %3, %75 : vector<2x384x128xf32>
    %cst_53 = arith.constant dense<0.000000e+00> : vector<2x128xf32>
    %77 = vector.multi_reduction <add>, %76, %cst_53 [1] : vector<2x384x128xf32> to vector<2x128xf32>
    %78 = arith.addf %73, %77 : vector<2x128xf32>
    %c0_54 = arith.constant 0 : index
    %c5_55 = arith.constant 5 : index
    %c0_56 = arith.constant 0 : index
    %79 = vector.load %arg5[%c0_54, %c5_55, %c0_56] : memref<2x10x128xf32, #tpu.memory_space<vmem>>, vector<2x1x128xf32>
    %80 = vector.shape_cast %79 : vector<2x1x128xf32> to vector<2x128xf32>
    %81 = vector.shape_cast %78 : vector<2x128xf32> to vector<2x1x128xf32>
    tpu.vector_store %arg5[%c0_54, %c5_55, %c0_56], %81 {strides = array<i32>} : memref<2x10x128xf32, #tpu.memory_space<vmem>>, vector<2x1x128xf32>,
    %c6 = arith.constant 6 : index
    %c0_57 = arith.constant 0 : index
    %c0_58 = arith.constant 0 : index
    %82 = vector.load %arg2[%c6, %c0_57, %c0_58] : memref<10x384x128xbf16, #tpu.memory_space<vmem>>, vector<1x384x128xbf16>
    %83 = vector.shape_cast %82 : vector<1x384x128xbf16> to vector<384x128xbf16>
    %84 = arith.extf %83 : vector<384x128xbf16> to vector<384x128xf32>
    %c0_59 = arith.constant 0 : index
    %c6_60 = arith.constant 6 : index
    %c0_61 = arith.constant 0 : index
    %85 = vector.load %arg5[%c0_59, %c6_60, %c0_61] : memref<2x10x128xf32, #tpu.memory_space<vmem>>, vector<2x1x128xf32>
    %86 = vector.shape_cast %85 : vector<2x1x128xf32> to vector<2x128xf32>
    %87 = vector.shape_cast %84 : vector<384x128xf32> to vector<1x384x128xf32>
    %88 = vector.broadcast %87 : vector<1x384x128xf32> to vector<2x384x128xf32>
    %89 = arith.mulf %3, %88 : vector<2x384x128xf32>
    %cst_62 = arith.constant dense<0.000000e+00> : vector<2x128xf32>
    %90 = vector.multi_reduction <add>, %89, %cst_62 [1] : vector<2x384x128xf32> to vector<2x128xf32>
    %91 = arith.addf %86, %90 : vector<2x128xf32>
    %c0_63 = arith.constant 0 : index
    %c6_64 = arith.constant 6 : index
    %c0_65 = arith.constant 0 : index
    %92 = vector.load %arg5[%c0_63, %c6_64, %c0_65] : memref<2x10x128xf32, #tpu.memory_space<vmem>>, vector<2x1x128xf32>
    %93 = vector.shape_cast %92 : vector<2x1x128xf32> to vector<2x128xf32>
    %94 = vector.shape_cast %91 : vector<2x128xf32> to vector<2x1x128xf32>
    tpu.vector_store %arg5[%c0_63, %c6_64, %c0_65], %94 {strides = array<i32>} : memref<2x10x128xf32, #tpu.memory_space<vmem>>, vector<2x1x128xf32>,
    %c7 = arith.constant 7 : index
    %c0_66 = arith.constant 0 : index
    %c0_67 = arith.constant 0 : index
    %95 = vector.load %arg2[%c7, %c0_66, %c0_67] : memref<10x384x128xbf16, #tpu.memory_space<vmem>>, vector<1x384x128xbf16>
    %96 = vector.shape_cast %95 : vector<1x384x128xbf16> to vector<384x128xbf16>
    %97 = arith.extf %96 : vector<384x128xbf16> to vector<384x128xf32>
    %c0_68 = arith.constant 0 : index
    %c7_69 = arith.constant 7 : index
    %c0_70 = arith.constant 0 : index
    %98 = vector.load %arg5[%c0_68, %c7_69, %c0_70] : memref<2x10x128xf32, #tpu.memory_space<vmem>>, vector<2x1x128xf32>
    %99 = vector.shape_cast %98 : vector<2x1x128xf32> to vector<2x128xf32>
    %100 = vector.shape_cast %97 : vector<384x128xf32> to vector<1x384x128xf32>
    %101 = vector.broadcast %100 : vector<1x384x128xf32> to vector<2x384x128xf32>
    %102 = arith.mulf %3, %101 : vector<2x384x128xf32>
    %cst_71 = arith.constant dense<0.000000e+00> : vector<2x128xf32>
    %103 = vector.multi_reduction <add>, %102, %cst_71 [1] : vector<2x384x128xf32> to vector<2x128xf32>
    %104 = arith.addf %99, %103 : vector<2x128xf32>
    %c0_72 = arith.constant 0 : index
    %c7_73 = arith.constant 7 : index
    %c0_74 = arith.constant 0 : index
    %105 = vector.load %arg5[%c0_72, %c7_73, %c0_74] : memref<2x10x128xf32, #tpu.memory_space<vmem>>, vector<2x1x128xf32>
    %106 = vector.shape_cast %105 : vector<2x1x128xf32> to vector<2x128xf32>
    %107 = vector.shape_cast %104 : vector<2x128xf32> to vector<2x1x128xf32>
    tpu.vector_store %arg5[%c0_72, %c7_73, %c0_74], %107 {strides = array<i32>} : memref<2x10x128xf32, #tpu.memory_space<vmem>>, vector<2x1x128xf32>,
    %c8 = arith.constant 8 : index
    %c0_75 = arith.constant 0 : index
    %c0_76 = arith.constant 0 : index
    %108 = vector.load %arg2[%c8, %c0_75, %c0_76] : memref<10x384x128xbf16, #tpu.memory_space<vmem>>, vector<1x384x128xbf16>
    %109 = vector.shape_cast %108 : vector<1x384x128xbf16> to vector<384x128xbf16>
    %110 = arith.extf %109 : vector<384x128xbf16> to vector<384x128xf32>
    %c0_77 = arith.constant 0 : index
    %c8_78 = arith.constant 8 : index
    %c0_79 = arith.constant 0 : index
    %111 = vector.load %arg5[%c0_77, %c8_78, %c0_79] : memref<2x10x128xf32, #tpu.memory_space<vmem>>, vector<2x1x128xf32>
    %112 = vector.shape_cast %111 : vector<2x1x128xf32> to vector<2x128xf32>
    %113 = vector.shape_cast %110 : vector<384x128xf32> to vector<1x384x128xf32>
    %114 = vector.broadcast %113 : vector<1x384x128xf32> to vector<2x384x128xf32>
    %115 = arith.mulf %3, %114 : vector<2x384x128xf32>
    %cst_80 = arith.constant dense<0.000000e+00> : vector<2x128xf32>
    %116 = vector.multi_reduction <add>, %115, %cst_80 [1] : vector<2x384x128xf32> to vector<2x128xf32>
    %117 = arith.addf %112, %116 : vector<2x128xf32>
    %c0_81 = arith.constant 0 : index
    %c8_82 = arith.constant 8 : index
    %c0_83 = arith.constant 0 : index
    %118 = vector.load %arg5[%c0_81, %c8_82, %c0_83] : memref<2x10x128xf32, #tpu.memory_space<vmem>>, vector<2x1x128xf32>
    %119 = vector.shape_cast %118 : vector<2x1x128xf32> to vector<2x128xf32>
    %120 = vector.shape_cast %117 : vector<2x128xf32> to vector<2x1x128xf32>
    tpu.vector_store %arg5[%c0_81, %c8_82, %c0_83], %120 {strides = array<i32>} : memref<2x10x128xf32, #tpu.memory_space<vmem>>, vector<2x1x128xf32>,
    %c9 = arith.constant 9 : index
    %c0_84 = arith.constant 0 : index
    %c0_85 = arith.constant 0 : index
    %121 = vector.load %arg2[%c9, %c0_84, %c0_85] : memref<10x384x128xbf16, #tpu.memory_space<vmem>>, vector<1x384x128xbf16>
    %122 = vector.shape_cast %121 : vector<1x384x128xbf16> to vector<384x128xbf16>
    %123 = arith.extf %122 : vector<384x128xbf16> to vector<384x128xf32>
    %c0_86 = arith.constant 0 : index
    %c9_87 = arith.constant 9 : index
    %c0_88 = arith.constant 0 : index
    %124 = vector.load %arg5[%c0_86, %c9_87, %c0_88] : memref<2x10x128xf32, #tpu.memory_space<vmem>>, vector<2x1x128xf32>
    %125 = vector.shape_cast %124 : vector<2x1x128xf32> to vector<2x128xf32>
    %126 = vector.shape_cast %123 : vector<384x128xf32> to vector<1x384x128xf32>
    %127 = vector.broadcast %126 : vector<1x384x128xf32> to vector<2x384x128xf32>
    %128 = arith.mulf %3, %127 : vector<2x384x128xf32>
    %cst_89 = arith.constant dense<0.000000e+00> : vector<2x128xf32>
    %129 = vector.multi_reduction <add>, %128, %cst_89 [1] : vector<2x384x128xf32> to vector<2x128xf32>
    %130 = arith.addf %125, %129 : vector<2x128xf32>
    %c0_90 = arith.constant 0 : index
    %c9_91 = arith.constant 9 : index
    %c0_92 = arith.constant 0 : index
    %131 = vector.load %arg5[%c0_90, %c9_91, %c0_92] : memref<2x10x128xf32, #tpu.memory_space<vmem>>, vector<2x1x128xf32>
    %132 = vector.shape_cast %131 : vector<2x1x128xf32> to vector<2x128xf32>
    %133 = vector.shape_cast %130 : vector<2x128xf32> to vector<2x1x128xf32>
    tpu.vector_store %arg5[%c0_90, %c9_91, %c0_92], %133 {strides = array<i32>} : memref<2x10x128xf32, #tpu.memory_space<vmem>>, vector<2x1x128xf32>,
    %c3_i32 = arith.constant 3 : i32
    %134 = arith.cmpi eq, %arg0, %c3_i32 : i32
    %135 = arith.extui %134 : i1 to i32
    %c0_i32_93 = arith.constant 0 : i32
    %136 = arith.cmpi ne, %135, %c0_i32_93 : i32
    scf.if %136 {
      %c0_94 = arith.constant 0 : index
      %c0_95 = arith.constant 0 : index
      %c0_96 = arith.constant 0 : index
      %137 = vector.load %arg5[%c0_94, %c0_95, %c0_96] : memref<2x10x128xf32, #tpu.memory_space<vmem>>, vector<2x10x128xf32>
      %cst_97 = arith.constant dense<0.000000e+00> : vector<2x10xf32>
      %138 = vector.multi_reduction <add>, %137, %cst_97 [2] : vector<2x10x128xf32> to vector<2x10xf32>
      %c0_98 = arith.constant 0 : index
      %c0_99 = arith.constant 0 : index
      %139 = vector.load %arg3[%c0_98, %c0_99] : memref<1x10xf32, #tpu.memory_space<vmem>>, vector<1x10xf32>
      %140 = vector.broadcast %139 : vector<1x10xf32> to vector<2x10xf32>
      %141 = arith.addf %138, %140 : vector<2x10xf32>
      %c0_100 = arith.constant 0 : index
      %c0_101 = arith.constant 0 : index
      %142 = vector.load %arg4[%c0_100, %c0_101] : memref<2x10xf32, #tpu.memory_space<vmem>>, vector<2x10xf32>
      tpu.vector_store %arg4[%c0_100, %c0_101], %141 {strides = array<i32>} : memref<2x10xf32, #tpu.memory_space<vmem>>, vector<2x10xf32>,
    } else {
    }
    return
  }
  func.func @transform_0(%arg0: i32) -> (i32, i32, i32) {
    %c0_i32 = arith.constant 0 : i32
    %c0_i32_0 = arith.constant 0 : i32
    %c0_i32_1 = arith.constant 0 : i32
    return %c0_i32, %arg0, %c0_i32_0 : i32, i32, i32
  }
  func.func @transform_1(%arg0: i32) -> (i32, i32, i32) {
    %c0_i32 = arith.constant 0 : i32
    %c0_i32_0 = arith.constant 0 : i32
    %c0_i32_1 = arith.constant 0 : i32
    return %c0_i32, %arg0, %c0_i32_0 : i32, i32, i32
  }
  func.func @transform_2(%arg0: i32) -> (i32, i32) {
    %c0_i32 = arith.constant 0 : i32
    %c0_i32_0 = arith.constant 0 : i32
    %c0_i32_1 = arith.constant 0 : i32
    return %c0_i32, %c0_i32_0 : i32, i32
  }
  func.func @transform_3(%arg0: i32) -> (i32, i32) {
    %c0_i32 = arith.constant 0 : i32
    %c0_i32_0 = arith.constant 0 : i32
    %c0_i32_1 = arith.constant 0 : i32
    return %c0_i32, %c0_i32_0 : i32, i32
  }
}

</mosaic_0001>

<llo_original>
// kernel: net_forward.1
$region0: #{net_forward.1}
  #allocation0 [shape = 'u32[]', space=smem, size = 0x4, offset = 0x4, fixed_abs, tag = 'smem constant byte address 0x4 - core index']
  #allocation1 [shape = 'u32[144,128]{1,0:T(1,128)}', space=vmem, size = 0x12000, scoped, tag = 'internal scratch']
  #allocation2 [shape = 'f32[2,10,128]{2,1,0:T(8,128)}', space=vmem, size = 0x4000, scoped, tag = 'scratch operand']
  #allocation8 [shape = 's32[]', space=sflag, size = 0x4, offset = 0, fixed_abs, tag = 'sflag constant byte address 0x0 - dummy sync flag']
  %s0 = inlined_call_operand.vmem [shape: f32[2,1536,128], index: 0, kind: input, shape index: {}]
  %s1 = inlined_call_operand.hbm [shape: bf16[10,1536,128], index: 1, kind: input, shape index: {}]
  %s2 = inlined_call_operand.vmem [shape: f32[1,10], index: 2, kind: input, shape index: {}]
  %s3 = inlined_call_operand.hbm [shape: f32[2,10], index: 3, kind: output, shape index: {}]
  %s4 = sld [smem:[#allocation0]]
  $region95: #{net_forward.1} parent=0
    _
  %s6 = ssub.s32 1, %s4
  %s7 = scalar_select 0, %s6, %s4
  $region1: #{net_forward.1} parent=0
    #allocation3 [shape = 'u8[786432]{0}', space=vmem, size = 0xc0000, scoped, tag = 'input window, operand 0']
    #allocation4 [shape = 'u8[1966080]{0}', space=vmem, size = 0x1e0000, scoped, tag = 'input window, operand 1']
    #allocation5 [shape = 's32[2]{0}', space=sflag, size = 0x8, scoped, tag = 'scoped memory for net_forward.1']
    #allocation6 [shape = 's32[2]{0}', space=sflag, size = 0x8, scoped, tag = 'scoped memory for net_forward.1']
    #allocation7 [shape = 'u8[1024]{0}', space=vmem, size = 0x400, scoped, tag = 'output window, operand 0, single buffered']
    %8 = vsyncpa [#allocation5], 0
    %s9 = scalar_lea.sflag [#allocation5], 1
    %10 = vsyncpa %s9, 0
    %11 = vsyncpa [#allocation6], 0
    loop: start=0, step=1, limit=6
    $region2: #{net_forward.1} parent=1 // loop_pre_header
      _
    $region3: #{net_forward.1} parent=1 // loop_header
      %s13 = sphi 0, %s17
      %p14 = scmp.ge.s32.totalorder %s13, 6
      %s23 = sphi 0, %s25
      %s26 = sphi 0, %s23
      %s27 = sphi 0, %s26
      %s43 = sphi 0, %s27
      %s49 = sphi 0, %s51
      %s52 = sphi 0, %s49
      %s53 = sphi 0, %s52
      %s69 = sphi 0, %s53
      %s73 = sphi 0, %s73
      %s75 = sphi 0, %s73
      %s76 = sphi 0, %s75
      %s90 = sphi 0, %s76
      %s94 = sphi 0, %s94
      %s96 = sphi 0, %s94
      %s97 = sphi 0, %s96
      %s111 = sphi 0, %s97
    $region4: #{net_forward.1} parent=1 // loop_header_branch
      %16 = sbr.rel (%p14) target = $region8
    $region5: #{net_forward.1} parent=1 // loop_body
      %s18 = ssub.s32 %s13, 1
      %s19 = ssub.s32 %s13, 2
      %s20 = sadd.s32 %s13, 1
      %s21 = ssub.s32 %s13, %s20
      %p22 = scmp.eq.s32.totalorder %s21, 0
      %s24 = sadd.s32 %s23, 1
      %s25 = scalar_select %p22, %s23, %s24
      %p28 = pneg %p22
      %p29 = scmp.eq.s32.totalorder %s13, 3
      %p30 = por %p28, %p29
      %p31 = scmp.ne.s32.totalorder %s23, %s26
      %p32 = scmp.eq.s32.totalorder %s13, 0
      %p33 = por %p31, %p32
      %p34 = scmp.ne.s32.totalorder %s23, %s26
      %p35 = scmp.eq.s32.totalorder %s18, 3
      %p36 = por %p34, %p35
      %p37 = scmp.ne.s32.totalorder %s26, %s27
      %p38 = scmp.eq.s32.totalorder %s18, 0
      %p39 = por %p37, %p38
      %p40 = scmp.ne.s32.totalorder %s26, %s27
      %p41 = scmp.eq.s32.totalorder %s19, 3
      %p42 = por %p40, %p41
      %p44 = scmp.ne.s32.totalorder %s27, %s43
      %p45 = scmp.eq.s32.totalorder %s19, 0
      %p46 = por %p44, %p45
      %s47 = ssub.s32 %s13, %s20
      %p48 = scmp.eq.s32.totalorder %s47, 0
      %s50 = sadd.s32 %s49, 1
      %s51 = scalar_select %p48, %s49, %s50
      %p54 = pneg %p48
      %p55 = scmp.eq.s32.totalorder %s13, 3
      %p56 = por %p54, %p55
      %p57 = scmp.ne.s32.totalorder %s49, %s52
      %p58 = scmp.eq.s32.totalorder %s13, 0
      %p59 = por %p57, %p58
      %p60 = scmp.ne.s32.totalorder %s49, %s52
      %p61 = scmp.eq.s32.totalorder %s18, 3
      %p62 = por %p60, %p61
      %p63 = scmp.ne.s32.totalorder %s52, %s53
      %p64 = scmp.eq.s32.totalorder %s18, 0
      %p65 = por %p63, %p64
      %p66 = scmp.ne.s32.totalorder %s52, %s53
      %p67 = scmp.eq.s32.totalorder %s19, 3
      %p68 = por %p66, %p67
      %p70 = scmp.ne.s32.totalorder %s53, %s69
      %p71 = scmp.eq.s32.totalorder %s19, 0
      %p72 = por %p70, %p71
      %s74 = sadd.s32 %s73, 1
      %p77 = scmp.eq.s32.totalorder %s13, 3
      %p78 = scmp.ne.s32.totalorder %s73, %s75
      %p79 = scmp.eq.s32.totalorder %s13, 0
      %p80 = por %p78, %p79
      %p81 = scmp.ne.s32.totalorder %s73, %s75
      %p82 = scmp.eq.s32.totalorder %s18, 3
      %p83 = por %p81, %p82
      %p84 = scmp.ne.s32.totalorder %s75, %s76
      %p85 = scmp.eq.s32.totalorder %s18, 0
      %p86 = por %p84, %p85
      %p87 = scmp.ne.s32.totalorder %s75, %s76
      %p88 = scmp.eq.s32.totalorder %s19, 3
      %p89 = por %p87, %p88
      %p91 = scmp.ne.s32.totalorder %s76, %s90
      %p92 = scmp.eq.s32.totalorder %s19, 0
      %p93 = por %p91, %p92
      %s95 = sadd.s32 %s94, 1
      %p98 = scmp.eq.s32.totalorder %s13, 3
      %p99 = scmp.ne.s32.totalorder %s94, %s96
      %p100 = scmp.eq.s32.totalorder %s13, 0
      %p101 = por %p99, %p100
      %p102 = scmp.ne.s32.totalorder %s94, %s96
      %p103 = scmp.eq.s32.totalorder %s18, 3
      %p104 = por %p102, %p103
      %p105 = scmp.ne.s32.totalorder %s96, %s97
      %p106 = scmp.eq.s32.totalorder %s18, 0
      %p107 = por %p105, %p106
      %p108 = scmp.ne.s32.totalorder %s96, %s97
      %p109 = scmp.eq.s32.totalorder %s19, 3
      %p110 = por %p108, %p109
      %p112 = scmp.ne.s32.totalorder %s97, %s111
      %p113 = scmp.eq.s32.totalorder %s19, 0
      %p114 = por %p112, %p113
      %p115 = scmp.le.s32.totalorder 1, %s13
      %p116 = scmp.lt.s32.totalorder %s13, 5
      %p117 = pnand %p115, %p116
      %p118 = pneg %p117
      // Predicated region
      $region9: #{net_forward.1} parent=5 // pred_check
        _
      $region10: #{net_forward.1} parent=5 // pred_check_branch
        %120 = sbr.rel (%p117) target = $region12
      $region11: #{net_forward.1} parent=5 // pred_region
        %s121 = ssub.s32 %s13, 1
        // Predicated region
        $region13: #{net_forward.1} parent=11 // pred_check
          %p122 = pneg %p86
        $region14: #{net_forward.1} parent=11 // pred_check_branch
          %124 = sbr.rel (%p122) target = $region16
        $region15: #{net_forward.1} parent=11 // pred_region
          _
        $region16: #{net_forward.1} parent=11 // pred_fallthru
          _
      $region12: #{net_forward.1} parent=5 // pred_fallthru
        _
      %p125 = scmp.lt.s32.totalorder %s13, 4
      // Predicated region
      $region17: #{net_forward.1} parent=5 // pred_check
        %p126 = pneg %p125
      $region18: #{net_forward.1} parent=5 // pred_check_branch
        %128 = sbr.rel (%p126) target = $region20
      $region19: #{net_forward.1} parent=5 // pred_region
        // Predicated region
        $region21: #{net_forward.1} parent=19 // pred_check
          %p129 = pneg %p33
        $region22: #{net_forward.1} parent=19 // pred_check_branch
          %131 = sbr.rel (%p129) target = $region24
        $region23: #{net_forward.1} parent=19 // pred_region
          %s132 = sand.u32 %s23, 1
          %s133 = sand.u32 %s23, 1
          %s134 = smul.addr %s133, 768
          %s135 = scalar_lea.vmem [#allocation3], %s134
          %s136 = smul.u32 48, %s13
          %s137 = smul.addr %s136, 8
          %s138 = scalar_lea.vmem %s0, %s137
          // Predicated region
          $region25: #{net_forward.1} parent=23 // pred_check
            _
          $region26: #{net_forward.1} parent=23 // pred_check_branch
            %140 = sbr.rel (0) target = $region28
          $region27: #{net_forward.1} parent=23 // pred_region
            // Predicated region
            $region29: #{net_forward.1} parent=27 // pred_check
              _
            $region30: #{net_forward.1} parent=27 // pred_check_branch
              %142 = sbr.rel (0) target = $region32
            $region31: #{net_forward.1} parent=27 // pred_region
              // Predicated region
              $region44: #{net_forward.1} parent=31 // pred_check
                _
              $region45: #{net_forward.1} parent=31 // pred_check_branch
                %348 = sbr.rel (0) target = $region47
              $region46: #{net_forward.1} parent=31 // pred_region
                loop: start=0, step=1, limit=1
                $region48: #{net_forward.1} parent=46 // loop_pre_header
                  _
                $region49: #{net_forward.1} parent=46 // loop_header
                  %s350 = sphi 0, %s354
                  %p351 = scmp.ge.s32.totalorder %s350, 1
                  %s355 = sphi %s138, %s138
                  %s356 = sphi %s135, %s135
                $region50: #{net_forward.1} parent=46 // loop_header_branch
                  %353 = sbr.rel (%p351) target = $region54
                $region51: #{net_forward.1} parent=46 // loop_body
                  %v357 = vld [vmem:[%s355] sm:$0xff]
                  %358 = vst [vmem:[%s356] sm:$0xff] %v357
                  %v359 = vld [vmem:[%s355 + $0x8] sm:$0xff]
                  %360 = vst [vmem:[%s356 + $0x8] sm:$0xff] %v359
                  %v361 = vld [vmem:[%s355 + $0x10] sm:$0xff]
                  %362 = vst [vmem:[%s356 + $0x10] sm:$0xff] %v361
                  %v363 = vld [vmem:[%s355 + $0x18] sm:$0xff]
                  %364 = vst [vmem:[%s356 + $0x18] sm:$0xff] %v363
                  %v365 = vld [vmem:[%s355 + $0x20] sm:$0xff]
                  %366 = vst [vmem:[%s356 + $0x20] sm:$0xff] %v365
                  %v367 = vld [vmem:[%s355 + $0x28] sm:$0xff]
                  %368 = vst [vmem:[%s356 + $0x28] sm:$0xff] %v367
                  %v369 = vld [vmem:[%s355 + $0x30] sm:$0xff]
                  %370 = vst [vmem:[%s356 + $0x30] sm:$0xff] %v369
                  %v371 = vld [vmem:[%s355 + $0x38] sm:$0xff]
                  %372 = vst [vmem:[%s356 + $0x38] sm:$0xff] %v371
                  %v373 = vld [vmem:[%s355 + $0x40] sm:$0xff]
                  %374 = vst [vmem:[%s356 + $0x40] sm:$0xff] %v373
                  %v375 = vld [vmem:[%s355 + $0x48] sm:$0xff]
                  %376 = vst [vmem:[%s356 + $0x48] sm:$0xff] %v375
                  %v377 = vld [vmem:[%s355 + $0x50] sm:$0xff]
                  %378 = vst [vmem:[%s356 + $0x50] sm:$0xff] %v377
                  %v379 = vld [vmem:[%s355 + $0x58] sm:$0xff]
                  %380 = vst [vmem:[%s356 + $0x58] sm:$0xff] %v379
                  %v381 = vld [vmem:[%s355 + $0x60] sm:$0xff]
                  %382 = vst [vmem:[%s356 + $0x60] sm:$0xff] %v381
                  %v383 = vld [vmem:[%s355 + $0x68] sm:$0xff]
                  %384 = vst [vmem:[%s356 + $0x68] sm:$0xff] %v383
                  %v385 = vld [vmem:[%s355 + $0x70] sm:$0xff]
                  %386 = vst [vmem:[%s356 + $0x70] sm:$0xff] %v385
                  %v387 = vld [vmem:[%s355 + $0x78] sm:$0xff]
                  %388 = vst [vmem:[%s356 + $0x78] sm:$0xff] %v387
                  %v389 = vld [vmem:[%s355 + $0x80] sm:$0xff]
                  %390 = vst [vmem:[%s356 + $0x80] sm:$0xff] %v389
                  %v391 = vld [vmem:[%s355 + $0x88] sm:$0xff]
                  %392 = vst [vmem:[%s356 + $0x88] sm:$0xff] %v391
                  %v393 = vld [vmem:[%s355 + $0x90] sm:$0xff]
                  %394 = vst [vmem:[%s356 + $0x90] sm:$0xff] %v393
                  %v395 = vld [vmem:[%s355 + $0x98] sm:$0xff]
                  %396 = vst [vmem:[%s356 + $0x98] sm:$0xff] %v395
                  %v397 = vld [vmem:[%s355 + $0xa0] sm:$0xff]
                  %398 = vst [vmem:[%s356 + $0xa0] sm:$0xff] %v397
                  %v399 = vld [vmem:[%s355 + $0xa8] sm:$0xff]
                  %400 = vst [vmem:[%s356 + $0xa8] sm:$0xff] %v399
                  %v401 = vld [vmem:[%s355 + $0xb0] sm:$0xff]
                  %402 = vst [vmem:[%s356 + $0xb0] sm:$0xff] %v401
                  %v403 = vld [vmem:[%s355 + $0xb8] sm:$0xff]
                  %404 = vst [vmem:[%s356 + $0xb8] sm:$0xff] %v403
                  %v405 = vld [vmem:[%s355 + $0xc0] sm:$0xff]
                  %406 = vst [vmem:[%s356 + $0xc0] sm:$0xff] %v405
                  %v407 = vld [vmem:[%s355 + $0xc8] sm:$0xff]
                  %408 = vst [vmem:[%s356 + $0xc8] sm:$0xff] %v407
                  %v409 = vld [vmem:[%s355 + $0xd0] sm:$0xff]
                  %410 = vst [vmem:[%s356 + $0xd0] sm:$0xff] %v409
                  %v411 = vld [vmem:[%s355 + $0xd8] sm:$0xff]
                  %412 = vst [vmem:[%s356 + $0xd8] sm:$0xff] %v411
                  %v413 = vld [vmem:[%s355 + $0xe0] sm:$0xff]
                  %414 = vst [vmem:[%s356 + $0xe0] sm:$0xff] %v413
                  %v415 = vld [vmem:[%s355 + $0xe8] sm:$0xff]
                  %416 = vst [vmem:[%s356 + $0xe8] sm:$0xff] %v415
                  %v417 = vld [vmem:[%s355 + $0xf0] sm:$0xff]
                  %418 = vst [vmem:[%s356 + $0xf0] sm:$0xff] %v417
                  %v419 = vld [vmem:[%s355 + $0xf8] sm:$0xff]
                  %420 = vst [vmem:[%s356 + $0xf8] sm:$0xff] %v419
                  %v421 = vld [vmem:[%s355 + $0x100] sm:$0xff]
                  %422 = vst [vmem:[%s356 + $0x100] sm:$0xff] %v421
                  %v423 = vld [vmem:[%s355 + $0x108] sm:$0xff]
                  %424 = vst [vmem:[%s356 + $0x108] sm:$0xff] %v423
                  %v425 = vld [vmem:[%s355 + $0x110] sm:$0xff]
                  %426 = vst [vmem:[%s356 + $0x110] sm:$0xff] %v425
                  %v427 = vld [vmem:[%s355 + $0x118] sm:$0xff]
                  %428 = vst [vmem:[%s356 + $0x118] sm:$0xff] %v427
                  %v429 = vld [vmem:[%s355 + $0x120] sm:$0xff]
                  %430 = vst [vmem:[%s356 + $0x120] sm:$0xff] %v429
                  %v431 = vld [vmem:[%s355 + $0x128] sm:$0xff]
                  %432 = vst [vmem:[%s356 + $0x128] sm:$0xff] %v431
                  %v433 = vld [vmem:[%s355 + $0x130] sm:$0xff]
                  %434 = vst [vmem:[%s356 + $0x130] sm:$0xff] %v433
                  %v435 = vld [vmem:[%s355 + $0x138] sm:$0xff]
                  %436 = vst [vmem:[%s356 + $0x138] sm:$0xff] %v435
                  %v437 = vld [vmem:[%s355 + $0x140] sm:$0xff]
                  %438 = vst [vmem:[%s356 + $0x140] sm:$0xff] %v437
                  %v439 = vld [vmem:[%s355 + $0x148] sm:$0xff]
                  %440 = vst [vmem:[%s356 + $0x148] sm:$0xff] %v439
                  %v441 = vld [vmem:[%s355 + $0x150] sm:$0xff]
                  %442 = vst [vmem:[%s356 + $0x150] sm:$0xff] %v441
                  %v443 = vld [vmem:[%s355 + $0x158] sm:$0xff]
                  %444 = vst [vmem:[%s356 + $0x158] sm:$0xff] %v443
                  %v445 = vld [vmem:[%s355 + $0x160] sm:$0xff]
                  %446 = vst [vmem:[%s356 + $0x160] sm:$0xff] %v445
                  %v447 = vld [vmem:[%s355 + $0x168] sm:$0xff]
                  %448 = vst [vmem:[%s356 + $0x168] sm:$0xff] %v447
                  %v449 = vld [vmem:[%s355 + $0x170] sm:$0xff]
                  %450 = vst [vmem:[%s356 + $0x170] sm:$0xff] %v449
                  %v451 = vld [vmem:[%s355 + $0x178] sm:$0xff]
                  %452 = vst [vmem:[%s356 + $0x178] sm:$0xff] %v451
                  %v453 = vld [vmem:[%s355 + $0x600] sm:$0xff]
                  %454 = vst [vmem:[%s356 + $0x180] sm:$0xff] %v453
                  %v455 = vld [vmem:[%s355 + $0x608] sm:$0xff]
                  %456 = vst [vmem:[%s356 + $0x188] sm:$0xff] %v455
                  %v457 = vld [vmem:[%s355 + $0x610] sm:$0xff]
                  %458 = vst [vmem:[%s356 + $0x190] sm:$0xff] %v457
                  %v459 = vld [vmem:[%s355 + $0x618] sm:$0xff]
                  %460 = vst [vmem:[%s356 + $0x198] sm:$0xff] %v459
                  %v461 = vld [vmem:[%s355 + $0x620] sm:$0xff]
                  %462 = vst [vmem:[%s356 + $0x1a0] sm:$0xff] %v461
                  %v463 = vld [vmem:[%s355 + $0x628] sm:$0xff]
                  %464 = vst [vmem:[%s356 + $0x1a8] sm:$0xff] %v463
                  %v465 = vld [vmem:[%s355 + $0x630] sm:$0xff]
                  %466 = vst [vmem:[%s356 + $0x1b0] sm:$0xff] %v465
                  %v467 = vld [vmem:[%s355 + $0x638] sm:$0xff]
                  %468 = vst [vmem:[%s356 + $0x1b8] sm:$0xff] %v467
                  %v469 = vld [vmem:[%s355 + $0x640] sm:$0xff]
                  %470 = vst [vmem:[%s356 + $0x1c0] sm:$0xff] %v469
                  %v471 = vld [vmem:[%s355 + $0x648] sm:$0xff]
                  %472 = vst [vmem:[%s356 + $0x1c8] sm:$0xff] %v471
                  %v473 = vld [vmem:[%s355 + $0x650] sm:$0xff]
                  %474 = vst [vmem:[%s356 + $0x1d0] sm:$0xff] %v473
                  %v475 = vld [vmem:[%s355 + $0x658] sm:$0xff]
                  %476 = vst [vmem:[%s356 + $0x1d8] sm:$0xff] %v475
                  %v477 = vld [vmem:[%s355 + $0x660] sm:$0xff]
                  %478 = vst [vmem:[%s356 + $0x1e0] sm:$0xff] %v477
                  %v479 = vld [vmem:[%s355 + $0x668] sm:$0xff]
                  %480 = vst [vmem:[%s356 + $0x1e8] sm:$0xff] %v479
                  %v481 = vld [vmem:[%s355 + $0x670] sm:$0xff]
                  %482 = vst [vmem:[%s356 + $0x1f0] sm:$0xff] %v481
                  %v483 = vld [vmem:[%s355 + $0x678] sm:$0xff]
                  %484 = vst [vmem:[%s356 + $0x1f8] sm:$0xff] %v483
                  %v485 = vld [vmem:[%s355 + $0x680] sm:$0xff]
                  %486 = vst [vmem:[%s356 + $0x200] sm:$0xff] %v485
                  %v487 = vld [vmem:[%s355 + $0x688] sm:$0xff]
                  %488 = vst [vmem:[%s356 + $0x208] sm:$0xff] %v487
                  %v489 = vld [vmem:[%s355 + $0x690] sm:$0xff]
                  %490 = vst [vmem:[%s356 + $0x210] sm:$0xff] %v489
                  %v491 = vld [vmem:[%s355 + $0x698] sm:$0xff]
                  %492 = vst [vmem:[%s356 + $0x218] sm:$0xff] %v491
                  %v493 = vld [vmem:[%s355 + $0x6a0] sm:$0xff]
                  %494 = vst [vmem:[%s356 + $0x220] sm:$0xff] %v493
                  %v495 = vld [vmem:[%s355 + $0x6a8] sm:$0xff]
                  %496 = vst [vmem:[%s356 + $0x228] sm:$0xff] %v495
                  %v497 = vld [vmem:[%s355 + $0x6b0] sm:$0xff]
                  %498 = vst [vmem:[%s356 + $0x230] sm:$0xff] %v497
                  %v499 = vld [vmem:[%s355 + $0x6b8] sm:$0xff]
                  %500 = vst [vmem:[%s356 + $0x238] sm:$0xff] %v499
                  %v501 = vld [vmem:[%s355 + $0x6c0] sm:$0xff]
                  %502 = vst [vmem:[%s356 + $0x240] sm:$0xff] %v501
                  %v503 = vld [vmem:[%s355 + $0x6c8] sm:$0xff]
                  %504 = vst [vmem:[%s356 + $0x248] sm:$0xff] %v503
                  %v505 = vld [vmem:[%s355 + $0x6d0] sm:$0xff]
                  %506 = vst [vmem:[%s356 + $0x250] sm:$0xff] %v505
                  %v507 = vld [vmem:[%s355 + $0x6d8] sm:$0xff]
                  %508 = vst [vmem:[%s356 + $0x258] sm:$0xff] %v507
                  %v509 = vld [vmem:[%s355 + $0x6e0] sm:$0xff]
                  %510 = vst [vmem:[%s356 + $0x260] sm:$0xff] %v509
                  %v511 = vld [vmem:[%s355 + $0x6e8] sm:$0xff]
                  %512 = vst [vmem:[%s356 + $0x268] sm:$0xff] %v511
                  %v513 = vld [vmem:[%s355 + $0x6f0] sm:$0xff]
                  %514 = vst [vmem:[%s356 + $0x270] sm:$0xff] %v513
                  %v515 = vld [vmem:[%s355 + $0x6f8] sm:$0xff]
                  %516 = vst [vmem:[%s356 + $0x278] sm:$0xff] %v515
                  %v517 = vld [vmem:[%s355 + $0x700] sm:$0xff]
                  %518 = vst [vmem:[%s356 + $0x280] sm:$0xff] %v517
                  %v519 = vld [vmem:[%s355 + $0x708] sm:$0xff]
                  %520 = vst [vmem:[%s356 + $0x288] sm:$0xff] %v519
                  %v521 = vld [vmem:[%s355 + $0x710] sm:$0xff]
                  %522 = vst [vmem:[%s356 + $0x290] sm:$0xff] %v521
                  %v523 = vld [vmem:[%s355 + $0x718] sm:$0xff]
                  %524 = vst [vmem:[%s356 + $0x298] sm:$0xff] %v523
                  %v525 = vld [vmem:[%s355 + $0x720] sm:$0xff]
                  %526 = vst [vmem:[%s356 + $0x2a0] sm:$0xff] %v525
                  %v527 = vld [vmem:[%s355 + $0x728] sm:$0xff]
                  %528 = vst [vmem:[%s356 + $0x2a8] sm:$0xff] %v527
                  %v529 = vld [vmem:[%s355 + $0x730] sm:$0xff]
                  %530 = vst [vmem:[%s356 + $0x2b0] sm:$0xff] %v529
                  %v531 = vld [vmem:[%s355 + $0x738] sm:$0xff]
                  %532 = vst [vmem:[%s356 + $0x2b8] sm:$0xff] %v531
                  %v533 = vld [vmem:[%s355 + $0x740] sm:$0xff]
                  %534 = vst [vmem:[%s356 + $0x2c0] sm:$0xff] %v533
                  %v535 = vld [vmem:[%s355 + $0x748] sm:$0xff]
                  %536 = vst [vmem:[%s356 + $0x2c8] sm:$0xff] %v535
                  %v537 = vld [vmem:[%s355 + $0x750] sm:$0xff]
                  %538 = vst [vmem:[%s356 + $0x2d0] sm:$0xff] %v537
                  %v539 = vld [vmem:[%s355 + $0x758] sm:$0xff]
                  %540 = vst [vmem:[%s356 + $0x2d8] sm:$0xff] %v539
                  %v541 = vld [vmem:[%s355 + $0x760] sm:$0xff]
                  %542 = vst [vmem:[%s356 + $0x2e0] sm:$0xff] %v541
                  %v543 = vld [vmem:[%s355 + $0x768] sm:$0xff]
                  %544 = vst [vmem:[%s356 + $0x2e8] sm:$0xff] %v543
                  %v545 = vld [vmem:[%s355 + $0x770] sm:$0xff]
                  %546 = vst [vmem:[%s356 + $0x2f0] sm:$0xff] %v545
                  %v547 = vld [vmem:[%s355 + $0x778] sm:$0xff]
                  %548 = vst [vmem:[%s356 + $0x2f8] sm:$0xff] %v547
                $region52: #{net_forward.1} parent=46 // loop_footer
                  %s354 = sadd.s32 1, %s350
                $region53: #{net_forward.1} parent=46 // loop_footer_branch
                  %349 = sbr.rel target = $region49
                $region54: #{net_forward.1} parent=46 // loop_exit
                  _
              $region47: #{net_forward.1} parent=31 // pred_fallthru
                _
              // Predicated region
              $region55: #{net_forward.1} parent=31 // pred_check
                _
              $region56: #{net_forward.1} parent=31 // pred_check_branch
                %550 = sbr.rel target = $region58
              $region57: #{net_forward.1} parent=31 // pred_region
                _
              $region58: #{net_forward.1} parent=31 // pred_fallthru
                _
            $region32: #{net_forward.1} parent=27 // pred_fallthru
              _
            // Predicated region
            $region33: #{net_forward.1} parent=27 // pred_check
              _
            $region34: #{net_forward.1} parent=27 // pred_check_branch
              %144 = sbr.rel target = $region36
            $region35: #{net_forward.1} parent=27 // pred_region
              %s146 = ssub.s32 256, 1
              loop: start=0, step=1, limit=1
              $region37: #{net_forward.1} parent=35 // loop_pre_header
                _
              $region38: #{net_forward.1} parent=35 // loop_header
                %s148 = sphi 0, %s152
                %p149 = scmp.ge.s32.totalorder %s148, 1
                %s153 = sphi %s138, %s138
                %s154 = sphi %s135, %s135
              $region39: #{net_forward.1} parent=35 // loop_header_branch
                %151 = sbr.rel (%p149) target = $region43
              $region40: #{net_forward.1} parent=35 // loop_body
                %v155 = vld [vmem:[%s153] sm:%s146]
                %156 = vst [vmem:[%s154] sm:%s146] %v155
                %v157 = vld [vmem:[%s153 + $0x8] sm:%s146]
                %158 = vst [vmem:[%s154 + $0x8] sm:%s146] %v157
                %v159 = vld [vmem:[%s153 + $0x10] sm:%s146]
                %160 = vst [vmem:[%s154 + $0x10] sm:%s146] %v159
                %v161 = vld [vmem:[%s153 + $0x18] sm:%s146]
                %162 = vst [vmem:[%s154 + $0x18] sm:%s146] %v161
                %v163 = vld [vmem:[%s153 + $0x20] sm:%s146]
                %164 = vst [vmem:[%s154 + $0x20] sm:%s146] %v163
                %v165 = vld [vmem:[%s153 + $0x28] sm:%s146]
                %166 = vst [vmem:[%s154 + $0x28] sm:%s146] %v165
                %v167 = vld [vmem:[%s153 + $0x30] sm:%s146]
                %168 = vst [vmem:[%s154 + $0x30] sm:%s146] %v167
                %v169 = vld [vmem:[%s153 + $0x38] sm:%s146]
                %170 = vst [vmem:[%s154 + $0x38] sm:%s146] %v169
                %v171 = vld [vmem:[%s153 + $0x40] sm:%s146]
                %172 = vst [vmem:[%s154 + $0x40] sm:%s146] %v171
                %v173 = vld [vmem:[%s153 + $0x48] sm:%s146]
                %174 = vst [vmem:[%s154 + $0x48] sm:%s146] %v173
                %v175 = vld [vmem:[%s153 + $0x50] sm:%s146]
                %176 = vst [vmem:[%s154 + $0x50] sm:%s146] %v175
                %v177 = vld [vmem:[%s153 + $0x58] sm:%s146]
                %178 = vst [vmem:[%s154 + $0x58] sm:%s146] %v177
                %v179 = vld [vmem:[%s153 + $0x60] sm:%s146]
                %180 = vst [vmem:[%s154 + $0x60] sm:%s146] %v179
                %v181 = vld [vmem:[%s153 + $0x68] sm:%s146]
                %182 = vst [vmem:[%s154 + $0x68] sm:%s146] %v181
                %v183 = vld [vmem:[%s153 + $0x70] sm:%s146]
                %184 = vst [vmem:[%s154 + $0x70] sm:%s146] %v183
                %v185 = vld [vmem:[%s153 + $0x78] sm:%s146]
                %186 = vst [vmem:[%s154 + $0x78] sm:%s146] %v185
                %v187 = vld [vmem:[%s153 + $0x80] sm:%s146]
                %188 = vst [vmem:[%s154 + $0x80] sm:%s146] %v187
                %v189 = vld [vmem:[%s153 + $0x88] sm:%s146]
                %190 = vst [vmem:[%s154 + $0x88] sm:%s146] %v189
                %v191 = vld [vmem:[%s153 + $0x90] sm:%s146]
                %192 = vst [vmem:[%s154 + $0x90] sm:%s146] %v191
                %v193 = vld [vmem:[%s153 + $0x98] sm:%s146]
                %194 = vst [vmem:[%s154 + $0x98] sm:%s146] %v193
                %v195 = vld [vmem:[%s153 + $0xa0] sm:%s146]
                %196 = vst [vmem:[%s154 + $0xa0] sm:%s146] %v195
                %v197 = vld [vmem:[%s153 + $0xa8] sm:%s146]
                %198 = vst [vmem:[%s154 + $0xa8] sm:%s146] %v197
                %v199 = vld [vmem:[%s153 + $0xb0] sm:%s146]
                %200 = vst [vmem:[%s154 + $0xb0] sm:%s146] %v199
                %v201 = vld [vmem:[%s153 + $0xb8] sm:%s146]
                %202 = vst [vmem:[%s154 + $0xb8] sm:%s146] %v201
                %v203 = vld [vmem:[%s153 + $0xc0] sm:%s146]
                %204 = vst [vmem:[%s154 + $0xc0] sm:%s146] %v203
                %v205 = vld [vmem:[%s153 + $0xc8] sm:%s146]
                %206 = vst [vmem:[%s154 + $0xc8] sm:%s146] %v205
                %v207 = vld [vmem:[%s153 + $0xd0] sm:%s146]
                %208 = vst [vmem:[%s154 + $0xd0] sm:%s146] %v207
                %v209 = vld [vmem:[%s153 + $0xd8] sm:%s146]
                %210 = vst [vmem:[%s154 + $0xd8] sm:%s146] %v209
                %v211 = vld [vmem:[%s153 + $0xe0] sm:%s146]
                %212 = vst [vmem:[%s154 + $0xe0] sm:%s146] %v211
                %v213 = vld [vmem:[%s153 + $0xe8] sm:%s146]
                %214 = vst [vmem:[%s154 + $0xe8] sm:%s146] %v213
                %v215 = vld [vmem:[%s153 + $0xf0] sm:%s146]
                %216 = vst [vmem:[%s154 + $0xf0] sm:%s146] %v215
                %v217 = vld [vmem:[%s153 + $0xf8] sm:%s146]
                %218 = vst [vmem:[%s154 + $0xf8] sm:%s146] %v217
                %v219 = vld [vmem:[%s153 + $0x100] sm:%s146]
                %220 = vst [vmem:[%s154 + $0x100] sm:%s146] %v219
                %v221 = vld [vmem:[%s153 + $0x108] sm:%s146]
                %222 = vst [vmem:[%s154 + $0x108] sm:%s146] %v221
                %v223 = vld [vmem:[%s153 + $0x110] sm:%s146]
                %224 = vst [vmem:[%s154 + $0x110] sm:%s146] %v223
                %v225 = vld [vmem:[%s153 + $0x118] sm:%s146]
                %226 = vst [vmem:[%s154 + $0x118] sm:%s146] %v225
                %v227 = vld [vmem:[%s153 + $0x120] sm:%s146]
                %228 = vst [vmem:[%s154 + $0x120] sm:%s146] %v227
                %v229 = vld [vmem:[%s153 + $0x128] sm:%s146]
                %230 = vst [vmem:[%s154 + $0x128] sm:%s146] %v229
                %v231 = vld [vmem:[%s153 + $0x130] sm:%s146]
                %232 = vst [vmem:[%s154 + $0x130] sm:%s146] %v231
                %v233 = vld [vmem:[%s153 + $0x138] sm:%s146]
                %234 = vst [vmem:[%s154 + $0x138] sm:%s146] %v233
                %v235 = vld [vmem:[%s153 + $0x140] sm:%s146]
                %236 = vst [vmem:[%s154 + $0x140] sm:%s146] %v235
                %v237 = vld [vmem:[%s153 + $0x148] sm:%s146]
                %238 = vst [vmem:[%s154 + $0x148] sm:%s146] %v237
                %v239 = vld [vmem:[%s153 + $0x150] sm:%s146]
                %240 = vst [vmem:[%s154 + $0x150] sm:%s146] %v239
                %v241 = vld [vmem:[%s153 + $0x158] sm:%s146]
                %242 = vst [vmem:[%s154 + $0x158] sm:%s146] %v241
                %v243 = vld [vmem:[%s153 + $0x160] sm:%s146]
                %244 = vst [vmem:[%s154 + $0x160] sm:%s146] %v243
                %v245 = vld [vmem:[%s153 + $0x168] sm:%s146]
                %246 = vst [vmem:[%s154 + $0x168] sm:%s146] %v245
                %v247 = vld [vmem:[%s153 + $0x170] sm:%s146]
                %248 = vst [vmem:[%s154 + $0x170] sm:%s146] %v247
                %v249 = vld [vmem:[%s153 + $0x178] sm:%s146]
                %250 = vst [vmem:[%s154 + $0x178] sm:%s146] %v249
                %v251 = vld [vmem:[%s153 + $0x600] sm:%s146]
                %252 = vst [vmem:[%s154 + $0x180] sm:%s146] %v251
                %v253 = vld [vmem:[%s153 + $0x608] sm:%s146]
                %254 = vst [vmem:[%s154 + $0x188] sm:%s146] %v253
                %v255 = vld [vmem:[%s153 + $0x610] sm:%s146]
                %256 = vst [vmem:[%s154 + $0x190] sm:%s146] %v255
                %v257 = vld [vmem:[%s153 + $0x618] sm:%s146]
                %258 = vst [vmem:[%s154 + $0x198] sm:%s146] %v257
                %v259 = vld [vmem:[%s153 + $0x620] sm:%s146]
                %260 = vst [vmem:[%s154 + $0x1a0] sm:%s146] %v259
                %v261 = vld [vmem:[%s153 + $0x628] sm:%s146]
                %262 = vst [vmem:[%s154 + $0x1a8] sm:%s146] %v261
                %v263 = vld [vmem:[%s153 + $0x630] sm:%s146]
                %264 = vst [vmem:[%s154 + $0x1b0] sm:%s146] %v263
                %v265 = vld [vmem:[%s153 + $0x638] sm:%s146]
                %266 = vst [vmem:[%s154 + $0x1b8] sm:%s146] %v265
                %v267 = vld [vmem:[%s153 + $0x640] sm:%s146]
                %268 = vst [vmem:[%s154 + $0x1c0] sm:%s146] %v267
                %v269 = vld [vmem:[%s153 + $0x648] sm:%s146]
                %270 = vst [vmem:[%s154 + $0x1c8] sm:%s146] %v269
                %v271 = vld [vmem:[%s153 + $0x650] sm:%s146]
                %272 = vst [vmem:[%s154 + $0x1d0] sm:%s146] %v271
                %v273 = vld [vmem:[%s153 + $0x658] sm:%s146]
                %274 = vst [vmem:[%s154 + $0x1d8] sm:%s146] %v273
                %v275 = vld [vmem:[%s153 + $0x660] sm:%s146]
                %276 = vst [vmem:[%s154 + $0x1e0] sm:%s146] %v275
                %v277 = vld [vmem:[%s153 + $0x668] sm:%s146]
                %278 = vst [vmem:[%s154 + $0x1e8] sm:%s146] %v277
                %v279 = vld [vmem:[%s153 + $0x670] sm:%s146]
                %280 = vst [vmem:[%s154 + $0x1f0] sm:%s146] %v279
                %v281 = vld [vmem:[%s153 + $0x678] sm:%s146]
                %282 = vst [vmem:[%s154 + $0x1f8] sm:%s146] %v281
                %v283 = vld [vmem:[%s153 + $0x680] sm:%s146]
                %284 = vst [vmem:[%s154 + $0x200] sm:%s146] %v283
                %v285 = vld [vmem:[%s153 + $0x688] sm:%s146]
                %286 = vst [vmem:[%s154 + $0x208] sm:%s146] %v285
                %v287 = vld [vmem:[%s153 + $0x690] sm:%s146]
                %288 = vst [vmem:[%s154 + $0x210] sm:%s146] %v287
                %v289 = vld [vmem:[%s153 + $0x698] sm:%s146]
                %290 = vst [vmem:[%s154 + $0x218] sm:%s146] %v289
                %v291 = vld [vmem:[%s153 + $0x6a0] sm:%s146]
                %292 = vst [vmem:[%s154 + $0x220] sm:%s146] %v291
                %v293 = vld [vmem:[%s153 + $0x6a8] sm:%s146]
                %294 = vst [vmem:[%s154 + $0x228] sm:%s146] %v293
                %v295 = vld [vmem:[%s153 + $0x6b0] sm:%s146]
                %296 = vst [vmem:[%s154 + $0x230] sm:%s146] %v295
                %v297 = vld [vmem:[%s153 + $0x6b8] sm:%s146]
                %298 = vst [vmem:[%s154 + $0x238] sm:%s146] %v297
                %v299 = vld [vmem:[%s153 + $0x6c0] sm:%s146]
                %300 = vst [vmem:[%s154 + $0x240] sm:%s146] %v299
                %v301 = vld [vmem:[%s153 + $0x6c8] sm:%s146]
                %302 = vst [vmem:[%s154 + $0x248] sm:%s146] %v301
                %v303 = vld [vmem:[%s153 + $0x6d0] sm:%s146]
                %304 = vst [vmem:[%s154 + $0x250] sm:%s146] %v303
                %v305 = vld [vmem:[%s153 + $0x6d8] sm:%s146]
                %306 = vst [vmem:[%s154 + $0x258] sm:%s146] %v305
                %v307 = vld [vmem:[%s153 + $0x6e0] sm:%s146]
                %308 = vst [vmem:[%s154 + $0x260] sm:%s146] %v307
                %v309 = vld [vmem:[%s153 + $0x6e8] sm:%s146]
                %310 = vst [vmem:[%s154 + $0x268] sm:%s146] %v309
                %v311 = vld [vmem:[%s153 + $0x6f0] sm:%s146]
                %312 = vst [vmem:[%s154 + $0x270] sm:%s146] %v311
                %v313 = vld [vmem:[%s153 + $0x6f8] sm:%s146]
                %314 = vst [vmem:[%s154 + $0x278] sm:%s146] %v313
                %v315 = vld [vmem:[%s153 + $0x700] sm:%s146]
                %316 = vst [vmem:[%s154 + $0x280] sm:%s146] %v315
                %v317 = vld [vmem:[%s153 + $0x708] sm:%s146]
                %318 = vst [vmem:[%s154 + $0x288] sm:%s146] %v317
                %v319 = vld [vmem:[%s153 + $0x710] sm:%s146]
                %320 = vst [vmem:[%s154 + $0x290] sm:%s146] %v319
                %v321 = vld [vmem:[%s153 + $0x718] sm:%s146]
                %322 = vst [vmem:[%s154 + $0x298] sm:%s146] %v321
                %v323 = vld [vmem:[%s153 + $0x720] sm:%s146]
                %324 = vst [vmem:[%s154 + $0x2a0] sm:%s146] %v323
                %v325 = vld [vmem:[%s153 + $0x728] sm:%s146]
                %326 = vst [vmem:[%s154 + $0x2a8] sm:%s146] %v325
                %v327 = vld [vmem:[%s153 + $0x730] sm:%s146]
                %328 = vst [vmem:[%s154 + $0x2b0] sm:%s146] %v327
                %v329 = vld [vmem:[%s153 + $0x738] sm:%s146]
                %330 = vst [vmem:[%s154 + $0x2b8] sm:%s146] %v329
                %v331 = vld [vmem:[%s153 + $0x740] sm:%s146]
                %332 = vst [vmem:[%s154 + $0x2c0] sm:%s146] %v331
                %v333 = vld [vmem:[%s153 + $0x748] sm:%s146]
                %334 = vst [vmem:[%s154 + $0x2c8] sm:%s146] %v333
                %v335 = vld [vmem:[%s153 + $0x750] sm:%s146]
                %336 = vst [vmem:[%s154 + $0x2d0] sm:%s146] %v335
                %v337 = vld [vmem:[%s153 + $0x758] sm:%s146]
                %338 = vst [vmem:[%s154 + $0x2d8] sm:%s146] %v337
                %v339 = vld [vmem:[%s153 + $0x760] sm:%s146]
                %340 = vst [vmem:[%s154 + $0x2e0] sm:%s146] %v339
                %v341 = vld [vmem:[%s153 + $0x768] sm:%s146]
                %342 = vst [vmem:[%s154 + $0x2e8] sm:%s146] %v341
                %v343 = vld [vmem:[%s153 + $0x770] sm:%s146]
                %344 = vst [vmem:[%s154 + $0x2f0] sm:%s146] %v343
                %v345 = vld [vmem:[%s153 + $0x778] sm:%s146]
                %346 = vst [vmem:[%s154 + $0x2f8] sm:%s146] %v345
              $region41: #{net_forward.1} parent=35 // loop_footer
                %s152 = sadd.s32 1, %s148
              $region42: #{net_forward.1} parent=35 // loop_footer_branch
                %147 = sbr.rel target = $region38
              $region43: #{net_forward.1} parent=35 // loop_exit
                _
            $region36: #{net_forward.1} parent=27 // pred_fallthru
              _
          $region28: #{net_forward.1} parent=23 // pred_fallthru
            _
          %551 = vnop
        $region24: #{net_forward.1} parent=19 // pred_fallthru
          _
        // Predicated region
        $region59: #{net_forward.1} parent=19 // pred_check
          %p552 = pneg %p59
        $region60: #{net_forward.1} parent=19 // pred_check_branch
          %554 = sbr.rel (%p552) target = $region62
        $region61: #{net_forward.1} parent=19 // pred_region
          #allocation9 [shape = 'u32[6]{0}', space=smem, size = 0x18, scoped, tag = 'DMA stride descriptor']
          %s555 = sand.u32 %s49, 1
          %s556 = scalar_lea.sflag [#allocation5], %s555
          %s557 = sand.u32 %s49, 1
          %s558 = smul.addr %s557, 1920
          %s559 = scalar_lea.vmem [#allocation4], %s558
          %s560 = smul.u32 48, %s13
          %s562 = ssub.s32 30720, 30720
          %563 = vsyncadd %s556, %s562
          %s564 = smul.addr %s560, 64
          %s565 = scalar_lea.hbm %s1, %s564
          %s567 = sshll.u32 1, 14
          %s568 = sxor.u32 4294967295, %s567
          %s570 = sld [smem:[#allocation0]]
          %s571 = sadd.s32 2, %s570
          %s573 = sshll.u32 7, 26
          %s574 = sxor.u32 4294967295, %s573
          %s575 = sand.u32 0, %s574
          %s576 = sshll.u32 %s571, 26
          %s577 = sor.u32 %s575, %s576
          %s578 = sshll.u32 %s559, 4
          %s579 = int_to_ptr.vmem [resolvable:$true] %s578
          %585 = sst [smem:[#allocation9]] 12288
          %s586 = scalar_lea.smem [#allocation9], 1
          %587 = sst [smem:[%s586]] 3072
          %s588 = scalar_lea.smem [#allocation9], 2
          %589 = sst [smem:[%s588]] 48
          %s590 = scalar_lea.smem [#allocation9], 3
          %591 = sst [smem:[%s590]] 64
          %s592 = scalar_lea.smem [#allocation9], 4
          %593 = sst [smem:[%s592]] 64
          %s594 = scalar_lea.smem [#allocation9], 5
          %595 = sst [smem:[%s594]] 4
          %597 = dma.general %s565, 30720, %s579, %s556, 131072, [#allocation9], %s577, 0
        $region62: #{net_forward.1} parent=19 // pred_fallthru
          _
      $region20: #{net_forward.1} parent=5 // pred_fallthru
        _
      %p598 = scmp.le.s32.totalorder 1, %s13
      %p599 = scmp.lt.s32.totalorder %s13, 5
      %p600 = pnand %p598, %p599
      %p601 = pneg %p600
      // Predicated region
      $region63: #{net_forward.1} parent=5 // pred_check
        _
      $region64: #{net_forward.1} parent=5 // pred_check_branch
        %603 = sbr.rel (%p600) target = $region66
      $region65: #{net_forward.1} parent=5 // pred_region
        %s604 = ssub.s32 %s13, 1
        %s605 = sand.u32 %s26, 1
        %s606 = sand.u32 %s26, 1
        %s607 = smul.addr %s606, 768
        %s608 = scalar_lea.vmem [#allocation3], %s607
        // Predicated region
        $region67: #{net_forward.1} parent=65 // pred_check
          %p609 = pneg %p39
        $region68: #{net_forward.1} parent=65 // pred_check_branch
          %611 = sbr.rel (%p609) target = $region70
        $region69: #{net_forward.1} parent=65 // pred_region
          _
        $region70: #{net_forward.1} parent=65 // pred_fallthru
          _
        %s612 = sand.u32 %s52, 1
        %s613 = scalar_lea.sflag [#allocation5], %s612
        %s614 = sand.u32 %s52, 1
        %s615 = smul.addr %s614, 1920
        %s616 = scalar_lea.vmem [#allocation4], %s615
        // Predicated region
        $region71: #{net_forward.1} parent=65 // pred_check
          %p617 = pneg %p65
        $region72: #{net_forward.1} parent=65 // pred_check_branch
          %619 = sbr.rel (%p617) target = $region74
        $region73: #{net_forward.1} parent=65 // pred_region
          %620 = dma.done %s613, 30720
        $region74: #{net_forward.1} parent=65 // pred_fallthru
          _
        %s621 = sand.u32 %s26, 1
        %s622 = sand.u32 %s26, 1
        %s623 = smul.addr %s622, 768
        %s624 = scalar_lea.vmem [#allocation3], %s623
        %p625 = pneg %p39
        %p626 = pneg %p36
        %s627 = sand.u32 %s52, 1
        %s628 = scalar_lea.sflag [#allocation5], %s627
        %s629 = sand.u32 %s52, 1
        %s630 = smul.addr %s629, 1920
        %s631 = scalar_lea.vmem [#allocation4], %s630
        %p632 = pneg %p65
        %p633 = pneg %p62
        %p634 = pneg %p86
        %p635 = pneg %p83
        %p636 = pneg %p107
        %p637 = pneg %p104
        %s638 = smul.u32 48, %s18
        %s639 = smul.u32 48, %s18
        %p640 = scmp.eq.s32.totalorder %s18, 0
        // Predicated region
        $region75: #{net_forward.1} parent=65 // pred_check
          %p641 = pneg %p640
        $region76: #{net_forward.1} parent=65 // pred_check_branch
          %643 = sbr.rel (%p641) target = $region78
        $region77: #{net_forward.1} parent=65 // pred_region
          %644 = vst [vmem:[#allocation2] sm:$0xff] 0.0
          %645 = vst [vmem:[#allocation2 + $0x8] sm:$0x3] 0.0
          %646 = vst [vmem:[#allocation2 + $0x10] sm:$0xff] 0.0
          %647 = vst [vmem:[#allocation2 + $0x18] sm:$0x3] 0.0
        $region78: #{net_forward.1} parent=65 // pred_fallthru
          _
        %v648 = vld [vmem:[%s608] sm:$0xff]
        %v649 = vld [vmem:[%s608 + $0x8] sm:$0xff]
        %v650 = vld [vmem:[%s608 + $0x10] sm:$0xff]
        %v651 = vld [vmem:[%s608 + $0x18] sm:$0xff]
        %v652 = vld [vmem:[%s608 + $0x20] sm:$0xff]
        %v653 = vld [vmem:[%s608 + $0x28] sm:$0xff]
        %v654 = vld [vmem:[%s608 + $0x30] sm:$0xff]
        %v655 = vld [vmem:[%s608 + $0x38] sm:$0xff]
        %v656 = vld [vmem:[%s608 + $0x40] sm:$0xff]
        %v657 = vld [vmem:[%s608 + $0x48] sm:$0xff]
        %v658 = vld [vmem:[%s608 + $0x50] sm:$0xff]
        %v659 = vld [vmem:[%s608 + $0x58] sm:$0xff]
        %v660 = vld [vmem:[%s608 + $0x60] sm:$0xff]
        %v661 = vld [vmem:[%s608 + $0x68] sm:$0xff]
        %v662 = vld [vmem:[%s608 + $0x70] sm:$0xff]
        %v663 = vld [vmem:[%s608 + $0x78] sm:$0xff]
        %v664 = vld [vmem:[%s608 + $0x80] sm:$0xff]
        %v665 = vld [vmem:[%s608 + $0x88] sm:$0xff]
        %v666 = vld [vmem:[%s608 + $0x90] sm:$0xff]
        %v667 = vld [vmem:[%s608 + $0x98] sm:$0xff]
        %v668 = vld [vmem:[%s608 + $0xa0] sm:$0xff]
        %v669 = vld [vmem:[%s608 + $0xa8] sm:$0xff]
        %v670 = vld [vmem:[%s608 + $0xb0] sm:$0xff]
        %v671 = vld [vmem:[%s608 + $0xb8] sm:$0xff]
        %v672 = vld [vmem:[%s608 + $0xc0] sm:$0xff]
        %v673 = vld [vmem:[%s608 + $0xc8] sm:$0xff]
        %v674 = vld [vmem:[%s608 + $0xd0] sm:$0xff]
        %v675 = vld [vmem:[%s608 + $0xd8] sm:$0xff]
        %v676 = vld [vmem:[%s608 + $0xe0] sm:$0xff]
        %v677 = vld [vmem:[%s608 + $0xe8] sm:$0xff]
        %v678 = vld [vmem:[%s608 + $0xf0] sm:$0xff]
        %v679 = vld [vmem:[%s608 + $0xf8] sm:$0xff]
        %v680 = vld [vmem:[%s608 + $0x100] sm:$0xff]
        %v681 = vld [vmem:[%s608 + $0x108] sm:$0xff]
        %v682 = vld [vmem:[%s608 + $0x110] sm:$0xff]
        %v683 = vld [vmem:[%s608 + $0x118] sm:$0xff]
        %v684 = vld [vmem:[%s608 + $0x120] sm:$0xff]
        %v685 = vld [vmem:[%s608 + $0x128] sm:$0xff]
        %v686 = vld [vmem:[%s608 + $0x130] sm:$0xff]
        %v687 = vld [vmem:[%s608 + $0x138] sm:$0xff]
        %v688 = vld [vmem:[%s608 + $0x140] sm:$0xff]
        %v689 = vld [vmem:[%s608 + $0x148] sm:$0xff]
        %v690 = vld [vmem:[%s608 + $0x150] sm:$0xff]
        %v691 = vld [vmem:[%s608 + $0x158] sm:$0xff]
        %v692 = vld [vmem:[%s608 + $0x160] sm:$0xff]
        %v693 = vld [vmem:[%s608 + $0x168] sm:$0xff]
        %v694 = vld [vmem:[%s608 + $0x170] sm:$0xff]
        %v695 = vld [vmem:[%s608 + $0x178] sm:$0xff]
        %v696 = vld [vmem:[%s608 + $0x180] sm:$0xff]
        %v697 = vld [vmem:[%s608 + $0x188] sm:$0xff]
        %v698 = vld [vmem:[%s608 + $0x190] sm:$0xff]
        %v699 = vld [vmem:[%s608 + $0x198] sm:$0xff]
        %v700 = vld [vmem:[%s608 + $0x1a0] sm:$0xff]
        %v701 = vld [vmem:[%s608 + $0x1a8] sm:$0xff]
        %v702 = vld [vmem:[%s608 + $0x1b0] sm:$0xff]
        %v703 = vld [vmem:[%s608 + $0x1b8] sm:$0xff]
        %v704 = vld [vmem:[%s608 + $0x1c0] sm:$0xff]
        %v705 = vld [vmem:[%s608 + $0x1c8] sm:$0xff]
        %v706 = vld [vmem:[%s608 + $0x1d0] sm:$0xff]
        %v707 = vld [vmem:[%s608 + $0x1d8] sm:$0xff]
        %v708 = vld [vmem:[%s608 + $0x1e0] sm:$0xff]
        %v709 = vld [vmem:[%s608 + $0x1e8] sm:$0xff]
        %v710 = vld [vmem:[%s608 + $0x1f0] sm:$0xff]
        %v711 = vld [vmem:[%s608 + $0x1f8] sm:$0xff]
        %v712 = vld [vmem:[%s608 + $0x200] sm:$0xff]
        %v713 = vld [vmem:[%s608 + $0x208] sm:$0xff]
        %v714 = vld [vmem:[%s608 + $0x210] sm:$0xff]
        %v715 = vld [vmem:[%s608 + $0x218] sm:$0xff]
        %v716 = vld [vmem:[%s608 + $0x220] sm:$0xff]
        %v717 = vld [vmem:[%s608 + $0x228] sm:$0xff]
        %v718 = vld [vmem:[%s608 + $0x230] sm:$0xff]
        %v719 = vld [vmem:[%s608 + $0x238] sm:$0xff]
        %v720 = vld [vmem:[%s608 + $0x240] sm:$0xff]
        %v721 = vld [vmem:[%s608 + $0x248] sm:$0xff]
        %v722 = vld [vmem:[%s608 + $0x250] sm:$0xff]
        %v723 = vld [vmem:[%s608 + $0x258] sm:$0xff]
        %v724 = vld [vmem:[%s608 + $0x260] sm:$0xff]
        %v725 = vld [vmem:[%s608 + $0x268] sm:$0xff]
        %v726 = vld [vmem:[%s608 + $0x270] sm:$0xff]
        %v727 = vld [vmem:[%s608 + $0x278] sm:$0xff]
        %v728 = vld [vmem:[%s608 + $0x280] sm:$0xff]
        %v729 = vld [vmem:[%s608 + $0x288] sm:$0xff]
        %v730 = vld [vmem:[%s608 + $0x290] sm:$0xff]
        %v731 = vld [vmem:[%s608 + $0x298] sm:$0xff]
        %v732 = vld [vmem:[%s608 + $0x2a0] sm:$0xff]
        %v733 = vld [vmem:[%s608 + $0x2a8] sm:$0xff]
        %v734 = vld [vmem:[%s608 + $0x2b0] sm:$0xff]
        %v735 = vld [vmem:[%s608 + $0x2b8] sm:$0xff]
        %v736 = vld [vmem:[%s608 + $0x2c0] sm:$0xff]
        %v737 = vld [vmem:[%s608 + $0x2c8] sm:$0xff]
        %v738 = vld [vmem:[%s608 + $0x2d0] sm:$0xff]
        %v739 = vld [vmem:[%s608 + $0x2d8] sm:$0xff]
        %v740 = vld [vmem:[%s608 + $0x2e0] sm:$0xff]
        %v741 = vld [vmem:[%s608 + $0x2e8] sm:$0xff]
        %v742 = vld [vmem:[%s608 + $0x2f0] sm:$0xff]
        %v743 = vld [vmem:[%s608 + $0x2f8] sm:$0xff]
        %v744 = vld [vmem:[%s616] sm:$0xf]
        %v745 = vld [vmem:[%s616 + $0x4] sm:$0xf]
        %v746 = vld [vmem:[%s616 + $0x8] sm:$0xf]
        %v747 = vld [vmem:[%s616 + $0xc] sm:$0xf]
        %v748 = vld [vmem:[%s616 + $0x10] sm:$0xf]
        %v749 = vld [vmem:[%s616 + $0x14] sm:$0xf]
        %v750 = vld [vmem:[%s616 + $0x18] sm:$0xf]
        %v751 = vld [vmem:[%s616 + $0x1c] sm:$0xf]
        %v752 = vld [vmem:[%s616 + $0x20] sm:$0xf]
        %v753 = vld [vmem:[%s616 + $0x24] sm:$0xf]
        %v754 = vld [vmem:[%s616 + $0x28] sm:$0xf]
        %v755 = vld [vmem:[%s616 + $0x2c] sm:$0xf]
        %v756 = vld [vmem:[%s616 + $0x30] sm:$0xf]
        %v757 = vld [vmem:[%s616 + $0x34] sm:$0xf]
        %v758 = vld [vmem:[%s616 + $0x38] sm:$0xf]
        %v759 = vld [vmem:[%s616 + $0x3c] sm:$0xf]
        %v760 = vld [vmem:[%s616 + $0x40] sm:$0xf]
        %v761 = vld [vmem:[%s616 + $0x44] sm:$0xf]
        %v762 = vld [vmem:[%s616 + $0x48] sm:$0xf]
        %v763 = vld [vmem:[%s616 + $0x4c] sm:$0xf]
        %v764 = vld [vmem:[%s616 + $0x50] sm:$0xf]
        %v765 = vld [vmem:[%s616 + $0x54] sm:$0xf]
        %v766 = vld [vmem:[%s616 + $0x58] sm:$0xf]
        %v767 = vld [vmem:[%s616 + $0x5c] sm:$0xf]
        %v768 = vld [vmem:[%s616 + $0x60] sm:$0xf]
        %v769 = vld [vmem:[%s616 + $0x64] sm:$0xf]
        %v770 = vld [vmem:[%s616 + $0x68] sm:$0xf]
        %v771 = vld [vmem:[%s616 + $0x6c] sm:$0xf]
        %v772 = vld [vmem:[%s616 + $0x70] sm:$0xf]
        %v773 = vld [vmem:[%s616 + $0x74] sm:$0xf]
        %v774 = vld [vmem:[%s616 + $0x78] sm:$0xf]
        %v775 = vld [vmem:[%s616 + $0x7c] sm:$0xf]
        %v776 = vld [vmem:[%s616 + $0x80] sm:$0xf]
        %v777 = vld [vmem:[%s616 + $0x84] sm:$0xf]
        %v778 = vld [vmem:[%s616 + $0x88] sm:$0xf]
        %v779 = vld [vmem:[%s616 + $0x8c] sm:$0xf]
        %v780 = vld [vmem:[%s616 + $0x90] sm:$0xf]
        %v781 = vld [vmem:[%s616 + $0x94] sm:$0xf]
        %v782 = vld [vmem:[%s616 + $0x98] sm:$0xf]
        %v783 = vld [vmem:[%s616 + $0x9c] sm:$0xf]
        %v784 = vld [vmem:[%s616 + $0xa0] sm:$0xf]
        %v785 = vld [vmem:[%s616 + $0xa4] sm:$0xf]
        %v786 = vld [vmem:[%s616 + $0xa8] sm:$0xf]
        %v787 = vld [vmem:[%s616 + $0xac] sm:$0xf]
        %v788 = vld [vmem:[%s616 + $0xb0] sm:$0xf]
        %v789 = vld [vmem:[%s616 + $0xb4] sm:$0xf]
        %v790 = vld [vmem:[%s616 + $0xb8] sm:$0xf]
        %v791 = vld [vmem:[%s616 + $0xbc] sm:$0xf]
        %v792 = vunpack.c.l.bf16 %v744
        %v793 = vunpack.c.l.bf16 %v745
        %v794 = vunpack.c.l.bf16 %v746
        %v795 = vunpack.c.l.bf16 %v747
        %v796 = vunpack.c.l.bf16 %v748
        %v797 = vunpack.c.l.bf16 %v749
        %v798 = vunpack.c.l.bf16 %v750
        %v799 = vunpack.c.l.bf16 %v751
        %v800 = vunpack.c.l.bf16 %v752
        %v801 = vunpack.c.l.bf16 %v753
        %v802 = vunpack.c.l.bf16 %v754
        %v803 = vunpack.c.l.bf16 %v755
        %v804 = vunpack.c.l.bf16 %v756
        %v805 = vunpack.c.l.bf16 %v757
        %v806 = vunpack.c.l.bf16 %v758
        %v807 = vunpack.c.l.bf16 %v759
        %v808 = vunpack.c.l.bf16 %v760
        %v809 = vunpack.c.l.bf16 %v761
        %v810 = vunpack.c.l.bf16 %v762
        %v811 = vunpack.c.l.bf16 %v763
        %v812 = vunpack.c.l.bf16 %v764
        %v813 = vunpack.c.l.bf16 %v765
        %v814 = vunpack.c.l.bf16 %v766
        %v815 = vunpack.c.l.bf16 %v767
        %v816 = vunpack.c.l.bf16 %v768
        %v817 = vunpack.c.l.bf16 %v769
        %v818 = vunpack.c.l.bf16 %v770
        %v819 = vunpack.c.l.bf16 %v771
        %v820 = vunpack.c.l.bf16 %v772
        %v821 = vunpack.c.l.bf16 %v773
        %v822 = vunpack.c.l.bf16 %v774
        %v823 = vunpack.c.l.bf16 %v775
        %v824 = vunpack.c.l.bf16 %v776
        %v825 = vunpack.c.l.bf16 %v777
        %v826 = vunpack.c.l.bf16 %v778
        %v827 = vunpack.c.l.bf16 %v779
        %v828 = vunpack.c.l.bf16 %v780
        %v829 = vunpack.c.l.bf16 %v781
        %v830 = vunpack.c.l.bf16 %v782
        %v831 = vunpack.c.l.bf16 %v783
        %v832 = vunpack.c.l.bf16 %v784
        %v833 = vunpack.c.l.bf16 %v785
        %v834 = vunpack.c.l.bf16 %v786
        %v835 = vunpack.c.l.bf16 %v787
        %v836 = vunpack.c.l.bf16 %v788
        %v837 = vunpack.c.l.bf16 %v789
        %v838 = vunpack.c.l.bf16 %v790
        %v839 = vunpack.c.l.bf16 %v791
        %v840 = vld [vmem:[#allocation2] sm:$0x1]
        %v841 = vld [vmem:[#allocation2 + $0x10] sm:$0x1]
        %v842 = vmul.f32 %v648, %v792
        %v843 = vmul.f32 %v649, %v793
        %v844 = vmul.f32 %v650, %v794
        %v845 = vmul.f32 %v651, %v795
        %v846 = vmul.f32 %v652, %v796
        %v847 = vmul.f32 %v653, %v797
        %v848 = vmul.f32 %v654, %v798
        %v849 = vmul.f32 %v655, %v799
        %v850 = vmul.f32 %v656, %v800
        %v851 = vmul.f32 %v657, %v801
        %v852 = vmul.f32 %v658, %v802
        %v853 = vmul.f32 %v659, %v803
        %v854 = vmul.f32 %v660, %v804
        %v855 = vmul.f32 %v661, %v805
        %v856 = vmul.f32 %v662, %v806
        %v857 = vmul.f32 %v663, %v807
        %v858 = vmul.f32 %v664, %v808
        %v859 = vmul.f32 %v665, %v809
        %v860 = vmul.f32 %v666, %v810
        %v861 = vmul.f32 %v667, %v811
        %v862 = vmul.f32 %v668, %v812
        %v863 = vmul.f32 %v669, %v813
        %v864 = vmul.f32 %v670, %v814
        %v865 = vmul.f32 %v671, %v815
        %v866 = vmul.f32 %v672, %v816
        %v867 = vmul.f32 %v673, %v817
        %v868 = vmul.f32 %v674, %v818
        %v869 = vmul.f32 %v675, %v819
        %v870 = vmul.f32 %v676, %v820
        %v871 = vmul.f32 %v677, %v821
        %v872 = vmul.f32 %v678, %v822
        %v873 = vmul.f32 %v679, %v823
        %v874 = vmul.f32 %v680, %v824
        %v875 = vmul.f32 %v681, %v825
        %v876 = vmul.f32 %v682, %v826
        %v877 = vmul.f32 %v683, %v827
        %v878 = vmul.f32 %v684, %v828
        %v879 = vmul.f32 %v685, %v829
        %v880 = vmul.f32 %v686, %v830
        %v881 = vmul.f32 %v687, %v831
        %v882 = vmul.f32 %v688, %v832
        %v883 = vmul.f32 %v689, %v833
        %v884 = vmul.f32 %v690, %v834
        %v885 = vmul.f32 %v691, %v835
        %v886 = vmul.f32 %v692, %v836
        %v887 = vmul.f32 %v693, %v837
        %v888 = vmul.f32 %v694, %v838
        %v889 = vmul.f32 %v695, %v839
        %v890 = vmul.f32 %v696, %v792
        %v891 = vmul.f32 %v697, %v793
        %v892 = vmul.f32 %v698, %v794
        %v893 = vmul.f32 %v699, %v795
        %v894 = vmul.f32 %v700, %v796
        %v895 = vmul.f32 %v701, %v797
        %v896 = vmul.f32 %v702, %v798
        %v897 = vmul.f32 %v703, %v799
        %v898 = vmul.f32 %v704, %v800
        %v899 = vmul.f32 %v705, %v801
        %v900 = vmul.f32 %v706, %v802
        %v901 = vmul.f32 %v707, %v803
        %v902 = vmul.f32 %v708, %v804
        %v903 = vmul.f32 %v709, %v805
        %v904 = vmul.f32 %v710, %v806
        %v905 = vmul.f32 %v711, %v807
        %v906 = vmul.f32 %v712, %v808
        %v907 = vmul.f32 %v713, %v809
        %v908 = vmul.f32 %v714, %v810
        %v909 = vmul.f32 %v715, %v811
        %v910 = vmul.f32 %v716, %v812
        %v911 = vmul.f32 %v717, %v813
        %v912 = vmul.f32 %v718, %v814
        %v913 = vmul.f32 %v719, %v815
        %v914 = vmul.f32 %v720, %v816
        %v915 = vmul.f32 %v721, %v817
        %v916 = vmul.f32 %v722, %v818
        %v917 = vmul.f32 %v723, %v819
        %v918 = vmul.f32 %v724, %v820
        %v919 = vmul.f32 %v725, %v821
        %v920 = vmul.f32 %v726, %v822
        %v921 = vmul.f32 %v727, %v823
        %v922 = vmul.f32 %v728, %v824
        %v923 = vmul.f32 %v729, %v825
        %v924 = vmul.f32 %v730, %v826
        %v925 = vmul.f32 %v731, %v827
        %v926 = vmul.f32 %v732, %v828
        %v927 = vmul.f32 %v733, %v829
        %v928 = vmul.f32 %v734, %v830
        %v929 = vmul.f32 %v735, %v831
        %v930 = vmul.f32 %v736, %v832
        %v931 = vmul.f32 %v737, %v833
        %v932 = vmul.f32 %v738, %v834
        %v933 = vmul.f32 %v739, %v835
        %v934 = vmul.f32 %v740, %v836
        %v935 = vmul.f32 %v741, %v837
        %v936 = vmul.f32 %v742, %v838
        %v937 = vmul.f32 %v743, %v839
        %v938 = vadd.f32 %v842, %v843
        %v939 = vadd.f32 %v938, %v844
        %v940 = vadd.f32 %v939, %v845
        %v941 = vadd.f32 %v940, %v846
        %v942 = vadd.f32 %v941, %v847
        %v943 = vadd.f32 %v942, %v848
        %v944 = vadd.f32 %v943, %v849
        %v945 = vadd.f32 %v944, %v850
        %v946 = vadd.f32 %v945, %v851
        %v947 = vadd.f32 %v946, %v852
        %v948 = vadd.f32 %v947, %v853
        %v949 = vadd.f32 %v948, %v854
        %v950 = vadd.f32 %v949, %v855
        %v951 = vadd.f32 %v950, %v856
        %v952 = vadd.f32 %v951, %v857
        %v953 = vadd.f32 %v952, %v858
        %v954 = vadd.f32 %v953, %v859
        %v955 = vadd.f32 %v954, %v860
        %v956 = vadd.f32 %v955, %v861
        %v957 = vadd.f32 %v956, %v862
        %v958 = vadd.f32 %v957, %v863
        %v959 = vadd.f32 %v958, %v864
        %v960 = vadd.f32 %v959, %v865
        %v961 = vadd.f32 %v960, %v866
        %v962 = vadd.f32 %v961, %v867
        %v963 = vadd.f32 %v962, %v868
        %v964 = vadd.f32 %v963, %v869
        %v965 = vadd.f32 %v964, %v870
        %v966 = vadd.f32 %v965, %v871
        %v967 = vadd.f32 %v966, %v872
        %v968 = vadd.f32 %v967, %v873
        %v969 = vadd.f32 %v968, %v874
        %v970 = vadd.f32 %v969, %v875
        %v971 = vadd.f32 %v970, %v876
        %v972 = vadd.f32 %v971, %v877
        %v973 = vadd.f32 %v972, %v878
        %v974 = vadd.f32 %v973, %v879
        %v975 = vadd.f32 %v974, %v880
        %v976 = vadd.f32 %v975, %v881
        %v977 = vadd.f32 %v976, %v882
        %v978 = vadd.f32 %v977, %v883
        %v979 = vadd.f32 %v978, %v884
        %v980 = vadd.f32 %v979, %v885
        %v981 = vadd.f32 %v980, %v886
        %v982 = vadd.f32 %v981, %v887
        %v983 = vadd.f32 %v982, %v888
        %v984 = vadd.f32 %v983, %v889
        %v985 = vrot.slane %v984, 4
        %v986 = vadd.f32 %v984, %v985
        %v987 = vrot.slane %v986, 2
        %v988 = vadd.f32 %v986, %v987
        %v989 = vrot.slane %v988, 1
        %v990 = vadd.f32 %v988, %v989
        %v991 = vadd.f32 %v890, %v891
        %v992 = vadd.f32 %v991, %v892
        %v993 = vadd.f32 %v992, %v893
        %v994 = vadd.f32 %v993, %v894
        %v995 = vadd.f32 %v994, %v895
        %v996 = vadd.f32 %v995, %v896
        %v997 = vadd.f32 %v996, %v897
        %v998 = vadd.f32 %v997, %v898
        %v999 = vadd.f32 %v998, %v899
        %v1000 = vadd.f32 %v999, %v900
        %v1001 = vadd.f32 %v1000, %v901
        %v1002 = vadd.f32 %v1001, %v902
        %v1003 = vadd.f32 %v1002, %v903
        %v1004 = vadd.f32 %v1003, %v904
        %v1005 = vadd.f32 %v1004, %v905
        %v1006 = vadd.f32 %v1005, %v906
        %v1007 = vadd.f32 %v1006, %v907
        %v1008 = vadd.f32 %v1007, %v908
        %v1009 = vadd.f32 %v1008, %v909
        %v1010 = vadd.f32 %v1009, %v910
        %v1011 = vadd.f32 %v1010, %v911
        %v1012 = vadd.f32 %v1011, %v912
        %v1013 = vadd.f32 %v1012, %v913
        %v1014 = vadd.f32 %v1013, %v914
        %v1015 = vadd.f32 %v1014, %v915
        %v1016 = vadd.f32 %v1015, %v916
        %v1017 = vadd.f32 %v1016, %v917
        %v1018 = vadd.f32 %v1017, %v918
        %v1019 = vadd.f32 %v1018, %v919
        %v1020 = vadd.f32 %v1019, %v920
        %v1021 = vadd.f32 %v1020, %v921
        %v1022 = vadd.f32 %v1021, %v922
        %v1023 = vadd.f32 %v1022, %v923
        %v1024 = vadd.f32 %v1023, %v924
        %v1025 = vadd.f32 %v1024, %v925
        %v1026 = vadd.f32 %v1025, %v926
        %v1027 = vadd.f32 %v1026, %v927
        %v1028 = vadd.f32 %v1027, %v928
        %v1029 = vadd.f32 %v1028, %v929
        %v1030 = vadd.f32 %v1029, %v930
        %v1031 = vadd.f32 %v1030, %v931
        %v1032 = vadd.f32 %v1031, %v932
        %v1033 = vadd.f32 %v1032, %v933
        %v1034 = vadd.f32 %v1033, %v934
        %v1035 = vadd.f32 %v1034, %v935
        %v1036 = vadd.f32 %v1035, %v936
        %v1037 = vadd.f32 %v1036, %v937
        %v1038 = vrot.slane %v1037, 4
        %v1039 = vadd.f32 %v1037, %v1038
        %v1040 = vrot.slane %v1039, 2
        %v1041 = vadd.f32 %v1039, %v1040
        %v1042 = vrot.slane %v1041, 1
        %v1043 = vadd.f32 %v1041, %v1042
        %v1044 = vadd.f32 %v840, %v990
        %v1045 = vadd.f32 %v841, %v1043
        %1046 = vst [vmem:[#allocation2] sm:$0x1] %v1044
        %1047 = vst [vmem:[#allocation2 + $0x10] sm:$0x1] %v1045
        %s1048 = scalar_lea.vmem %s616, 192 [#allocation4]
        %v1049 = vld [vmem:[%s1048] sm:$0xf]
        %v1050 = vld [vmem:[%s1048 + $0x4] sm:$0xf]
        %v1051 = vld [vmem:[%s1048 + $0x8] sm:$0xf]
        %v1052 = vld [vmem:[%s1048 + $0xc] sm:$0xf]
        %v1053 = vld [vmem:[%s1048 + $0x10] sm:$0xf]
        %v1054 = vld [vmem:[%s1048 + $0x14] sm:$0xf]
        %v1055 = vld [vmem:[%s1048 + $0x18] sm:$0xf]
        %v1056 = vld [vmem:[%s1048 + $0x1c] sm:$0xf]
        %v1057 = vld [vmem:[%s1048 + $0x20] sm:$0xf]
        %v1058 = vld [vmem:[%s1048 + $0x24] sm:$0xf]
        %v1059 = vld [vmem:[%s1048 + $0x28] sm:$0xf]
        %v1060 = vld [vmem:[%s1048 + $0x2c] sm:$0xf]
        %v1061 = vld [vmem:[%s1048 + $0x30] sm:$0xf]
        %v1062 = vld [vmem:[%s1048 + $0x34] sm:$0xf]
        %v1063 = vld [vmem:[%s1048 + $0x38] sm:$0xf]
        %v1064 = vld [vmem:[%s1048 + $0x3c] sm:$0xf]
        %v1065 = vld [vmem:[%s1048 + $0x40] sm:$0xf]
        %v1066 = vld [vmem:[%s1048 + $0x44] sm:$0xf]
        %v1067 = vld [vmem:[%s1048 + $0x48] sm:$0xf]
        %v1068 = vld [vmem:[%s1048 + $0x4c] sm:$0xf]
        %v1069 = vld [vmem:[%s1048 + $0x50] sm:$0xf]
        %v1070 = vld [vmem:[%s1048 + $0x54] sm:$0xf]
        %v1071 = vld [vmem:[%s1048 + $0x58] sm:$0xf]
        %v1072 = vld [vmem:[%s1048 + $0x5c] sm:$0xf]
        %v1073 = vld [vmem:[%s1048 + $0x60] sm:$0xf]
        %v1074 = vld [vmem:[%s1048 + $0x64] sm:$0xf]
        %v1075 = vld [vmem:[%s1048 + $0x68] sm:$0xf]
        %v1076 = vld [vmem:[%s1048 + $0x6c] sm:$0xf]
        %v1077 = vld [vmem:[%s1048 + $0x70] sm:$0xf]
        %v1078 = vld [vmem:[%s1048 + $0x74] sm:$0xf]
        %v1079 = vld [vmem:[%s1048 + $0x78] sm:$0xf]
        %v1080 = vld [vmem:[%s1048 + $0x7c] sm:$0xf]
        %v1081 = vld [vmem:[%s1048 + $0x80] sm:$0xf]
        %v1082 = vld [vmem:[%s1048 + $0x84] sm:$0xf]
        %v1083 = vld [vmem:[%s1048 + $0x88] sm:$0xf]
        %v1084 = vld [vmem:[%s1048 + $0x8c] sm:$0xf]
        %v1085 = vld [vmem:[%s1048 + $0x90] sm:$0xf]
        %v1086 = vld [vmem:[%s1048 + $0x94] sm:$0xf]
        %v1087 = vld [vmem:[%s1048 + $0x98] sm:$0xf]
        %v1088 = vld [vmem:[%s1048 + $0x9c] sm:$0xf]
        %v1089 = vld [vmem:[%s1048 + $0xa0] sm:$0xf]
        %v1090 = vld [vmem:[%s1048 + $0xa4] sm:$0xf]
        %v1091 = vld [vmem:[%s1048 + $0xa8] sm:$0xf]
        %v1092 = vld [vmem:[%s1048 + $0xac] sm:$0xf]
        %v1093 = vld [vmem:[%s1048 + $0xb0] sm:$0xf]
        %v1094 = vld [vmem:[%s1048 + $0xb4] sm:$0xf]
        %v1095 = vld [vmem:[%s1048 + $0xb8] sm:$0xf]
        %v1096 = vld [vmem:[%s1048 + $0xbc] sm:$0xf]
        %v1097 = vunpack.c.l.bf16 %v1049
        %v1098 = vunpack.c.l.bf16 %v1050
        %v1099 = vunpack.c.l.bf16 %v1051
        %v1100 = vunpack.c.l.bf16 %v1052
        %v1101 = vunpack.c.l.bf16 %v1053
        %v1102 = vunpack.c.l.bf16 %v1054
        %v1103 = vunpack.c.l.bf16 %v1055
        %v1104 = vunpack.c.l.bf16 %v1056
        %v1105 = vunpack.c.l.bf16 %v1057
        %v1106 = vunpack.c.l.bf16 %v1058
        %v1107 = vunpack.c.l.bf16 %v1059
        %v1108 = vunpack.c.l.bf16 %v1060
        %v1109 = vunpack.c.l.bf16 %v1061
        %v1110 = vunpack.c.l.bf16 %v1062
        %v1111 = vunpack.c.l.bf16 %v1063
        %v1112 = vunpack.c.l.bf16 %v1064
        %v1113 = vunpack.c.l.bf16 %v1065
        %v1114 = vunpack.c.l.bf16 %v1066
        %v1115 = vunpack.c.l.bf16 %v1067
        %v1116 = vunpack.c.l.bf16 %v1068
        %v1117 = vunpack.c.l.bf16 %v1069
        %v1118 = vunpack.c.l.bf16 %v1070
        %v1119 = vunpack.c.l.bf16 %v1071
        %v1120 = vunpack.c.l.bf16 %v1072
        %v1121 = vunpack.c.l.bf16 %v1073
        %v1122 = vunpack.c.l.bf16 %v1074
        %v1123 = vunpack.c.l.bf16 %v1075
        %v1124 = vunpack.c.l.bf16 %v1076
        %v1125 = vunpack.c.l.bf16 %v1077
        %v1126 = vunpack.c.l.bf16 %v1078
        %v1127 = vunpack.c.l.bf16 %v1079
        %v1128 = vunpack.c.l.bf16 %v1080
        %v1129 = vunpack.c.l.bf16 %v1081
        %v1130 = vunpack.c.l.bf16 %v1082
        %v1131 = vunpack.c.l.bf16 %v1083
        %v1132 = vunpack.c.l.bf16 %v1084
        %v1133 = vunpack.c.l.bf16 %v1085
        %v1134 = vunpack.c.l.bf16 %v1086
        %v1135 = vunpack.c.l.bf16 %v1087
        %v1136 = vunpack.c.l.bf16 %v1088
        %v1137 = vunpack.c.l.bf16 %v1089
        %v1138 = vunpack.c.l.bf16 %v1090
        %v1139 = vunpack.c.l.bf16 %v1091
        %v1140 = vunpack.c.l.bf16 %v1092
        %v1141 = vunpack.c.l.bf16 %v1093
        %v1142 = vunpack.c.l.bf16 %v1094
        %v1143 = vunpack.c.l.bf16 %v1095
        %v1144 = vunpack.c.l.bf16 %v1096
        %v1145 = vld [vmem:[#allocation2 + $0x1] sm:$0x1]
        %v1146 = vld [vmem:[#allocation2 + $0x11] sm:$0x1]
        %v1147 = vmul.f32 %v648, %v1097
        %v1148 = vmul.f32 %v649, %v1098
        %v1149 = vmul.f32 %v650, %v1099
        %v1150 = vmul.f32 %v651, %v1100
        %v1151 = vmul.f32 %v652, %v1101
        %v1152 = vmul.f32 %v653, %v1102
        %v1153 = vmul.f32 %v654, %v1103
        %v1154 = vmul.f32 %v655, %v1104
        %v1155 = vmul.f32 %v656, %v1105
        %v1156 = vmul.f32 %v657, %v1106
        %v1157 = vmul.f32 %v658, %v1107
        %v1158 = vmul.f32 %v659, %v1108
        %v1159 = vmul.f32 %v660, %v1109
        %v1160 = vmul.f32 %v661, %v1110
        %v1161 = vmul.f32 %v662, %v1111
        %v1162 = vmul.f32 %v663, %v1112
        %v1163 = vmul.f32 %v664, %v1113
        %v1164 = vmul.f32 %v665, %v1114
        %v1165 = vmul.f32 %v666, %v1115
        %v1166 = vmul.f32 %v667, %v1116
        %v1167 = vmul.f32 %v668, %v1117
        %v1168 = vmul.f32 %v669, %v1118
        %v1169 = vmul.f32 %v670, %v1119
        %v1170 = vmul.f32 %v671, %v1120
        %v1171 = vmul.f32 %v672, %v1121
        %v1172 = vmul.f32 %v673, %v1122
        %v1173 = vmul.f32 %v674, %v1123
        %v1174 = vmul.f32 %v675, %v1124
        %v1175 = vmul.f32 %v676, %v1125
        %v1176 = vmul.f32 %v677, %v1126
        %v1177 = vmul.f32 %v678, %v1127
        %v1178 = vmul.f32 %v679, %v1128
        %v1179 = vmul.f32 %v680, %v1129
        %v1180 = vmul.f32 %v681, %v1130
        %v1181 = vmul.f32 %v682, %v1131
        %v1182 = vmul.f32 %v683, %v1132
        %v1183 = vmul.f32 %v684, %v1133
        %v1184 = vmul.f32 %v685, %v1134
        %v1185 = vmul.f32 %v686, %v1135
        %v1186 = vmul.f32 %v687, %v1136
        %v1187 = vmul.f32 %v688, %v1137
        %v1188 = vmul.f32 %v689, %v1138
        %v1189 = vmul.f32 %v690, %v1139
        %v1190 = vmul.f32 %v691, %v1140
        %v1191 = vmul.f32 %v692, %v1141
        %v1192 = vmul.f32 %v693, %v1142
        %v1193 = vmul.f32 %v694, %v1143
        %v1194 = vmul.f32 %v695, %v1144
        %v1195 = vmul.f32 %v696, %v1097
        %v1196 = vmul.f32 %v697, %v1098
        %v1197 = vmul.f32 %v698, %v1099
        %v1198 = vmul.f32 %v699, %v1100
        %v1199 = vmul.f32 %v700, %v1101
        %v1200 = vmul.f32 %v701, %v1102
        %v1201 = vmul.f32 %v702, %v1103
        %v1202 = vmul.f32 %v703, %v1104
        %v1203 = vmul.f32 %v704, %v1105
        %v1204 = vmul.f32 %v705, %v1106
        %v1205 = vmul.f32 %v706, %v1107
        %v1206 = vmul.f32 %v707, %v1108
        %v1207 = vmul.f32 %v708, %v1109
        %v1208 = vmul.f32 %v709, %v1110
        %v1209 = vmul.f32 %v710, %v1111
        %v1210 = vmul.f32 %v711, %v1112
        %v1211 = vmul.f32 %v712, %v1113
        %v1212 = vmul.f32 %v713, %v1114
        %v1213 = vmul.f32 %v714, %v1115
        %v1214 = vmul.f32 %v715, %v1116
        %v1215 = vmul.f32 %v716, %v1117
        %v1216 = vmul.f32 %v717, %v1118
        %v1217 = vmul.f32 %v718, %v1119
        %v1218 = vmul.f32 %v719, %v1120
        %v1219 = vmul.f32 %v720, %v1121
        %v1220 = vmul.f32 %v721, %v1122
        %v1221 = vmul.f32 %v722, %v1123
        %v1222 = vmul.f32 %v723, %v1124
        %v1223 = vmul.f32 %v724, %v1125
        %v1224 = vmul.f32 %v725, %v1126
        %v1225 = vmul.f32 %v726, %v1127
        %v1226 = vmul.f32 %v727, %v1128
        %v1227 = vmul.f32 %v728, %v1129
        %v1228 = vmul.f32 %v729, %v1130
        %v1229 = vmul.f32 %v730, %v1131
        %v1230 = vmul.f32 %v731, %v1132
        %v1231 = vmul.f32 %v732, %v1133
        %v1232 = vmul.f32 %v733, %v1134
        %v1233 = vmul.f32 %v734, %v1135
        %v1234 = vmul.f32 %v735, %v1136
        %v1235 = vmul.f32 %v736, %v1137
        %v1236 = vmul.f32 %v737, %v1138
        %v1237 = vmul.f32 %v738, %v1139
        %v1238 = vmul.f32 %v739, %v1140
        %v1239 = vmul.f32 %v740, %v1141
        %v1240 = vmul.f32 %v741, %v1142
        %v1241 = vmul.f32 %v742, %v1143
        %v1242 = vmul.f32 %v743, %v1144
        %v1243 = vadd.f32 %v1147, %v1148
        %v1244 = vadd.f32 %v1243, %v1149
        %v1245 = vadd.f32 %v1244, %v1150
        %v1246 = vadd.f32 %v1245, %v1151
        %v1247 = vadd.f32 %v1246, %v1152
        %v1248 = vadd.f32 %v1247, %v1153
        %v1249 = vadd.f32 %v1248, %v1154
        %v1250 = vadd.f32 %v1249, %v1155
        %v1251 = vadd.f32 %v1250, %v1156
        %v1252 = vadd.f32 %v1251, %v1157
        %v1253 = vadd.f32 %v1252, %v1158
        %v1254 = vadd.f32 %v1253, %v1159
        %v1255 = vadd.f32 %v1254, %v1160
        %v1256 = vadd.f32 %v1255, %v1161
        %v1257 = vadd.f32 %v1256, %v1162
        %v1258 = vadd.f32 %v1257, %v1163
        %v1259 = vadd.f32 %v1258, %v1164
        %v1260 = vadd.f32 %v1259, %v1165
        %v1261 = vadd.f32 %v1260, %v1166
        %v1262 = vadd.f32 %v1261, %v1167
        %v1263 = vadd.f32 %v1262, %v1168
        %v1264 = vadd.f32 %v1263, %v1169
        %v1265 = vadd.f32 %v1264, %v1170
        %v1266 = vadd.f32 %v1265, %v1171
        %v1267 = vadd.f32 %v1266, %v1172
        %v1268 = vadd.f32 %v1267, %v1173
        %v1269 = vadd.f32 %v1268, %v1174
        %v1270 = vadd.f32 %v1269, %v1175
        %v1271 = vadd.f32 %v1270, %v1176
        %v1272 = vadd.f32 %v1271, %v1177
        %v1273 = vadd.f32 %v1272, %v1178
        %v1274 = vadd.f32 %v1273, %v1179
        %v1275 = vadd.f32 %v1274, %v1180
        %v1276 = vadd.f32 %v1275, %v1181
        %v1277 = vadd.f32 %v1276, %v1182
        %v1278 = vadd.f32 %v1277, %v1183
        %v1279 = vadd.f32 %v1278, %v1184
        %v1280 = vadd.f32 %v1279, %v1185
        %v1281 = vadd.f32 %v1280, %v1186
        %v1282 = vadd.f32 %v1281, %v1187
        %v1283 = vadd.f32 %v1282, %v1188
        %v1284 = vadd.f32 %v1283, %v1189
        %v1285 = vadd.f32 %v1284, %v1190
        %v1286 = vadd.f32 %v1285, %v1191
        %v1287 = vadd.f32 %v1286, %v1192
        %v1288 = vadd.f32 %v1287, %v1193
        %v1289 = vadd.f32 %v1288, %v1194
        %v1290 = vrot.slane %v1289, 4
        %v1291 = vadd.f32 %v1289, %v1290
        %v1292 = vrot.slane %v1291, 2
        %v1293 = vadd.f32 %v1291, %v1292
        %v1294 = vrot.slane %v1293, 1
        %v1295 = vadd.f32 %v1293, %v1294
        %v1296 = vadd.f32 %v1195, %v1196
        %v1297 = vadd.f32 %v1296, %v1197
        %v1298 = vadd.f32 %v1297, %v1198
        %v1299 = vadd.f32 %v1298, %v1199
        %v1300 = vadd.f32 %v1299, %v1200
        %v1301 = vadd.f32 %v1300, %v1201
        %v1302 = vadd.f32 %v1301, %v1202
        %v1303 = vadd.f32 %v1302, %v1203
        %v1304 = vadd.f32 %v1303, %v1204
        %v1305 = vadd.f32 %v1304, %v1205
        %v1306 = vadd.f32 %v1305, %v1206
        %v1307 = vadd.f32 %v1306, %v1207
        %v1308 = vadd.f32 %v1307, %v1208
        %v1309 = vadd.f32 %v1308, %v1209
        %v1310 = vadd.f32 %v1309, %v1210
        %v1311 = vadd.f32 %v1310, %v1211
        %v1312 = vadd.f32 %v1311, %v1212
        %v1313 = vadd.f32 %v1312, %v1213
        %v1314 = vadd.f32 %v1313, %v1214
        %v1315 = vadd.f32 %v1314, %v1215
        %v1316 = vadd.f32 %v1315, %v1216
        %v1317 = vadd.f32 %v1316, %v1217
        %v1318 = vadd.f32 %v1317, %v1218
        %v1319 = vadd.f32 %v1318, %v1219
        %v1320 = vadd.f32 %v1319, %v1220
        %v1321 = vadd.f32 %v1320, %v1221
        %v1322 = vadd.f32 %v1321, %v1222
        %v1323 = vadd.f32 %v1322, %v1223
        %v1324 = vadd.f32 %v1323, %v1224
        %v1325 = vadd.f32 %v1324, %v1225
        %v1326 = vadd.f32 %v1325, %v1226
        %v1327 = vadd.f32 %v1326, %v1227
        %v1328 = vadd.f32 %v1327, %v1228
        %v1329 = vadd.f32 %v1328, %v1229
        %v1330 = vadd.f32 %v1329, %v1230
        %v1331 = vadd.f32 %v1330, %v1231
        %v1332 = vadd.f32 %v1331, %v1232
        %v1333 = vadd.f32 %v1332, %v1233
        %v1334 = vadd.f32 %v1333, %v1234
        %v1335 = vadd.f32 %v1334, %v1235
        %v1336 = vadd.f32 %v1335, %v1236
        %v1337 = vadd.f32 %v1336, %v1237
        %v1338 = vadd.f32 %v1337, %v1238
        %v1339 = vadd.f32 %v1338, %v1239
        %v1340 = vadd.f32 %v1339, %v1240
        %v1341 = vadd.f32 %v1340, %v1241
        %v1342 = vadd.f32 %v1341, %v1242
        %v1343 = vrot.slane %v1342, 4
        %v1344 = vadd.f32 %v1342, %v1343
        %v1345 = vrot.slane %v1344, 2
        %v1346 = vadd.f32 %v1344, %v1345
        %v1347 = vrot.slane %v1346, 1
        %v1348 = vadd.f32 %v1346, %v1347
        %v1349 = vadd.f32 %v1145, %v1295
        %v1350 = vadd.f32 %v1146, %v1348
        %1351 = vst [vmem:[#allocation2 + $0x1] sm:$0x1] %v1349
        %1352 = vst [vmem:[#allocation2 + $0x11] sm:$0x1] %v1350
        %s1353 = scalar_lea.vmem %s616, 384 [#allocation4]
        %v1354 = vld [vmem:[%s1353] sm:$0xf]
        %v1355 = vld [vmem:[%s1353 + $0x4] sm:$0xf]
        %v1356 = vld [vmem:[%s1353 + $0x8] sm:$0xf]
        %v1357 = vld [vmem:[%s1353 + $0xc] sm:$0xf]
        %v1358 = vld [vmem:[%s1353 + $0x10] sm:$0xf]
        %v1359 = vld [vmem:[%s1353 + $0x14] sm:$0xf]
        %v1360 = vld [vmem:[%s1353 + $0x18] sm:$0xf]
        %v1361 = vld [vmem:[%s1353 + $0x1c] sm:$0xf]
        %v1362 = vld [vmem:[%s1353 + $0x20] sm:$0xf]
        %v1363 = vld [vmem:[%s1353 + $0x24] sm:$0xf]
        %v1364 = vld [vmem:[%s1353 + $0x28] sm:$0xf]
        %v1365 = vld [vmem:[%s1353 + $0x2c] sm:$0xf]
        %v1366 = vld [vmem:[%s1353 + $0x30] sm:$0xf]
        %v1367 = vld [vmem:[%s1353 + $0x34] sm:$0xf]
        %v1368 = vld [vmem:[%s1353 + $0x38] sm:$0xf]
        %v1369 = vld [vmem:[%s1353 + $0x3c] sm:$0xf]
        %v1370 = vld [vmem:[%s1353 + $0x40] sm:$0xf]
        %v1371 = vld [vmem:[%s1353 + $0x44] sm:$0xf]
        %v1372 = vld [vmem:[%s1353 + $0x48] sm:$0xf]
        %v1373 = vld [vmem:[%s1353 + $0x4c] sm:$0xf]
        %v1374 = vld [vmem:[%s1353 + $0x50] sm:$0xf]
        %v1375 = vld [vmem:[%s1353 + $0x54] sm:$0xf]
        %v1376 = vld [vmem:[%s1353 + $0x58] sm:$0xf]
        %v1377 = vld [vmem:[%s1353 + $0x5c] sm:$0xf]
        %v1378 = vld [vmem:[%s1353 + $0x60] sm:$0xf]
        %v1379 = vld [vmem:[%s1353 + $0x64] sm:$0xf]
        %v1380 = vld [vmem:[%s1353 + $0x68] sm:$0xf]
        %v1381 = vld [vmem:[%s1353 + $0x6c] sm:$0xf]
        %v1382 = vld [vmem:[%s1353 + $0x70] sm:$0xf]
        %v1383 = vld [vmem:[%s1353 + $0x74] sm:$0xf]
        %v1384 = vld [vmem:[%s1353 + $0x78] sm:$0xf]
        %v1385 = vld [vmem:[%s1353 + $0x7c] sm:$0xf]
        %v1386 = vld [vmem:[%s1353 + $0x80] sm:$0xf]
        %v1387 = vld [vmem:[%s1353 + $0x84] sm:$0xf]
        %v1388 = vld [vmem:[%s1353 + $0x88] sm:$0xf]
        %v1389 = vld [vmem:[%s1353 + $0x8c] sm:$0xf]
        %v1390 = vld [vmem:[%s1353 + $0x90] sm:$0xf]
        %v1391 = vld [vmem:[%s1353 + $0x94] sm:$0xf]
        %v1392 = vld [vmem:[%s1353 + $0x98] sm:$0xf]
        %v1393 = vld [vmem:[%s1353 + $0x9c] sm:$0xf]
        %v1394 = vld [vmem:[%s1353 + $0xa0] sm:$0xf]
        %v1395 = vld [vmem:[%s1353 + $0xa4] sm:$0xf]
        %v1396 = vld [vmem:[%s1353 + $0xa8] sm:$0xf]
        %v1397 = vld [vmem:[%s1353 + $0xac] sm:$0xf]
        %v1398 = vld [vmem:[%s1353 + $0xb0] sm:$0xf]
        %v1399 = vld [vmem:[%s1353 + $0xb4] sm:$0xf]
        %v1400 = vld [vmem:[%s1353 + $0xb8] sm:$0xf]
        %v1401 = vld [vmem:[%s1353 + $0xbc] sm:$0xf]
        %v1402 = vunpack.c.l.bf16 %v1354
        %v1403 = vunpack.c.l.bf16 %v1355
        %v1404 = vunpack.c.l.bf16 %v1356
        %v1405 = vunpack.c.l.bf16 %v1357
        %v1406 = vunpack.c.l.bf16 %v1358
        %v1407 = vunpack.c.l.bf16 %v1359
        %v1408 = vunpack.c.l.bf16 %v1360
        %v1409 = vunpack.c.l.bf16 %v1361
        %v1410 = vunpack.c.l.bf16 %v1362
        %v1411 = vunpack.c.l.bf16 %v1363
        %v1412 = vunpack.c.l.bf16 %v1364
        %v1413 = vunpack.c.l.bf16 %v1365
        %v1414 = vunpack.c.l.bf16 %v1366
        %v1415 = vunpack.c.l.bf16 %v1367
        %v1416 = vunpack.c.l.bf16 %v1368
        %v1417 = vunpack.c.l.bf16 %v1369
        %v1418 = vunpack.c.l.bf16 %v1370
        %v1419 = vunpack.c.l.bf16 %v1371
        %v1420 = vunpack.c.l.bf16 %v1372
        %v1421 = vunpack.c.l.bf16 %v1373
        %v1422 = vunpack.c.l.bf16 %v1374
        %v1423 = vunpack.c.l.bf16 %v1375
        %v1424 = vunpack.c.l.bf16 %v1376
        %v1425 = vunpack.c.l.bf16 %v1377
        %v1426 = vunpack.c.l.bf16 %v1378
        %v1427 = vunpack.c.l.bf16 %v1379
        %v1428 = vunpack.c.l.bf16 %v1380
        %v1429 = vunpack.c.l.bf16 %v1381
        %v1430 = vunpack.c.l.bf16 %v1382
        %v1431 = vunpack.c.l.bf16 %v1383
        %v1432 = vunpack.c.l.bf16 %v1384
        %v1433 = vunpack.c.l.bf16 %v1385
        %v1434 = vunpack.c.l.bf16 %v1386
        %v1435 = vunpack.c.l.bf16 %v1387
        %v1436 = vunpack.c.l.bf16 %v1388
        %v1437 = vunpack.c.l.bf16 %v1389
        %v1438 = vunpack.c.l.bf16 %v1390
        %v1439 = vunpack.c.l.bf16 %v1391
        %v1440 = vunpack.c.l.bf16 %v1392
        %v1441 = vunpack.c.l.bf16 %v1393
        %v1442 = vunpack.c.l.bf16 %v1394
        %v1443 = vunpack.c.l.bf16 %v1395
        %v1444 = vunpack.c.l.bf16 %v1396
        %v1445 = vunpack.c.l.bf16 %v1397
        %v1446 = vunpack.c.l.bf16 %v1398
        %v1447 = vunpack.c.l.bf16 %v1399
        %v1448 = vunpack.c.l.bf16 %v1400
        %v1449 = vunpack.c.l.bf16 %v1401
        %v1450 = vld [vmem:[#allocation2 + $0x2] sm:$0x1]
        %v1451 = vld [vmem:[#allocation2 + $0x12] sm:$0x1]
        %v1452 = vmul.f32 %v648, %v1402
        %v1453 = vmul.f32 %v649, %v1403
        %v1454 = vmul.f32 %v650, %v1404
        %v1455 = vmul.f32 %v651, %v1405
        %v1456 = vmul.f32 %v652, %v1406
        %v1457 = vmul.f32 %v653, %v1407
        %v1458 = vmul.f32 %v654, %v1408
        %v1459 = vmul.f32 %v655, %v1409
        %v1460 = vmul.f32 %v656, %v1410
        %v1461 = vmul.f32 %v657, %v1411
        %v1462 = vmul.f32 %v658, %v1412
        %v1463 = vmul.f32 %v659, %v1413
        %v1464 = vmul.f32 %v660, %v1414
        %v1465 = vmul.f32 %v661, %v1415
        %v1466 = vmul.f32 %v662, %v1416
        %v1467 = vmul.f32 %v663, %v1417
        %v1468 = vmul.f32 %v664, %v1418
        %v1469 = vmul.f32 %v665, %v1419
        %v1470 = vmul.f32 %v666, %v1420
        %v1471 = vmul.f32 %v667, %v1421
        %v1472 = vmul.f32 %v668, %v1422
        %v1473 = vmul.f32 %v669, %v1423
        %v1474 = vmul.f32 %v670, %v1424
        %v1475 = vmul.f32 %v671, %v1425
        %v1476 = vmul.f32 %v672, %v1426
        %v1477 = vmul.f32 %v673, %v1427
        %v1478 = vmul.f32 %v674, %v1428
        %v1479 = vmul.f32 %v675, %v1429
        %v1480 = vmul.f32 %v676, %v1430
        %v1481 = vmul.f32 %v677, %v1431
        %v1482 = vmul.f32 %v678, %v1432
        %v1483 = vmul.f32 %v679, %v1433
        %v1484 = vmul.f32 %v680, %v1434
        %v1485 = vmul.f32 %v681, %v1435
        %v1486 = vmul.f32 %v682, %v1436
        %v1487 = vmul.f32 %v683, %v1437
        %v1488 = vmul.f32 %v684, %v1438
        %v1489 = vmul.f32 %v685, %v1439
        %v1490 = vmul.f32 %v686, %v1440
        %v1491 = vmul.f32 %v687, %v1441
        %v1492 = vmul.f32 %v688, %v1442
        %v1493 = vmul.f32 %v689, %v1443
        %v1494 = vmul.f32 %v690, %v1444
        %v1495 = vmul.f32 %v691, %v1445
        %v1496 = vmul.f32 %v692, %v1446
        %v1497 = vmul.f32 %v693, %v1447
        %v1498 = vmul.f32 %v694, %v1448
        %v1499 = vmul.f32 %v695, %v1449
        %v1500 = vmul.f32 %v696, %v1402
        %v1501 = vmul.f32 %v697, %v1403
        %v1502 = vmul.f32 %v698, %v1404
        %v1503 = vmul.f32 %v699, %v1405
        %v1504 = vmul.f32 %v700, %v1406
        %v1505 = vmul.f32 %v701, %v1407
        %v1506 = vmul.f32 %v702, %v1408
        %v1507 = vmul.f32 %v703, %v1409
        %v1508 = vmul.f32 %v704, %v1410
        %v1509 = vmul.f32 %v705, %v1411
        %v1510 = vmul.f32 %v706, %v1412
        %v1511 = vmul.f32 %v707, %v1413
        %v1512 = vmul.f32 %v708, %v1414
        %v1513 = vmul.f32 %v709, %v1415
        %v1514 = vmul.f32 %v710, %v1416
        %v1515 = vmul.f32 %v711, %v1417
        %v1516 = vmul.f32 %v712, %v1418
        %v1517 = vmul.f32 %v713, %v1419
        %v1518 = vmul.f32 %v714, %v1420
        %v1519 = vmul.f32 %v715, %v1421
        %v1520 = vmul.f32 %v716, %v1422
        %v1521 = vmul.f32 %v717, %v1423
        %v1522 = vmul.f32 %v718, %v1424
        %v1523 = vmul.f32 %v719, %v1425
        %v1524 = vmul.f32 %v720, %v1426
        %v1525 = vmul.f32 %v721, %v1427
        %v1526 = vmul.f32 %v722, %v1428
        %v1527 = vmul.f32 %v723, %v1429
        %v1528 = vmul.f32 %v724, %v1430
        %v1529 = vmul.f32 %v725, %v1431
        %v1530 = vmul.f32 %v726, %v1432
        %v1531 = vmul.f32 %v727, %v1433
        %v1532 = vmul.f32 %v728, %v1434
        %v1533 = vmul.f32 %v729, %v1435
        %v1534 = vmul.f32 %v730, %v1436
        %v1535 = vmul.f32 %v731, %v1437
        %v1536 = vmul.f32 %v732, %v1438
        %v1537 = vmul.f32 %v733, %v1439
        %v1538 = vmul.f32 %v734, %v1440
        %v1539 = vmul.f32 %v735, %v1441
        %v1540 = vmul.f32 %v736, %v1442
        %v1541 = vmul.f32 %v737, %v1443
        %v1542 = vmul.f32 %v738, %v1444
        %v1543 = vmul.f32 %v739, %v1445
        %v1544 = vmul.f32 %v740, %v1446
        %v1545 = vmul.f32 %v741, %v1447
        %v1546 = vmul.f32 %v742, %v1448
        %v1547 = vmul.f32 %v743, %v1449
        %v1548 = vadd.f32 %v1452, %v1453
        %v1549 = vadd.f32 %v1548, %v1454
        %v1550 = vadd.f32 %v1549, %v1455
        %v1551 = vadd.f32 %v1550, %v1456
        %v1552 = vadd.f32 %v1551, %v1457
        %v1553 = vadd.f32 %v1552, %v1458
        %v1554 = vadd.f32 %v1553, %v1459
        %v1555 = vadd.f32 %v1554, %v1460
        %v1556 = vadd.f32 %v1555, %v1461
        %v1557 = vadd.f32 %v1556, %v1462
        %v1558 = vadd.f32 %v1557, %v1463
        %v1559 = vadd.f32 %v1558, %v1464
        %v1560 = vadd.f32 %v1559, %v1465
        %v1561 = vadd.f32 %v1560, %v1466
        %v1562 = vadd.f32 %v1561, %v1467
        %v1563 = vadd.f32 %v1562, %v1468
        %v1564 = vadd.f32 %v1563, %v1469
        %v1565 = vadd.f32 %v1564, %v1470
        %v1566 = vadd.f32 %v1565, %v1471
        %v1567 = vadd.f32 %v1566, %v1472
        %v1568 = vadd.f32 %v1567, %v1473
        %v1569 = vadd.f32 %v1568, %v1474
        %v1570 = vadd.f32 %v1569, %v1475
        %v1571 = vadd.f32 %v1570, %v1476
        %v1572 = vadd.f32 %v1571, %v1477
        %v1573 = vadd.f32 %v1572, %v1478
        %v1574 = vadd.f32 %v1573, %v1479
        %v1575 = vadd.f32 %v1574, %v1480
        %v1576 = vadd.f32 %v1575, %v1481
        %v1577 = vadd.f32 %v1576, %v1482
        %v1578 = vadd.f32 %v1577, %v1483
        %v1579 = vadd.f32 %v1578, %v1484
        %v1580 = vadd.f32 %v1579, %v1485
        %v1581 = vadd.f32 %v1580, %v1486
        %v1582 = vadd.f32 %v1581, %v1487
        %v1583 = vadd.f32 %v1582, %v1488
        %v1584 = vadd.f32 %v1583, %v1489
        %v1585 = vadd.f32 %v1584, %v1490
        %v1586 = vadd.f32 %v1585, %v1491
        %v1587 = vadd.f32 %v1586, %v1492
        %v1588 = vadd.f32 %v1587, %v1493
        %v1589 = vadd.f32 %v1588, %v1494
        %v1590 = vadd.f32 %v1589, %v1495
        %v1591 = vadd.f32 %v1590, %v1496
        %v1592 = vadd.f32 %v1591, %v1497
        %v1593 = vadd.f32 %v1592, %v1498
        %v1594 = vadd.f32 %v1593, %v1499
        %v1595 = vrot.slane %v1594, 4
        %v1596 = vadd.f32 %v1594, %v1595
        %v1597 = vrot.slane %v1596, 2
        %v1598 = vadd.f32 %v1596, %v1597
        %v1599 = vrot.slane %v1598, 1
        %v1600 = vadd.f32 %v1598, %v1599
        %v1601 = vadd.f32 %v1500, %v1501
        %v1602 = vadd.f32 %v1601, %v1502
        %v1603 = vadd.f32 %v1602, %v1503
        %v1604 = vadd.f32 %v1603, %v1504
        %v1605 = vadd.f32 %v1604, %v1505
        %v1606 = vadd.f32 %v1605, %v1506
        %v1607 = vadd.f32 %v1606, %v1507
        %v1608 = vadd.f32 %v1607, %v1508
        %v1609 = vadd.f32 %v1608, %v1509
        %v1610 = vadd.f32 %v1609, %v1510
        %v1611 = vadd.f32 %v1610, %v1511
        %v1612 = vadd.f32 %v1611, %v1512
        %v1613 = vadd.f32 %v1612, %v1513
        %v1614 = vadd.f32 %v1613, %v1514
        %v1615 = vadd.f32 %v1614, %v1515
        %v1616 = vadd.f32 %v1615, %v1516
        %v1617 = vadd.f32 %v1616, %v1517
        %v1618 = vadd.f32 %v1617, %v1518
        %v1619 = vadd.f32 %v1618, %v1519
        %v1620 = vadd.f32 %v1619, %v1520
        %v1621 = vadd.f32 %v1620, %v1521
        %v1622 = vadd.f32 %v1621, %v1522
        %v1623 = vadd.f32 %v1622, %v1523
        %v1624 = vadd.f32 %v1623, %v1524
        %v1625 = vadd.f32 %v1624, %v1525
        %v1626 = vadd.f32 %v1625, %v1526
        %v1627 = vadd.f32 %v1626, %v1527
        %v1628 = vadd.f32 %v1627, %v1528
        %v1629 = vadd.f32 %v1628, %v1529
        %v1630 = vadd.f32 %v1629, %v1530
        %v1631 = vadd.f32 %v1630, %v1531
        %v1632 = vadd.f32 %v1631, %v1532
        %v1633 = vadd.f32 %v1632, %v1533
        %v1634 = vadd.f32 %v1633, %v1534
        %v1635 = vadd.f32 %v1634, %v1535
        %v1636 = vadd.f32 %v1635, %v1536
        %v1637 = vadd.f32 %v1636, %v1537
        %v1638 = vadd.f32 %v1637, %v1538
        %v1639 = vadd.f32 %v1638, %v1539
        %v1640 = vadd.f32 %v1639, %v1540
        %v1641 = vadd.f32 %v1640, %v1541
        %v1642 = vadd.f32 %v1641, %v1542
        %v1643 = vadd.f32 %v1642, %v1543
        %v1644 = vadd.f32 %v1643, %v1544
        %v1645 = vadd.f32 %v1644, %v1545
        %v1646 = vadd.f32 %v1645, %v1546
        %v1647 = vadd.f32 %v1646, %v1547
        %v1648 = vrot.slane %v1647, 4
        %v1649 = vadd.f32 %v1647, %v1648
        %v1650 = vrot.slane %v1649, 2
        %v1651 = vadd.f32 %v1649, %v1650
        %v1652 = vrot.slane %v1651, 1
        %v1653 = vadd.f32 %v1651, %v1652
        %v1654 = vadd.f32 %v1450, %v1600
        %v1655 = vadd.f32 %v1451, %v1653
        %1656 = vst [vmem:[#allocation2 + $0x2] sm:$0x1] %v1654
        %1657 = vst [vmem:[#allocation2 + $0x12] sm:$0x1] %v1655
        %s1658 = scalar_lea.vmem %s616, 576 [#allocation4]
        %v1659 = vld [vmem:[%s1658] sm:$0xf]
        %v1660 = vld [vmem:[%s1658 + $0x4] sm:$0xf]
        %v1661 = vld [vmem:[%s1658 + $0x8] sm:$0xf]
        %v1662 = vld [vmem:[%s1658 + $0xc] sm:$0xf]
        %v1663 = vld [vmem:[%s1658 + $0x10] sm:$0xf]
        %v1664 = vld [vmem:[%s1658 + $0x14] sm:$0xf]
        %v1665 = vld [vmem:[%s1658 + $0x18] sm:$0xf]
        %v1666 = vld [vmem:[%s1658 + $0x1c] sm:$0xf]
        %v1667 = vld [vmem:[%s1658 + $0x20] sm:$0xf]
        %v1668 = vld [vmem:[%s1658 + $0x24] sm:$0xf]
        %v1669 = vld [vmem:[%s1658 + $0x28] sm:$0xf]
        %v1670 = vld [vmem:[%s1658 + $0x2c] sm:$0xf]
        %v1671 = vld [vmem:[%s1658 + $0x30] sm:$0xf]
        %v1672 = vld [vmem:[%s1658 + $0x34] sm:$0xf]
        %v1673 = vld [vmem:[%s1658 + $0x38] sm:$0xf]
        %v1674 = vld [vmem:[%s1658 + $0x3c] sm:$0xf]
        %v1675 = vld [vmem:[%s1658 + $0x40] sm:$0xf]
        %v1676 = vld [vmem:[%s1658 + $0x44] sm:$0xf]
        %v1677 = vld [vmem:[%s1658 + $0x48] sm:$0xf]
        %v1678 = vld [vmem:[%s1658 + $0x4c] sm:$0xf]
        %v1679 = vld [vmem:[%s1658 + $0x50] sm:$0xf]
        %v1680 = vld [vmem:[%s1658 + $0x54] sm:$0xf]
        %v1681 = vld [vmem:[%s1658 + $0x58] sm:$0xf]
        %v1682 = vld [vmem:[%s1658 + $0x5c] sm:$0xf]
        %v1683 = vld [vmem:[%s1658 + $0x60] sm:$0xf]
        %v1684 = vld [vmem:[%s1658 + $0x64] sm:$0xf]
        %v1685 = vld [vmem:[%s1658 + $0x68] sm:$0xf]
        %v1686 = vld [vmem:[%s1658 + $0x6c] sm:$0xf]
        %v1687 = vld [vmem:[%s1658 + $0x70] sm:$0xf]
        %v1688 = vld [vmem:[%s1658 + $0x74] sm:$0xf]
        %v1689 = vld [vmem:[%s1658 + $0x78] sm:$0xf]
        %v1690 = vld [vmem:[%s1658 + $0x7c] sm:$0xf]
        %v1691 = vld [vmem:[%s1658 + $0x80] sm:$0xf]
        %v1692 = vld [vmem:[%s1658 + $0x84] sm:$0xf]
        %v1693 = vld [vmem:[%s1658 + $0x88] sm:$0xf]
        %v1694 = vld [vmem:[%s1658 + $0x8c] sm:$0xf]
        %v1695 = vld [vmem:[%s1658 + $0x90] sm:$0xf]
        %v1696 = vld [vmem:[%s1658 + $0x94] sm:$0xf]
        %v1697 = vld [vmem:[%s1658 + $0x98] sm:$0xf]
        %v1698 = vld [vmem:[%s1658 + $0x9c] sm:$0xf]
        %v1699 = vld [vmem:[%s1658 + $0xa0] sm:$0xf]
        %v1700 = vld [vmem:[%s1658 + $0xa4] sm:$0xf]
        %v1701 = vld [vmem:[%s1658 + $0xa8] sm:$0xf]
        %v1702 = vld [vmem:[%s1658 + $0xac] sm:$0xf]
        %v1703 = vld [vmem:[%s1658 + $0xb0] sm:$0xf]
        %v1704 = vld [vmem:[%s1658 + $0xb4] sm:$0xf]
        %v1705 = vld [vmem:[%s1658 + $0xb8] sm:$0xf]
        %v1706 = vld [vmem:[%s1658 + $0xbc] sm:$0xf]
        %v1707 = vunpack.c.l.bf16 %v1659
        %v1708 = vunpack.c.l.bf16 %v1660
        %v1709 = vunpack.c.l.bf16 %v1661
        %v1710 = vunpack.c.l.bf16 %v1662
        %v1711 = vunpack.c.l.bf16 %v1663
        %v1712 = vunpack.c.l.bf16 %v1664
        %v1713 = vunpack.c.l.bf16 %v1665
        %v1714 = vunpack.c.l.bf16 %v1666
        %v1715 = vunpack.c.l.bf16 %v1667
        %v1716 = vunpack.c.l.bf16 %v1668
        %v1717 = vunpack.c.l.bf16 %v1669
        %v1718 = vunpack.c.l.bf16 %v1670
        %v1719 = vunpack.c.l.bf16 %v1671
        %v1720 = vunpack.c.l.bf16 %v1672
        %v1721 = vunpack.c.l.bf16 %v1673
        %v1722 = vunpack.c.l.bf16 %v1674
        %v1723 = vunpack.c.l.bf16 %v1675
        %v1724 = vunpack.c.l.bf16 %v1676
        %v1725 = vunpack.c.l.bf16 %v1677
        %v1726 = vunpack.c.l.bf16 %v1678
        %v1727 = vunpack.c.l.bf16 %v1679
        %v1728 = vunpack.c.l.bf16 %v1680
        %v1729 = vunpack.c.l.bf16 %v1681
        %v1730 = vunpack.c.l.bf16 %v1682
        %v1731 = vunpack.c.l.bf16 %v1683
        %v1732 = vunpack.c.l.bf16 %v1684
        %v1733 = vunpack.c.l.bf16 %v1685
        %v1734 = vunpack.c.l.bf16 %v1686
        %v1735 = vunpack.c.l.bf16 %v1687
        %v1736 = vunpack.c.l.bf16 %v1688
        %v1737 = vunpack.c.l.bf16 %v1689
        %v1738 = vunpack.c.l.bf16 %v1690
        %v1739 = vunpack.c.l.bf16 %v1691
        %v1740 = vunpack.c.l.bf16 %v1692
        %v1741 = vunpack.c.l.bf16 %v1693
        %v1742 = vunpack.c.l.bf16 %v1694
        %v1743 = vunpack.c.l.bf16 %v1695
        %v1744 = vunpack.c.l.bf16 %v1696
        %v1745 = vunpack.c.l.bf16 %v1697
        %v1746 = vunpack.c.l.bf16 %v1698
        %v1747 = vunpack.c.l.bf16 %v1699
        %v1748 = vunpack.c.l.bf16 %v1700
        %v1749 = vunpack.c.l.bf16 %v1701
        %v1750 = vunpack.c.l.bf16 %v1702
        %v1751 = vunpack.c.l.bf16 %v1703
        %v1752 = vunpack.c.l.bf16 %v1704
        %v1753 = vunpack.c.l.bf16 %v1705
        %v1754 = vunpack.c.l.bf16 %v1706
        %v1755 = vld [vmem:[#allocation2 + $0x3] sm:$0x1]
        %v1756 = vld [vmem:[#allocation2 + $0x13] sm:$0x1]
        %v1757 = vmul.f32 %v648, %v1707
        %v1758 = vmul.f32 %v649, %v1708
        %v1759 = vmul.f32 %v650, %v1709
        %v1760 = vmul.f32 %v651, %v1710
        %v1761 = vmul.f32 %v652, %v1711
        %v1762 = vmul.f32 %v653, %v1712
        %v1763 = vmul.f32 %v654, %v1713
        %v1764 = vmul.f32 %v655, %v1714
        %v1765 = vmul.f32 %v656, %v1715
        %v1766 = vmul.f32 %v657, %v1716
        %v1767 = vmul.f32 %v658, %v1717
        %v1768 = vmul.f32 %v659, %v1718
        %v1769 = vmul.f32 %v660, %v1719
        %v1770 = vmul.f32 %v661, %v1720
        %v1771 = vmul.f32 %v662, %v1721
        %v1772 = vmul.f32 %v663, %v1722
        %v1773 = vmul.f32 %v664, %v1723
        %v1774 = vmul.f32 %v665, %v1724
        %v1775 = vmul.f32 %v666, %v1725
        %v1776 = vmul.f32 %v667, %v1726
        %v1777 = vmul.f32 %v668, %v1727
        %v1778 = vmul.f32 %v669, %v1728
        %v1779 = vmul.f32 %v670, %v1729
        %v1780 = vmul.f32 %v671, %v1730
        %v1781 = vmul.f32 %v672, %v1731
        %v1782 = vmul.f32 %v673, %v1732
        %v1783 = vmul.f32 %v674, %v1733
        %v1784 = vmul.f32 %v675, %v1734
        %v1785 = vmul.f32 %v676, %v1735
        %v1786 = vmul.f32 %v677, %v1736
        %v1787 = vmul.f32 %v678, %v1737
        %v1788 = vmul.f32 %v679, %v1738
        %v1789 = vmul.f32 %v680, %v1739
        %v1790 = vmul.f32 %v681, %v1740
        %v1791 = vmul.f32 %v682, %v1741
        %v1792 = vmul.f32 %v683, %v1742
        %v1793 = vmul.f32 %v684, %v1743
        %v1794 = vmul.f32 %v685, %v1744
        %v1795 = vmul.f32 %v686, %v1745
        %v1796 = vmul.f32 %v687, %v1746
        %v1797 = vmul.f32 %v688, %v1747
        %v1798 = vmul.f32 %v689, %v1748
        %v1799 = vmul.f32 %v690, %v1749
        %v1800 = vmul.f32 %v691, %v1750
        %v1801 = vmul.f32 %v692, %v1751
        %v1802 = vmul.f32 %v693, %v1752
        %v1803 = vmul.f32 %v694, %v1753
        %v1804 = vmul.f32 %v695, %v1754
        %v1805 = vmul.f32 %v696, %v1707
        %v1806 = vmul.f32 %v697, %v1708
        %v1807 = vmul.f32 %v698, %v1709
        %v1808 = vmul.f32 %v699, %v1710
        %v1809 = vmul.f32 %v700, %v1711
        %v1810 = vmul.f32 %v701, %v1712
        %v1811 = vmul.f32 %v702, %v1713
        %v1812 = vmul.f32 %v703, %v1714
        %v1813 = vmul.f32 %v704, %v1715
        %v1814 = vmul.f32 %v705, %v1716
        %v1815 = vmul.f32 %v706, %v1717
        %v1816 = vmul.f32 %v707, %v1718
        %v1817 = vmul.f32 %v708, %v1719
        %v1818 = vmul.f32 %v709, %v1720
        %v1819 = vmul.f32 %v710, %v1721
        %v1820 = vmul.f32 %v711, %v1722
        %v1821 = vmul.f32 %v712, %v1723
        %v1822 = vmul.f32 %v713, %v1724
        %v1823 = vmul.f32 %v714, %v1725
        %v1824 = vmul.f32 %v715, %v1726
        %v1825 = vmul.f32 %v716, %v1727
        %v1826 = vmul.f32 %v717, %v1728
        %v1827 = vmul.f32 %v718, %v1729
        %v1828 = vmul.f32 %v719, %v1730
        %v1829 = vmul.f32 %v720, %v1731
        %v1830 = vmul.f32 %v721, %v1732
        %v1831 = vmul.f32 %v722, %v1733
        %v1832 = vmul.f32 %v723, %v1734
        %v1833 = vmul.f32 %v724, %v1735
        %v1834 = vmul.f32 %v725, %v1736
        %v1835 = vmul.f32 %v726, %v1737
        %v1836 = vmul.f32 %v727, %v1738
        %v1837 = vmul.f32 %v728, %v1739
        %v1838 = vmul.f32 %v729, %v1740
        %v1839 = vmul.f32 %v730, %v1741
        %v1840 = vmul.f32 %v731, %v1742
        %v1841 = vmul.f32 %v732, %v1743
        %v1842 = vmul.f32 %v733, %v1744
        %v1843 = vmul.f32 %v734, %v1745
        %v1844 = vmul.f32 %v735, %v1746
        %v1845 = vmul.f32 %v736, %v1747
        %v1846 = vmul.f32 %v737, %v1748
        %v1847 = vmul.f32 %v738, %v1749
        %v1848 = vmul.f32 %v739, %v1750
        %v1849 = vmul.f32 %v740, %v1751
        %v1850 = vmul.f32 %v741, %v1752
        %v1851 = vmul.f32 %v742, %v1753
        %v1852 = vmul.f32 %v743, %v1754
        %v1853 = vadd.f32 %v1757, %v1758
        %v1854 = vadd.f32 %v1853, %v1759
        %v1855 = vadd.f32 %v1854, %v1760
        %v1856 = vadd.f32 %v1855, %v1761
        %v1857 = vadd.f32 %v1856, %v1762
        %v1858 = vadd.f32 %v1857, %v1763
        %v1859 = vadd.f32 %v1858, %v1764
        %v1860 = vadd.f32 %v1859, %v1765
        %v1861 = vadd.f32 %v1860, %v1766
        %v1862 = vadd.f32 %v1861, %v1767
        %v1863 = vadd.f32 %v1862, %v1768
        %v1864 = vadd.f32 %v1863, %v1769
        %v1865 = vadd.f32 %v1864, %v1770
        %v1866 = vadd.f32 %v1865, %v1771
        %v1867 = vadd.f32 %v1866, %v1772
        %v1868 = vadd.f32 %v1867, %v1773
        %v1869 = vadd.f32 %v1868, %v1774
        %v1870 = vadd.f32 %v1869, %v1775
        %v1871 = vadd.f32 %v1870, %v1776
        %v1872 = vadd.f32 %v1871, %v1777
        %v1873 = vadd.f32 %v1872, %v1778
        %v1874 = vadd.f32 %v1873, %v1779
        %v1875 = vadd.f32 %v1874, %v1780
        %v1876 = vadd.f32 %v1875, %v1781
        %v1877 = vadd.f32 %v1876, %v1782
        %v1878 = vadd.f32 %v1877, %v1783
        %v1879 = vadd.f32 %v1878, %v1784
        %v1880 = vadd.f32 %v1879, %v1785
        %v1881 = vadd.f32 %v1880, %v1786
        %v1882 = vadd.f32 %v1881, %v1787
        %v1883 = vadd.f32 %v1882, %v1788
        %v1884 = vadd.f32 %v1883, %v1789
        %v1885 = vadd.f32 %v1884, %v1790
        %v1886 = vadd.f32 %v1885, %v1791
        %v1887 = vadd.f32 %v1886, %v1792
        %v1888 = vadd.f32 %v1887, %v1793
        %v1889 = vadd.f32 %v1888, %v1794
        %v1890 = vadd.f32 %v1889, %v1795
        %v1891 = vadd.f32 %v1890, %v1796
        %v1892 = vadd.f32 %v1891, %v1797
        %v1893 = vadd.f32 %v1892, %v1798
        %v1894 = vadd.f32 %v1893, %v1799
        %v1895 = vadd.f32 %v1894, %v1800
        %v1896 = vadd.f32 %v1895, %v1801
        %v1897 = vadd.f32 %v1896, %v1802
        %v1898 = vadd.f32 %v1897, %v1803
        %v1899 = vadd.f32 %v1898, %v1804
        %v1900 = vrot.slane %v1899, 4
        %v1901 = vadd.f32 %v1899, %v1900
        %v1902 = vrot.slane %v1901, 2
        %v1903 = vadd.f32 %v1901, %v1902
        %v1904 = vrot.slane %v1903, 1
        %v1905 = vadd.f32 %v1903, %v1904
        %v1906 = vadd.f32 %v1805, %v1806
        %v1907 = vadd.f32 %v1906, %v1807
        %v1908 = vadd.f32 %v1907, %v1808
        %v1909 = vadd.f32 %v1908, %v1809
        %v1910 = vadd.f32 %v1909, %v1810
        %v1911 = vadd.f32 %v1910, %v1811
        %v1912 = vadd.f32 %v1911, %v1812
        %v1913 = vadd.f32 %v1912, %v1813
        %v1914 = vadd.f32 %v1913, %v1814
        %v1915 = vadd.f32 %v1914, %v1815
        %v1916 = vadd.f32 %v1915, %v1816
        %v1917 = vadd.f32 %v1916, %v1817
        %v1918 = vadd.f32 %v1917, %v1818
        %v1919 = vadd.f32 %v1918, %v1819
        %v1920 = vadd.f32 %v1919, %v1820
        %v1921 = vadd.f32 %v1920, %v1821
        %v1922 = vadd.f32 %v1921, %v1822
        %v1923 = vadd.f32 %v1922, %v1823
        %v1924 = vadd.f32 %v1923, %v1824
        %v1925 = vadd.f32 %v1924, %v1825
        %v1926 = vadd.f32 %v1925, %v1826
        %v1927 = vadd.f32 %v1926, %v1827
        %v1928 = vadd.f32 %v1927, %v1828
        %v1929 = vadd.f32 %v1928, %v1829
        %v1930 = vadd.f32 %v1929, %v1830
        %v1931 = vadd.f32 %v1930, %v1831
        %v1932 = vadd.f32 %v1931, %v1832
        %v1933 = vadd.f32 %v1932, %v1833
        %v1934 = vadd.f32 %v1933, %v1834
        %v1935 = vadd.f32 %v1934, %v1835
        %v1936 = vadd.f32 %v1935, %v1836
        %v1937 = vadd.f32 %v1936, %v1837
        %v1938 = vadd.f32 %v1937, %v1838
        %v1939 = vadd.f32 %v1938, %v1839
        %v1940 = vadd.f32 %v1939, %v1840
        %v1941 = vadd.f32 %v1940, %v1841
        %v1942 = vadd.f32 %v1941, %v1842
        %v1943 = vadd.f32 %v1942, %v1843
        %v1944 = vadd.f32 %v1943, %v1844
        %v1945 = vadd.f32 %v1944, %v1845
        %v1946 = vadd.f32 %v1945, %v1846
        %v1947 = vadd.f32 %v1946, %v1847
        %v1948 = vadd.f32 %v1947, %v1848
        %v1949 = vadd.f32 %v1948, %v1849
        %v1950 = vadd.f32 %v1949, %v1850
        %v1951 = vadd.f32 %v1950, %v1851
        %v1952 = vadd.f32 %v1951, %v1852
        %v1953 = vrot.slane %v1952, 4
        %v1954 = vadd.f32 %v1952, %v1953
        %v1955 = vrot.slane %v1954, 2
        %v1956 = vadd.f32 %v1954, %v1955
        %v1957 = vrot.slane %v1956, 1
        %v1958 = vadd.f32 %v1956, %v1957
        %v1959 = vadd.f32 %v1755, %v1905
        %v1960 = vadd.f32 %v1756, %v1958
        %1961 = vst [vmem:[#allocation2 + $0x3] sm:$0x1] %v1959
        %1962 = vst [vmem:[#allocation2 + $0x13] sm:$0x1] %v1960
        %s1963 = scalar_lea.vmem %s616, 768 [#allocation4]
        %v1964 = vld [vmem:[%s1963] sm:$0xf]
        %v1965 = vld [vmem:[%s1963 + $0x4] sm:$0xf]
        %v1966 = vld [vmem:[%s1963 + $0x8] sm:$0xf]
        %v1967 = vld [vmem:[%s1963 + $0xc] sm:$0xf]
        %v1968 = vld [vmem:[%s1963 + $0x10] sm:$0xf]
        %v1969 = vld [vmem:[%s1963 + $0x14] sm:$0xf]
        %v1970 = vld [vmem:[%s1963 + $0x18] sm:$0xf]
        %v1971 = vld [vmem:[%s1963 + $0x1c] sm:$0xf]
        %v1972 = vld [vmem:[%s1963 + $0x20] sm:$0xf]
        %v1973 = vld [vmem:[%s1963 + $0x24] sm:$0xf]
        %v1974 = vld [vmem:[%s1963 + $0x28] sm:$0xf]
        %v1975 = vld [vmem:[%s1963 + $0x2c] sm:$0xf]
        %v1976 = vld [vmem:[%s1963 + $0x30] sm:$0xf]
        %v1977 = vld [vmem:[%s1963 + $0x34] sm:$0xf]
        %v1978 = vld [vmem:[%s1963 + $0x38] sm:$0xf]
        %v1979 = vld [vmem:[%s1963 + $0x3c] sm:$0xf]
        %v1980 = vld [vmem:[%s1963 + $0x40] sm:$0xf]
        %v1981 = vld [vmem:[%s1963 + $0x44] sm:$0xf]
        %v1982 = vld [vmem:[%s1963 + $0x48] sm:$0xf]
        %v1983 = vld [vmem:[%s1963 + $0x4c] sm:$0xf]
        %v1984 = vld [vmem:[%s1963 + $0x50] sm:$0xf]
        %v1985 = vld [vmem:[%s1963 + $0x54] sm:$0xf]
        %v1986 = vld [vmem:[%s1963 + $0x58] sm:$0xf]
        %v1987 = vld [vmem:[%s1963 + $0x5c] sm:$0xf]
        %v1988 = vld [vmem:[%s1963 + $0x60] sm:$0xf]
        %v1989 = vld [vmem:[%s1963 + $0x64] sm:$0xf]
        %v1990 = vld [vmem:[%s1963 + $0x68] sm:$0xf]
        %v1991 = vld [vmem:[%s1963 + $0x6c] sm:$0xf]
        %v1992 = vld [vmem:[%s1963 + $0x70] sm:$0xf]
        %v1993 = vld [vmem:[%s1963 + $0x74] sm:$0xf]
        %v1994 = vld [vmem:[%s1963 + $0x78] sm:$0xf]
        %v1995 = vld [vmem:[%s1963 + $0x7c] sm:$0xf]
        %v1996 = vld [vmem:[%s1963 + $0x80] sm:$0xf]
        %v1997 = vld [vmem:[%s1963 + $0x84] sm:$0xf]
        %v1998 = vld [vmem:[%s1963 + $0x88] sm:$0xf]
        %v1999 = vld [vmem:[%s1963 + $0x8c] sm:$0xf]
        %v2000 = vld [vmem:[%s1963 + $0x90] sm:$0xf]
        %v2001 = vld [vmem:[%s1963 + $0x94] sm:$0xf]
        %v2002 = vld [vmem:[%s1963 + $0x98] sm:$0xf]
        %v2003 = vld [vmem:[%s1963 + $0x9c] sm:$0xf]
        %v2004 = vld [vmem:[%s1963 + $0xa0] sm:$0xf]
        %v2005 = vld [vmem:[%s1963 + $0xa4] sm:$0xf]
        %v2006 = vld [vmem:[%s1963 + $0xa8] sm:$0xf]
        %v2007 = vld [vmem:[%s1963 + $0xac] sm:$0xf]
        %v2008 = vld [vmem:[%s1963 + $0xb0] sm:$0xf]
        %v2009 = vld [vmem:[%s1963 + $0xb4] sm:$0xf]
        %v2010 = vld [vmem:[%s1963 + $0xb8] sm:$0xf]
        %v2011 = vld [vmem:[%s1963 + $0xbc] sm:$0xf]
        %v2012 = vunpack.c.l.bf16 %v1964
        %v2013 = vunpack.c.l.bf16 %v1965
        %v2014 = vunpack.c.l.bf16 %v1966
        %v2015 = vunpack.c.l.bf16 %v1967
        %v2016 = vunpack.c.l.bf16 %v1968
        %v2017 = vunpack.c.l.bf16 %v1969
        %v2018 = vunpack.c.l.bf16 %v1970
        %v2019 = vunpack.c.l.bf16 %v1971
        %v2020 = vunpack.c.l.bf16 %v1972
        %v2021 = vunpack.c.l.bf16 %v1973
        %v2022 = vunpack.c.l.bf16 %v1974
        %v2023 = vunpack.c.l.bf16 %v1975
        %v2024 = vunpack.c.l.bf16 %v1976
        %v2025 = vunpack.c.l.bf16 %v1977
        %v2026 = vunpack.c.l.bf16 %v1978
        %v2027 = vunpack.c.l.bf16 %v1979
        %v2028 = vunpack.c.l.bf16 %v1980
        %v2029 = vunpack.c.l.bf16 %v1981
        %v2030 = vunpack.c.l.bf16 %v1982
        %v2031 = vunpack.c.l.bf16 %v1983
        %v2032 = vunpack.c.l.bf16 %v1984
        %v2033 = vunpack.c.l.bf16 %v1985
        %v2034 = vunpack.c.l.bf16 %v1986
        %v2035 = vunpack.c.l.bf16 %v1987
        %v2036 = vunpack.c.l.bf16 %v1988
        %v2037 = vunpack.c.l.bf16 %v1989
        %v2038 = vunpack.c.l.bf16 %v1990
        %v2039 = vunpack.c.l.bf16 %v1991
        %v2040 = vunpack.c.l.bf16 %v1992
        %v2041 = vunpack.c.l.bf16 %v1993
        %v2042 = vunpack.c.l.bf16 %v1994
        %v2043 = vunpack.c.l.bf16 %v1995
        %v2044 = vunpack.c.l.bf16 %v1996
        %v2045 = vunpack.c.l.bf16 %v1997
        %v2046 = vunpack.c.l.bf16 %v1998
        %v2047 = vunpack.c.l.bf16 %v1999
        %v2048 = vunpack.c.l.bf16 %v2000
        %v2049 = vunpack.c.l.bf16 %v2001
        %v2050 = vunpack.c.l.bf16 %v2002
        %v2051 = vunpack.c.l.bf16 %v2003
        %v2052 = vunpack.c.l.bf16 %v2004
        %v2053 = vunpack.c.l.bf16 %v2005
        %v2054 = vunpack.c.l.bf16 %v2006
        %v2055 = vunpack.c.l.bf16 %v2007
        %v2056 = vunpack.c.l.bf16 %v2008
        %v2057 = vunpack.c.l.bf16 %v2009
        %v2058 = vunpack.c.l.bf16 %v2010
        %v2059 = vunpack.c.l.bf16 %v2011
        %v2060 = vld [vmem:[#allocation2 + $0x4] sm:$0x1]
        %v2061 = vld [vmem:[#allocation2 + $0x14] sm:$0x1]
        %v2062 = vmul.f32 %v648, %v2012
        %v2063 = vmul.f32 %v649, %v2013
        %v2064 = vmul.f32 %v650, %v2014
        %v2065 = vmul.f32 %v651, %v2015
        %v2066 = vmul.f32 %v652, %v2016
        %v2067 = vmul.f32 %v653, %v2017
        %v2068 = vmul.f32 %v654, %v2018
        %v2069 = vmul.f32 %v655, %v2019
        %v2070 = vmul.f32 %v656, %v2020
        %v2071 = vmul.f32 %v657, %v2021
        %v2072 = vmul.f32 %v658, %v2022
        %v2073 = vmul.f32 %v659, %v2023
        %v2074 = vmul.f32 %v660, %v2024
        %v2075 = vmul.f32 %v661, %v2025
        %v2076 = vmul.f32 %v662, %v2026
        %v2077 = vmul.f32 %v663, %v2027
        %v2078 = vmul.f32 %v664, %v2028
        %v2079 = vmul.f32 %v665, %v2029
        %v2080 = vmul.f32 %v666, %v2030
        %v2081 = vmul.f32 %v667, %v2031
        %v2082 = vmul.f32 %v668, %v2032
        %v2083 = vmul.f32 %v669, %v2033
        %v2084 = vmul.f32 %v670, %v2034
        %v2085 = vmul.f32 %v671, %v2035
        %v2086 = vmul.f32 %v672, %v2036
        %v2087 = vmul.f32 %v673, %v2037
        %v2088 = vmul.f32 %v674, %v2038
        %v2089 = vmul.f32 %v675, %v2039
        %v2090 = vmul.f32 %v676, %v2040
        %v2091 = vmul.f32 %v677, %v2041
        %v2092 = vmul.f32 %v678, %v2042
        %v2093 = vmul.f32 %v679, %v2043
        %v2094 = vmul.f32 %v680, %v2044
        %v2095 = vmul.f32 %v681, %v2045
        %v2096 = vmul.f32 %v682, %v2046
        %v2097 = vmul.f32 %v683, %v2047
        %v2098 = vmul.f32 %v684, %v2048
        %v2099 = vmul.f32 %v685, %v2049
        %v2100 = vmul.f32 %v686, %v2050
        %v2101 = vmul.f32 %v687, %v2051
        %v2102 = vmul.f32 %v688, %v2052
        %v2103 = vmul.f32 %v689, %v2053
        %v2104 = vmul.f32 %v690, %v2054
        %v2105 = vmul.f32 %v691, %v2055
        %v2106 = vmul.f32 %v692, %v2056
        %v2107 = vmul.f32 %v693, %v2057
        %v2108 = vmul.f32 %v694, %v2058
        %v2109 = vmul.f32 %v695, %v2059
        %v2110 = vmul.f32 %v696, %v2012
        %v2111 = vmul.f32 %v697, %v2013
        %v2112 = vmul.f32 %v698, %v2014
        %v2113 = vmul.f32 %v699, %v2015
        %v2114 = vmul.f32 %v700, %v2016
        %v2115 = vmul.f32 %v701, %v2017
        %v2116 = vmul.f32 %v702, %v2018
        %v2117 = vmul.f32 %v703, %v2019
        %v2118 = vmul.f32 %v704, %v2020
        %v2119 = vmul.f32 %v705, %v2021
        %v2120 = vmul.f32 %v706, %v2022
        %v2121 = vmul.f32 %v707, %v2023
        %v2122 = vmul.f32 %v708, %v2024
        %v2123 = vmul.f32 %v709, %v2025
        %v2124 = vmul.f32 %v710, %v2026
        %v2125 = vmul.f32 %v711, %v2027
        %v2126 = vmul.f32 %v712, %v2028
        %v2127 = vmul.f32 %v713, %v2029
        %v2128 = vmul.f32 %v714, %v2030
        %v2129 = vmul.f32 %v715, %v2031
        %v2130 = vmul.f32 %v716, %v2032
        %v2131 = vmul.f32 %v717, %v2033
        %v2132 = vmul.f32 %v718, %v2034
        %v2133 = vmul.f32 %v719, %v2035
        %v2134 = vmul.f32 %v720, %v2036
        %v2135 = vmul.f32 %v721, %v2037
        %v2136 = vmul.f32 %v722, %v2038
        %v2137 = vmul.f32 %v723, %v2039
        %v2138 = vmul.f32 %v724, %v2040
        %v2139 = vmul.f32 %v725, %v2041
        %v2140 = vmul.f32 %v726, %v2042
        %v2141 = vmul.f32 %v727, %v2043
        %v2142 = vmul.f32 %v728, %v2044
        %v2143 = vmul.f32 %v729, %v2045
        %v2144 = vmul.f32 %v730, %v2046
        %v2145 = vmul.f32 %v731, %v2047
        %v2146 = vmul.f32 %v732, %v2048
        %v2147 = vmul.f32 %v733, %v2049
        %v2148 = vmul.f32 %v734, %v2050
        %v2149 = vmul.f32 %v735, %v2051
        %v2150 = vmul.f32 %v736, %v2052
        %v2151 = vmul.f32 %v737, %v2053
        %v2152 = vmul.f32 %v738, %v2054
        %v2153 = vmul.f32 %v739, %v2055
        %v2154 = vmul.f32 %v740, %v2056
        %v2155 = vmul.f32 %v741, %v2057
        %v2156 = vmul.f32 %v742, %v2058
        %v2157 = vmul.f32 %v743, %v2059
        %v2158 = vadd.f32 %v2062, %v2063
        %v2159 = vadd.f32 %v2158, %v2064
        %v2160 = vadd.f32 %v2159, %v2065
        %v2161 = vadd.f32 %v2160, %v2066
        %v2162 = vadd.f32 %v2161, %v2067
        %v2163 = vadd.f32 %v2162, %v2068
        %v2164 = vadd.f32 %v2163, %v2069
        %v2165 = vadd.f32 %v2164, %v2070
        %v2166 = vadd.f32 %v2165, %v2071
        %v2167 = vadd.f32 %v2166, %v2072
        %v2168 = vadd.f32 %v2167, %v2073
        %v2169 = vadd.f32 %v2168, %v2074
        %v2170 = vadd.f32 %v2169, %v2075
        %v2171 = vadd.f32 %v2170, %v2076
        %v2172 = vadd.f32 %v2171, %v2077
        %v2173 = vadd.f32 %v2172, %v2078
        %v2174 = vadd.f32 %v2173, %v2079
        %v2175 = vadd.f32 %v2174, %v2080
        %v2176 = vadd.f32 %v2175, %v2081
        %v2177 = vadd.f32 %v2176, %v2082
        %v2178 = vadd.f32 %v2177, %v2083
        %v2179 = vadd.f32 %v2178, %v2084
        %v2180 = vadd.f32 %v2179, %v2085
        %v2181 = vadd.f32 %v2180, %v2086
        %v2182 = vadd.f32 %v2181, %v2087
        %v2183 = vadd.f32 %v2182, %v2088
        %v2184 = vadd.f32 %v2183, %v2089
        %v2185 = vadd.f32 %v2184, %v2090
        %v2186 = vadd.f32 %v2185, %v2091
        %v2187 = vadd.f32 %v2186, %v2092
        %v2188 = vadd.f32 %v2187, %v2093
        %v2189 = vadd.f32 %v2188, %v2094
        %v2190 = vadd.f32 %v2189, %v2095
        %v2191 = vadd.f32 %v2190, %v2096
        %v2192 = vadd.f32 %v2191, %v2097
        %v2193 = vadd.f32 %v2192, %v2098
        %v2194 = vadd.f32 %v2193, %v2099
        %v2195 = vadd.f32 %v2194, %v2100
        %v2196 = vadd.f32 %v2195, %v2101
        %v2197 = vadd.f32 %v2196, %v2102
        %v2198 = vadd.f32 %v2197, %v2103
        %v2199 = vadd.f32 %v2198, %v2104
        %v2200 = vadd.f32 %v2199, %v2105
        %v2201 = vadd.f32 %v2200, %v2106
        %v2202 = vadd.f32 %v2201, %v2107
        %v2203 = vadd.f32 %v2202, %v2108
        %v2204 = vadd.f32 %v2203, %v2109
        %v2205 = vrot.slane %v2204, 4
        %v2206 = vadd.f32 %v2204, %v2205
        %v2207 = vrot.slane %v2206, 2
        %v2208 = vadd.f32 %v2206, %v2207
        %v2209 = vrot.slane %v2208, 1
        %v2210 = vadd.f32 %v2208, %v2209
        %v2211 = vadd.f32 %v2110, %v2111
        %v2212 = vadd.f32 %v2211, %v2112
        %v2213 = vadd.f32 %v2212, %v2113
        %v2214 = vadd.f32 %v2213, %v2114
        %v2215 = vadd.f32 %v2214, %v2115
        %v2216 = vadd.f32 %v2215, %v2116
        %v2217 = vadd.f32 %v2216, %v2117
        %v2218 = vadd.f32 %v2217, %v2118
        %v2219 = vadd.f32 %v2218, %v2119
        %v2220 = vadd.f32 %v2219, %v2120
        %v2221 = vadd.f32 %v2220, %v2121
        %v2222 = vadd.f32 %v2221, %v2122
        %v2223 = vadd.f32 %v2222, %v2123
        %v2224 = vadd.f32 %v2223, %v2124
        %v2225 = vadd.f32 %v2224, %v2125
        %v2226 = vadd.f32 %v2225, %v2126
        %v2227 = vadd.f32 %v2226, %v2127
        %v2228 = vadd.f32 %v2227, %v2128
        %v2229 = vadd.f32 %v2228, %v2129
        %v2230 = vadd.f32 %v2229, %v2130
        %v2231 = vadd.f32 %v2230, %v2131
        %v2232 = vadd.f32 %v2231, %v2132
        %v2233 = vadd.f32 %v2232, %v2133
        %v2234 = vadd.f32 %v2233, %v2134
        %v2235 = vadd.f32 %v2234, %v2135
        %v2236 = vadd.f32 %v2235, %v2136
        %v2237 = vadd.f32 %v2236, %v2137
        %v2238 = vadd.f32 %v2237, %v2138
        %v2239 = vadd.f32 %v2238, %v2139
        %v2240 = vadd.f32 %v2239, %v2140
        %v2241 = vadd.f32 %v2240, %v2141
        %v2242 = vadd.f32 %v2241, %v2142
        %v2243 = vadd.f32 %v2242, %v2143
        %v2244 = vadd.f32 %v2243, %v2144
        %v2245 = vadd.f32 %v2244, %v2145
        %v2246 = vadd.f32 %v2245, %v2146
        %v2247 = vadd.f32 %v2246, %v2147
        %v2248 = vadd.f32 %v2247, %v2148
        %v2249 = vadd.f32 %v2248, %v2149
        %v2250 = vadd.f32 %v2249, %v2150
        %v2251 = vadd.f32 %v2250, %v2151
        %v2252 = vadd.f32 %v2251, %v2152
        %v2253 = vadd.f32 %v2252, %v2153
        %v2254 = vadd.f32 %v2253, %v2154
        %v2255 = vadd.f32 %v2254, %v2155
        %v2256 = vadd.f32 %v2255, %v2156
        %v2257 = vadd.f32 %v2256, %v2157
        %v2258 = vrot.slane %v2257, 4
        %v2259 = vadd.f32 %v2257, %v2258
        %v2260 = vrot.slane %v2259, 2
        %v2261 = vadd.f32 %v2259, %v2260
        %v2262 = vrot.slane %v2261, 1
        %v2263 = vadd.f32 %v2261, %v2262
        %v2264 = vadd.f32 %v2060, %v2210
        %v2265 = vadd.f32 %v2061, %v2263
        %2266 = vst [vmem:[#allocation2 + $0x4] sm:$0x1] %v2264
        %2267 = vst [vmem:[#allocation2 + $0x14] sm:$0x1] %v2265
        %s2268 = scalar_lea.vmem %s616, 960 [#allocation4]
        %v2269 = vld [vmem:[%s2268] sm:$0xf]
        %v2270 = vld [vmem:[%s2268 + $0x4] sm:$0xf]
        %v2271 = vld [vmem:[%s2268 + $0x8] sm:$0xf]
        %v2272 = vld [vmem:[%s2268 + $0xc] sm:$0xf]
        %v2273 = vld [vmem:[%s2268 + $0x10] sm:$0xf]
        %v2274 = vld [vmem:[%s2268 + $0x14] sm:$0xf]
        %v2275 = vld [vmem:[%s2268 + $0x18] sm:$0xf]
        %v2276 = vld [vmem:[%s2268 + $0x1c] sm:$0xf]
        %v2277 = vld [vmem:[%s2268 + $0x20] sm:$0xf]
        %v2278 = vld [vmem:[%s2268 + $0x24] sm:$0xf]
        %v2279 = vld [vmem:[%s2268 + $0x28] sm:$0xf]
        %v2280 = vld [vmem:[%s2268 + $0x2c] sm:$0xf]
        %v2281 = vld [vmem:[%s2268 + $0x30] sm:$0xf]
        %v2282 = vld [vmem:[%s2268 + $0x34] sm:$0xf]
        %v2283 = vld [vmem:[%s2268 + $0x38] sm:$0xf]
        %v2284 = vld [vmem:[%s2268 + $0x3c] sm:$0xf]
        %v2285 = vld [vmem:[%s2268 + $0x40] sm:$0xf]
        %v2286 = vld [vmem:[%s2268 + $0x44] sm:$0xf]
        %v2287 = vld [vmem:[%s2268 + $0x48] sm:$0xf]
        %v2288 = vld [vmem:[%s2268 + $0x4c] sm:$0xf]
        %v2289 = vld [vmem:[%s2268 + $0x50] sm:$0xf]
        %v2290 = vld [vmem:[%s2268 + $0x54] sm:$0xf]
        %v2291 = vld [vmem:[%s2268 + $0x58] sm:$0xf]
        %v2292 = vld [vmem:[%s2268 + $0x5c] sm:$0xf]
        %v2293 = vld [vmem:[%s2268 + $0x60] sm:$0xf]
        %v2294 = vld [vmem:[%s2268 + $0x64] sm:$0xf]
        %v2295 = vld [vmem:[%s2268 + $0x68] sm:$0xf]
        %v2296 = vld [vmem:[%s2268 + $0x6c] sm:$0xf]
        %v2297 = vld [vmem:[%s2268 + $0x70] sm:$0xf]
        %v2298 = vld [vmem:[%s2268 + $0x74] sm:$0xf]
        %v2299 = vld [vmem:[%s2268 + $0x78] sm:$0xf]
        %v2300 = vld [vmem:[%s2268 + $0x7c] sm:$0xf]
        %v2301 = vld [vmem:[%s2268 + $0x80] sm:$0xf]
        %v2302 = vld [vmem:[%s2268 + $0x84] sm:$0xf]
        %v2303 = vld [vmem:[%s2268 + $0x88] sm:$0xf]
        %v2304 = vld [vmem:[%s2268 + $0x8c] sm:$0xf]
        %v2305 = vld [vmem:[%s2268 + $0x90] sm:$0xf]
        %v2306 = vld [vmem:[%s2268 + $0x94] sm:$0xf]
        %v2307 = vld [vmem:[%s2268 + $0x98] sm:$0xf]
        %v2308 = vld [vmem:[%s2268 + $0x9c] sm:$0xf]
        %v2309 = vld [vmem:[%s2268 + $0xa0] sm:$0xf]
        %v2310 = vld [vmem:[%s2268 + $0xa4] sm:$0xf]
        %v2311 = vld [vmem:[%s2268 + $0xa8] sm:$0xf]
        %v2312 = vld [vmem:[%s2268 + $0xac] sm:$0xf]
        %v2313 = vld [vmem:[%s2268 + $0xb0] sm:$0xf]
        %v2314 = vld [vmem:[%s2268 + $0xb4] sm:$0xf]
        %v2315 = vld [vmem:[%s2268 + $0xb8] sm:$0xf]
        %v2316 = vld [vmem:[%s2268 + $0xbc] sm:$0xf]
        %v2317 = vunpack.c.l.bf16 %v2269
        %v2318 = vunpack.c.l.bf16 %v2270
        %v2319 = vunpack.c.l.bf16 %v2271
        %v2320 = vunpack.c.l.bf16 %v2272
        %v2321 = vunpack.c.l.bf16 %v2273
        %v2322 = vunpack.c.l.bf16 %v2274
        %v2323 = vunpack.c.l.bf16 %v2275
        %v2324 = vunpack.c.l.bf16 %v2276
        %v2325 = vunpack.c.l.bf16 %v2277
        %v2326 = vunpack.c.l.bf16 %v2278
        %v2327 = vunpack.c.l.bf16 %v2279
        %v2328 = vunpack.c.l.bf16 %v2280
        %v2329 = vunpack.c.l.bf16 %v2281
        %v2330 = vunpack.c.l.bf16 %v2282
        %v2331 = vunpack.c.l.bf16 %v2283
        %v2332 = vunpack.c.l.bf16 %v2284
        %v2333 = vunpack.c.l.bf16 %v2285
        %v2334 = vunpack.c.l.bf16 %v2286
        %v2335 = vunpack.c.l.bf16 %v2287
        %v2336 = vunpack.c.l.bf16 %v2288
        %v2337 = vunpack.c.l.bf16 %v2289
        %v2338 = vunpack.c.l.bf16 %v2290
        %v2339 = vunpack.c.l.bf16 %v2291
        %v2340 = vunpack.c.l.bf16 %v2292
        %v2341 = vunpack.c.l.bf16 %v2293
        %v2342 = vunpack.c.l.bf16 %v2294
        %v2343 = vunpack.c.l.bf16 %v2295
        %v2344 = vunpack.c.l.bf16 %v2296
        %v2345 = vunpack.c.l.bf16 %v2297
        %v2346 = vunpack.c.l.bf16 %v2298
        %v2347 = vunpack.c.l.bf16 %v2299
        %v2348 = vunpack.c.l.bf16 %v2300
        %v2349 = vunpack.c.l.bf16 %v2301
        %v2350 = vunpack.c.l.bf16 %v2302
        %v2351 = vunpack.c.l.bf16 %v2303
        %v2352 = vunpack.c.l.bf16 %v2304
        %v2353 = vunpack.c.l.bf16 %v2305
        %v2354 = vunpack.c.l.bf16 %v2306
        %v2355 = vunpack.c.l.bf16 %v2307
        %v2356 = vunpack.c.l.bf16 %v2308
        %v2357 = vunpack.c.l.bf16 %v2309
        %v2358 = vunpack.c.l.bf16 %v2310
        %v2359 = vunpack.c.l.bf16 %v2311
        %v2360 = vunpack.c.l.bf16 %v2312
        %v2361 = vunpack.c.l.bf16 %v2313
        %v2362 = vunpack.c.l.bf16 %v2314
        %v2363 = vunpack.c.l.bf16 %v2315
        %v2364 = vunpack.c.l.bf16 %v2316
        %v2365 = vld [vmem:[#allocation2 + $0x5] sm:$0x1]
        %v2366 = vld [vmem:[#allocation2 + $0x15] sm:$0x1]
        %v2367 = vmul.f32 %v648, %v2317
        %v2368 = vmul.f32 %v649, %v2318
        %v2369 = vmul.f32 %v650, %v2319
        %v2370 = vmul.f32 %v651, %v2320
        %v2371 = vmul.f32 %v652, %v2321
        %v2372 = vmul.f32 %v653, %v2322
        %v2373 = vmul.f32 %v654, %v2323
        %v2374 = vmul.f32 %v655, %v2324
        %v2375 = vmul.f32 %v656, %v2325
        %v2376 = vmul.f32 %v657, %v2326
        %v2377 = vmul.f32 %v658, %v2327
        %v2378 = vmul.f32 %v659, %v2328
        %v2379 = vmul.f32 %v660, %v2329
        %v2380 = vmul.f32 %v661, %v2330
        %v2381 = vmul.f32 %v662, %v2331
        %v2382 = vmul.f32 %v663, %v2332
        %v2383 = vmul.f32 %v664, %v2333
        %v2384 = vmul.f32 %v665, %v2334
        %v2385 = vmul.f32 %v666, %v2335
        %v2386 = vmul.f32 %v667, %v2336
        %v2387 = vmul.f32 %v668, %v2337
        %v2388 = vmul.f32 %v669, %v2338
        %v2389 = vmul.f32 %v670, %v2339
        %v2390 = vmul.f32 %v671, %v2340
        %v2391 = vmul.f32 %v672, %v2341
        %v2392 = vmul.f32 %v673, %v2342
        %v2393 = vmul.f32 %v674, %v2343
        %v2394 = vmul.f32 %v675, %v2344
        %v2395 = vmul.f32 %v676, %v2345
        %v2396 = vmul.f32 %v677, %v2346
        %v2397 = vmul.f32 %v678, %v2347
        %v2398 = vmul.f32 %v679, %v2348
        %v2399 = vmul.f32 %v680, %v2349
        %v2400 = vmul.f32 %v681, %v2350
        %v2401 = vmul.f32 %v682, %v2351
        %v2402 = vmul.f32 %v683, %v2352
        %v2403 = vmul.f32 %v684, %v2353
        %v2404 = vmul.f32 %v685, %v2354
        %v2405 = vmul.f32 %v686, %v2355
        %v2406 = vmul.f32 %v687, %v2356
        %v2407 = vmul.f32 %v688, %v2357
        %v2408 = vmul.f32 %v689, %v2358
        %v2409 = vmul.f32 %v690, %v2359
        %v2410 = vmul.f32 %v691, %v2360
        %v2411 = vmul.f32 %v692, %v2361
        %v2412 = vmul.f32 %v693, %v2362
        %v2413 = vmul.f32 %v694, %v2363
        %v2414 = vmul.f32 %v695, %v2364
        %v2415 = vmul.f32 %v696, %v2317
        %v2416 = vmul.f32 %v697, %v2318
        %v2417 = vmul.f32 %v698, %v2319
        %v2418 = vmul.f32 %v699, %v2320
        %v2419 = vmul.f32 %v700, %v2321
        %v2420 = vmul.f32 %v701, %v2322
        %v2421 = vmul.f32 %v702, %v2323
        %v2422 = vmul.f32 %v703, %v2324
        %v2423 = vmul.f32 %v704, %v2325
        %v2424 = vmul.f32 %v705, %v2326
        %v2425 = vmul.f32 %v706, %v2327
        %v2426 = vmul.f32 %v707, %v2328
        %v2427 = vmul.f32 %v708, %v2329
        %v2428 = vmul.f32 %v709, %v2330
        %v2429 = vmul.f32 %v710, %v2331
        %v2430 = vmul.f32 %v711, %v2332
        %v2431 = vmul.f32 %v712, %v2333
        %v2432 = vmul.f32 %v713, %v2334
        %v2433 = vmul.f32 %v714, %v2335
        %v2434 = vmul.f32 %v715, %v2336
        %v2435 = vmul.f32 %v716, %v2337
        %v2436 = vmul.f32 %v717, %v2338
        %v2437 = vmul.f32 %v718, %v2339
        %v2438 = vmul.f32 %v719, %v2340
        %v2439 = vmul.f32 %v720, %v2341
        %v2440 = vmul.f32 %v721, %v2342
        %v2441 = vmul.f32 %v722, %v2343
        %v2442 = vmul.f32 %v723, %v2344
        %v2443 = vmul.f32 %v724, %v2345
        %v2444 = vmul.f32 %v725, %v2346
        %v2445 = vmul.f32 %v726, %v2347
        %v2446 = vmul.f32 %v727, %v2348
        %v2447 = vmul.f32 %v728, %v2349
        %v2448 = vmul.f32 %v729, %v2350
        %v2449 = vmul.f32 %v730, %v2351
        %v2450 = vmul.f32 %v731, %v2352
        %v2451 = vmul.f32 %v732, %v2353
        %v2452 = vmul.f32 %v733, %v2354
        %v2453 = vmul.f32 %v734, %v2355
        %v2454 = vmul.f32 %v735, %v2356
        %v2455 = vmul.f32 %v736, %v2357
        %v2456 = vmul.f32 %v737, %v2358
        %v2457 = vmul.f32 %v738, %v2359
        %v2458 = vmul.f32 %v739, %v2360
        %v2459 = vmul.f32 %v740, %v2361
        %v2460 = vmul.f32 %v741, %v2362
        %v2461 = vmul.f32 %v742, %v2363
        %v2462 = vmul.f32 %v743, %v2364
        %v2463 = vadd.f32 %v2367, %v2368
        %v2464 = vadd.f32 %v2463, %v2369
        %v2465 = vadd.f32 %v2464, %v2370
        %v2466 = vadd.f32 %v2465, %v2371
        %v2467 = vadd.f32 %v2466, %v2372
        %v2468 = vadd.f32 %v2467, %v2373
        %v2469 = vadd.f32 %v2468, %v2374
        %v2470 = vadd.f32 %v2469, %v2375
        %v2471 = vadd.f32 %v2470, %v2376
        %v2472 = vadd.f32 %v2471, %v2377
        %v2473 = vadd.f32 %v2472, %v2378
        %v2474 = vadd.f32 %v2473, %v2379
        %v2475 = vadd.f32 %v2474, %v2380
        %v2476 = vadd.f32 %v2475, %v2381
        %v2477 = vadd.f32 %v2476, %v2382
        %v2478 = vadd.f32 %v2477, %v2383
        %v2479 = vadd.f32 %v2478, %v2384
        %v2480 = vadd.f32 %v2479, %v2385
        %v2481 = vadd.f32 %v2480, %v2386
        %v2482 = vadd.f32 %v2481, %v2387
        %v2483 = vadd.f32 %v2482, %v2388
        %v2484 = vadd.f32 %v2483, %v2389
        %v2485 = vadd.f32 %v2484, %v2390
        %v2486 = vadd.f32 %v2485, %v2391
        %v2487 = vadd.f32 %v2486, %v2392
        %v2488 = vadd.f32 %v2487, %v2393
        %v2489 = vadd.f32 %v2488, %v2394
        %v2490 = vadd.f32 %v2489, %v2395
        %v2491 = vadd.f32 %v2490, %v2396
        %v2492 = vadd.f32 %v2491, %v2397
        %v2493 = vadd.f32 %v2492, %v2398
        %v2494 = vadd.f32 %v2493, %v2399
        %v2495 = vadd.f32 %v2494, %v2400
        %v2496 = vadd.f32 %v2495, %v2401
        %v2497 = vadd.f32 %v2496, %v2402
        %v2498 = vadd.f32 %v2497, %v2403
        %v2499 = vadd.f32 %v2498, %v2404
        %v2500 = vadd.f32 %v2499, %v2405
        %v2501 = vadd.f32 %v2500, %v2406
        %v2502 = vadd.f32 %v2501, %v2407
        %v2503 = vadd.f32 %v2502, %v2408
        %v2504 = vadd.f32 %v2503, %v2409
        %v2505 = vadd.f32 %v2504, %v2410
        %v2506 = vadd.f32 %v2505, %v2411
        %v2507 = vadd.f32 %v2506, %v2412
        %v2508 = vadd.f32 %v2507, %v2413
        %v2509 = vadd.f32 %v2508, %v2414
        %v2510 = vrot.slane %v2509, 4
        %v2511 = vadd.f32 %v2509, %v2510
        %v2512 = vrot.slane %v2511, 2
        %v2513 = vadd.f32 %v2511, %v2512
        %v2514 = vrot.slane %v2513, 1
        %v2515 = vadd.f32 %v2513, %v2514
        %v2516 = vadd.f32 %v2415, %v2416
        %v2517 = vadd.f32 %v2516, %v2417
        %v2518 = vadd.f32 %v2517, %v2418
        %v2519 = vadd.f32 %v2518, %v2419
        %v2520 = vadd.f32 %v2519, %v2420
        %v2521 = vadd.f32 %v2520, %v2421
        %v2522 = vadd.f32 %v2521, %v2422
        %v2523 = vadd.f32 %v2522, %v2423
        %v2524 = vadd.f32 %v2523, %v2424
        %v2525 = vadd.f32 %v2524, %v2425
        %v2526 = vadd.f32 %v2525, %v2426
        %v2527 = vadd.f32 %v2526, %v2427
        %v2528 = vadd.f32 %v2527, %v2428
        %v2529 = vadd.f32 %v2528, %v2429
        %v2530 = vadd.f32 %v2529, %v2430
        %v2531 = vadd.f32 %v2530, %v2431
        %v2532 = vadd.f32 %v2531, %v2432
        %v2533 = vadd.f32 %v2532, %v2433
        %v2534 = vadd.f32 %v2533, %v2434
        %v2535 = vadd.f32 %v2534, %v2435
        %v2536 = vadd.f32 %v2535, %v2436
        %v2537 = vadd.f32 %v2536, %v2437
        %v2538 = vadd.f32 %v2537, %v2438
        %v2539 = vadd.f32 %v2538, %v2439
        %v2540 = vadd.f32 %v2539, %v2440
        %v2541 = vadd.f32 %v2540, %v2441
        %v2542 = vadd.f32 %v2541, %v2442
        %v2543 = vadd.f32 %v2542, %v2443
        %v2544 = vadd.f32 %v2543, %v2444
        %v2545 = vadd.f32 %v2544, %v2445
        %v2546 = vadd.f32 %v2545, %v2446
        %v2547 = vadd.f32 %v2546, %v2447
        %v2548 = vadd.f32 %v2547, %v2448
        %v2549 = vadd.f32 %v2548, %v2449
        %v2550 = vadd.f32 %v2549, %v2450
        %v2551 = vadd.f32 %v2550, %v2451
        %v2552 = vadd.f32 %v2551, %v2452
        %v2553 = vadd.f32 %v2552, %v2453
        %v2554 = vadd.f32 %v2553, %v2454
        %v2555 = vadd.f32 %v2554, %v2455
        %v2556 = vadd.f32 %v2555, %v2456
        %v2557 = vadd.f32 %v2556, %v2457
        %v2558 = vadd.f32 %v2557, %v2458
        %v2559 = vadd.f32 %v2558, %v2459
        %v2560 = vadd.f32 %v2559, %v2460
        %v2561 = vadd.f32 %v2560, %v2461
        %v2562 = vadd.f32 %v2561, %v2462
        %v2563 = vrot.slane %v2562, 4
        %v2564 = vadd.f32 %v2562, %v2563
        %v2565 = vrot.slane %v2564, 2
        %v2566 = vadd.f32 %v2564, %v2565
        %v2567 = vrot.slane %v2566, 1
        %v2568 = vadd.f32 %v2566, %v2567
        %v2569 = vadd.f32 %v2365, %v2515
        %v2570 = vadd.f32 %v2366, %v2568
        %2571 = vst [vmem:[#allocation2 + $0x5] sm:$0x1] %v2569
        %2572 = vst [vmem:[#allocation2 + $0x15] sm:$0x1] %v2570
        %s2573 = scalar_lea.vmem %s616, 1152 [#allocation4]
        %v2574 = vld [vmem:[%s2573] sm:$0xf]
        %v2575 = vld [vmem:[%s2573 + $0x4] sm:$0xf]
        %v2576 = vld [vmem:[%s2573 + $0x8] sm:$0xf]
        %v2577 = vld [vmem:[%s2573 + $0xc] sm:$0xf]
        %v2578 = vld [vmem:[%s2573 + $0x10] sm:$0xf]
        %v2579 = vld [vmem:[%s2573 + $0x14] sm:$0xf]
        %v2580 = vld [vmem:[%s2573 + $0x18] sm:$0xf]
        %v2581 = vld [vmem:[%s2573 + $0x1c] sm:$0xf]
        %v2582 = vld [vmem:[%s2573 + $0x20] sm:$0xf]
        %v2583 = vld [vmem:[%s2573 + $0x24] sm:$0xf]
        %v2584 = vld [vmem:[%s2573 + $0x28] sm:$0xf]
        %v2585 = vld [vmem:[%s2573 + $0x2c] sm:$0xf]
        %v2586 = vld [vmem:[%s2573 + $0x30] sm:$0xf]
        %v2587 = vld [vmem:[%s2573 + $0x34] sm:$0xf]
        %v2588 = vld [vmem:[%s2573 + $0x38] sm:$0xf]
        %v2589 = vld [vmem:[%s2573 + $0x3c] sm:$0xf]
        %v2590 = vld [vmem:[%s2573 + $0x40] sm:$0xf]
        %v2591 = vld [vmem:[%s2573 + $0x44] sm:$0xf]
        %v2592 = vld [vmem:[%s2573 + $0x48] sm:$0xf]
        %v2593 = vld [vmem:[%s2573 + $0x4c] sm:$0xf]
        %v2594 = vld [vmem:[%s2573 + $0x50] sm:$0xf]
        %v2595 = vld [vmem:[%s2573 + $0x54] sm:$0xf]
        %v2596 = vld [vmem:[%s2573 + $0x58] sm:$0xf]
        %v2597 = vld [vmem:[%s2573 + $0x5c] sm:$0xf]
        %v2598 = vld [vmem:[%s2573 + $0x60] sm:$0xf]
        %v2599 = vld [vmem:[%s2573 + $0x64] sm:$0xf]
        %v2600 = vld [vmem:[%s2573 + $0x68] sm:$0xf]
        %v2601 = vld [vmem:[%s2573 + $0x6c] sm:$0xf]
        %v2602 = vld [vmem:[%s2573 + $0x70] sm:$0xf]
        %v2603 = vld [vmem:[%s2573 + $0x74] sm:$0xf]
        %v2604 = vld [vmem:[%s2573 + $0x78] sm:$0xf]
        %v2605 = vld [vmem:[%s2573 + $0x7c] sm:$0xf]
        %v2606 = vld [vmem:[%s2573 + $0x80] sm:$0xf]
        %v2607 = vld [vmem:[%s2573 + $0x84] sm:$0xf]
        %v2608 = vld [vmem:[%s2573 + $0x88] sm:$0xf]
        %v2609 = vld [vmem:[%s2573 + $0x8c] sm:$0xf]
        %v2610 = vld [vmem:[%s2573 + $0x90] sm:$0xf]
        %v2611 = vld [vmem:[%s2573 + $0x94] sm:$0xf]
        %v2612 = vld [vmem:[%s2573 + $0x98] sm:$0xf]
        %v2613 = vld [vmem:[%s2573 + $0x9c] sm:$0xf]
        %v2614 = vld [vmem:[%s2573 + $0xa0] sm:$0xf]
        %v2615 = vld [vmem:[%s2573 + $0xa4] sm:$0xf]
        %v2616 = vld [vmem:[%s2573 + $0xa8] sm:$0xf]
        %v2617 = vld [vmem:[%s2573 + $0xac] sm:$0xf]
        %v2618 = vld [vmem:[%s2573 + $0xb0] sm:$0xf]
        %v2619 = vld [vmem:[%s2573 + $0xb4] sm:$0xf]
        %v2620 = vld [vmem:[%s2573 + $0xb8] sm:$0xf]
        %v2621 = vld [vmem:[%s2573 + $0xbc] sm:$0xf]
        %v2622 = vunpack.c.l.bf16 %v2574
        %v2623 = vunpack.c.l.bf16 %v2575
        %v2624 = vunpack.c.l.bf16 %v2576
        %v2625 = vunpack.c.l.bf16 %v2577
        %v2626 = vunpack.c.l.bf16 %v2578
        %v2627 = vunpack.c.l.bf16 %v2579
        %v2628 = vunpack.c.l.bf16 %v2580
        %v2629 = vunpack.c.l.bf16 %v2581
        %v2630 = vunpack.c.l.bf16 %v2582
        %v2631 = vunpack.c.l.bf16 %v2583
        %v2632 = vunpack.c.l.bf16 %v2584
        %v2633 = vunpack.c.l.bf16 %v2585
        %v2634 = vunpack.c.l.bf16 %v2586
        %v2635 = vunpack.c.l.bf16 %v2587
        %v2636 = vunpack.c.l.bf16 %v2588
        %v2637 = vunpack.c.l.bf16 %v2589
        %v2638 = vunpack.c.l.bf16 %v2590
        %v2639 = vunpack.c.l.bf16 %v2591
        %v2640 = vunpack.c.l.bf16 %v2592
        %v2641 = vunpack.c.l.bf16 %v2593
        %v2642 = vunpack.c.l.bf16 %v2594
        %v2643 = vunpack.c.l.bf16 %v2595
        %v2644 = vunpack.c.l.bf16 %v2596
        %v2645 = vunpack.c.l.bf16 %v2597
        %v2646 = vunpack.c.l.bf16 %v2598
        %v2647 = vunpack.c.l.bf16 %v2599
        %v2648 = vunpack.c.l.bf16 %v2600
        %v2649 = vunpack.c.l.bf16 %v2601
        %v2650 = vunpack.c.l.bf16 %v2602
        %v2651 = vunpack.c.l.bf16 %v2603
        %v2652 = vunpack.c.l.bf16 %v2604
        %v2653 = vunpack.c.l.bf16 %v2605
        %v2654 = vunpack.c.l.bf16 %v2606
        %v2655 = vunpack.c.l.bf16 %v2607
        %v2656 = vunpack.c.l.bf16 %v2608
        %v2657 = vunpack.c.l.bf16 %v2609
        %v2658 = vunpack.c.l.bf16 %v2610
        %v2659 = vunpack.c.l.bf16 %v2611
        %v2660 = vunpack.c.l.bf16 %v2612
        %v2661 = vunpack.c.l.bf16 %v2613
        %v2662 = vunpack.c.l.bf16 %v2614
        %v2663 = vunpack.c.l.bf16 %v2615
        %v2664 = vunpack.c.l.bf16 %v2616
        %v2665 = vunpack.c.l.bf16 %v2617
        %v2666 = vunpack.c.l.bf16 %v2618
        %v2667 = vunpack.c.l.bf16 %v2619
        %v2668 = vunpack.c.l.bf16 %v2620
        %v2669 = vunpack.c.l.bf16 %v2621
        %v2670 = vld [vmem:[#allocation2 + $0x6] sm:$0x1]
        %v2671 = vld [vmem:[#allocation2 + $0x16] sm:$0x1]
        %v2672 = vmul.f32 %v648, %v2622
        %v2673 = vmul.f32 %v649, %v2623
        %v2674 = vmul.f32 %v650, %v2624
        %v2675 = vmul.f32 %v651, %v2625
        %v2676 = vmul.f32 %v652, %v2626
        %v2677 = vmul.f32 %v653, %v2627
        %v2678 = vmul.f32 %v654, %v2628
        %v2679 = vmul.f32 %v655, %v2629
        %v2680 = vmul.f32 %v656, %v2630
        %v2681 = vmul.f32 %v657, %v2631
        %v2682 = vmul.f32 %v658, %v2632
        %v2683 = vmul.f32 %v659, %v2633
        %v2684 = vmul.f32 %v660, %v2634
        %v2685 = vmul.f32 %v661, %v2635
        %v2686 = vmul.f32 %v662, %v2636
        %v2687 = vmul.f32 %v663, %v2637
        %v2688 = vmul.f32 %v664, %v2638
        %v2689 = vmul.f32 %v665, %v2639
        %v2690 = vmul.f32 %v666, %v2640
        %v2691 = vmul.f32 %v667, %v2641
        %v2692 = vmul.f32 %v668, %v2642
        %v2693 = vmul.f32 %v669, %v2643
        %v2694 = vmul.f32 %v670, %v2644
        %v2695 = vmul.f32 %v671, %v2645
        %v2696 = vmul.f32 %v672, %v2646
        %v2697 = vmul.f32 %v673, %v2647
        %v2698 = vmul.f32 %v674, %v2648
        %v2699 = vmul.f32 %v675, %v2649
        %v2700 = vmul.f32 %v676, %v2650
        %v2701 = vmul.f32 %v677, %v2651
        %v2702 = vmul.f32 %v678, %v2652
        %v2703 = vmul.f32 %v679, %v2653
        %v2704 = vmul.f32 %v680, %v2654
        %v2705 = vmul.f32 %v681, %v2655
        %v2706 = vmul.f32 %v682, %v2656
        %v2707 = vmul.f32 %v683, %v2657
        %v2708 = vmul.f32 %v684, %v2658
        %v2709 = vmul.f32 %v685, %v2659
        %v2710 = vmul.f32 %v686, %v2660
        %v2711 = vmul.f32 %v687, %v2661
        %v2712 = vmul.f32 %v688, %v2662
        %v2713 = vmul.f32 %v689, %v2663
        %v2714 = vmul.f32 %v690, %v2664
        %v2715 = vmul.f32 %v691, %v2665
        %v2716 = vmul.f32 %v692, %v2666
        %v2717 = vmul.f32 %v693, %v2667
        %v2718 = vmul.f32 %v694, %v2668
        %v2719 = vmul.f32 %v695, %v2669
        %v2720 = vmul.f32 %v696, %v2622
        %v2721 = vmul.f32 %v697, %v2623
        %v2722 = vmul.f32 %v698, %v2624
        %v2723 = vmul.f32 %v699, %v2625
        %v2724 = vmul.f32 %v700, %v2626
        %v2725 = vmul.f32 %v701, %v2627
        %v2726 = vmul.f32 %v702, %v2628
        %v2727 = vmul.f32 %v703, %v2629
        %v2728 = vmul.f32 %v704, %v2630
        %v2729 = vmul.f32 %v705, %v2631
        %v2730 = vmul.f32 %v706, %v2632
        %v2731 = vmul.f32 %v707, %v2633
        %v2732 = vmul.f32 %v708, %v2634
        %v2733 = vmul.f32 %v709, %v2635
        %v2734 = vmul.f32 %v710, %v2636
        %v2735 = vmul.f32 %v711, %v2637
        %v2736 = vmul.f32 %v712, %v2638
        %v2737 = vmul.f32 %v713, %v2639
        %v2738 = vmul.f32 %v714, %v2640
        %v2739 = vmul.f32 %v715, %v2641
        %v2740 = vmul.f32 %v716, %v2642
        %v2741 = vmul.f32 %v717, %v2643
        %v2742 = vmul.f32 %v718, %v2644
        %v2743 = vmul.f32 %v719, %v2645
        %v2744 = vmul.f32 %v720, %v2646
        %v2745 = vmul.f32 %v721, %v2647
        %v2746 = vmul.f32 %v722, %v2648
        %v2747 = vmul.f32 %v723, %v2649
        %v2748 = vmul.f32 %v724, %v2650
        %v2749 = vmul.f32 %v725, %v2651
        %v2750 = vmul.f32 %v726, %v2652
        %v2751 = vmul.f32 %v727, %v2653
        %v2752 = vmul.f32 %v728, %v2654
        %v2753 = vmul.f32 %v729, %v2655
        %v2754 = vmul.f32 %v730, %v2656
        %v2755 = vmul.f32 %v731, %v2657
        %v2756 = vmul.f32 %v732, %v2658
        %v2757 = vmul.f32 %v733, %v2659
        %v2758 = vmul.f32 %v734, %v2660
        %v2759 = vmul.f32 %v735, %v2661
        %v2760 = vmul.f32 %v736, %v2662
        %v2761 = vmul.f32 %v737, %v2663
        %v2762 = vmul.f32 %v738, %v2664
        %v2763 = vmul.f32 %v739, %v2665
        %v2764 = vmul.f32 %v740, %v2666
        %v2765 = vmul.f32 %v741, %v2667
        %v2766 = vmul.f32 %v742, %v2668
        %v2767 = vmul.f32 %v743, %v2669
        %v2768 = vadd.f32 %v2672, %v2673
        %v2769 = vadd.f32 %v2768, %v2674
        %v2770 = vadd.f32 %v2769, %v2675
        %v2771 = vadd.f32 %v2770, %v2676
        %v2772 = vadd.f32 %v2771, %v2677
        %v2773 = vadd.f32 %v2772, %v2678
        %v2774 = vadd.f32 %v2773, %v2679
        %v2775 = vadd.f32 %v2774, %v2680
        %v2776 = vadd.f32 %v2775, %v2681
        %v2777 = vadd.f32 %v2776, %v2682
        %v2778 = vadd.f32 %v2777, %v2683
        %v2779 = vadd.f32 %v2778, %v2684
        %v2780 = vadd.f32 %v2779, %v2685
        %v2781 = vadd.f32 %v2780, %v2686
        %v2782 = vadd.f32 %v2781, %v2687
        %v2783 = vadd.f32 %v2782, %v2688
        %v2784 = vadd.f32 %v2783, %v2689
        %v2785 = vadd.f32 %v2784, %v2690
        %v2786 = vadd.f32 %v2785, %v2691
        %v2787 = vadd.f32 %v2786, %v2692
        %v2788 = vadd.f32 %v2787, %v2693
        %v2789 = vadd.f32 %v2788, %v2694
        %v2790 = vadd.f32 %v2789, %v2695
        %v2791 = vadd.f32 %v2790, %v2696
        %v2792 = vadd.f32 %v2791, %v2697
        %v2793 = vadd.f32 %v2792, %v2698
        %v2794 = vadd.f32 %v2793, %v2699
        %v2795 = vadd.f32 %v2794, %v2700
        %v2796 = vadd.f32 %v2795, %v2701
        %v2797 = vadd.f32 %v2796, %v2702
        %v2798 = vadd.f32 %v2797, %v2703
        %v2799 = vadd.f32 %v2798, %v2704
        %v2800 = vadd.f32 %v2799, %v2705
        %v2801 = vadd.f32 %v2800, %v2706
        %v2802 = vadd.f32 %v2801, %v2707
        %v2803 = vadd.f32 %v2802, %v2708
        %v2804 = vadd.f32 %v2803, %v2709
        %v2805 = vadd.f32 %v2804, %v2710
        %v2806 = vadd.f32 %v2805, %v2711
        %v2807 = vadd.f32 %v2806, %v2712
        %v2808 = vadd.f32 %v2807, %v2713
        %v2809 = vadd.f32 %v2808, %v2714
        %v2810 = vadd.f32 %v2809, %v2715
        %v2811 = vadd.f32 %v2810, %v2716
        %v2812 = vadd.f32 %v2811, %v2717
        %v2813 = vadd.f32 %v2812, %v2718
        %v2814 = vadd.f32 %v2813, %v2719
        %v2815 = vrot.slane %v2814, 4
        %v2816 = vadd.f32 %v2814, %v2815
        %v2817 = vrot.slane %v2816, 2
        %v2818 = vadd.f32 %v2816, %v2817
        %v2819 = vrot.slane %v2818, 1
        %v2820 = vadd.f32 %v2818, %v2819
        %v2821 = vadd.f32 %v2720, %v2721
        %v2822 = vadd.f32 %v2821, %v2722
        %v2823 = vadd.f32 %v2822, %v2723
        %v2824 = vadd.f32 %v2823, %v2724
        %v2825 = vadd.f32 %v2824, %v2725
        %v2826 = vadd.f32 %v2825, %v2726
        %v2827 = vadd.f32 %v2826, %v2727
        %v2828 = vadd.f32 %v2827, %v2728
        %v2829 = vadd.f32 %v2828, %v2729
        %v2830 = vadd.f32 %v2829, %v2730
        %v2831 = vadd.f32 %v2830, %v2731
        %v2832 = vadd.f32 %v2831, %v2732
        %v2833 = vadd.f32 %v2832, %v2733
        %v2834 = vadd.f32 %v2833, %v2734
        %v2835 = vadd.f32 %v2834, %v2735
        %v2836 = vadd.f32 %v2835, %v2736
        %v2837 = vadd.f32 %v2836, %v2737
        %v2838 = vadd.f32 %v2837, %v2738
        %v2839 = vadd.f32 %v2838, %v2739
        %v2840 = vadd.f32 %v2839, %v2740
        %v2841 = vadd.f32 %v2840, %v2741
        %v2842 = vadd.f32 %v2841, %v2742
        %v2843 = vadd.f32 %v2842, %v2743
        %v2844 = vadd.f32 %v2843, %v2744
        %v2845 = vadd.f32 %v2844, %v2745
        %v2846 = vadd.f32 %v2845, %v2746
        %v2847 = vadd.f32 %v2846, %v2747
        %v2848 = vadd.f32 %v2847, %v2748
        %v2849 = vadd.f32 %v2848, %v2749
        %v2850 = vadd.f32 %v2849, %v2750
        %v2851 = vadd.f32 %v2850, %v2751
        %v2852 = vadd.f32 %v2851, %v2752
        %v2853 = vadd.f32 %v2852, %v2753
        %v2854 = vadd.f32 %v2853, %v2754
        %v2855 = vadd.f32 %v2854, %v2755
        %v2856 = vadd.f32 %v2855, %v2756
        %v2857 = vadd.f32 %v2856, %v2757
        %v2858 = vadd.f32 %v2857, %v2758
        %v2859 = vadd.f32 %v2858, %v2759
        %v2860 = vadd.f32 %v2859, %v2760
        %v2861 = vadd.f32 %v2860, %v2761
        %v2862 = vadd.f32 %v2861, %v2762
        %v2863 = vadd.f32 %v2862, %v2763
        %v2864 = vadd.f32 %v2863, %v2764
        %v2865 = vadd.f32 %v2864, %v2765
        %v2866 = vadd.f32 %v2865, %v2766
        %v2867 = vadd.f32 %v2866, %v2767
        %v2868 = vrot.slane %v2867, 4
        %v2869 = vadd.f32 %v2867, %v2868
        %v2870 = vrot.slane %v2869, 2
        %v2871 = vadd.f32 %v2869, %v2870
        %v2872 = vrot.slane %v2871, 1
        %v2873 = vadd.f32 %v2871, %v2872
        %v2874 = vadd.f32 %v2670, %v2820
        %v2875 = vadd.f32 %v2671, %v2873
        %2876 = vst [vmem:[#allocation2 + $0x6] sm:$0x1] %v2874
        %2877 = vst [vmem:[#allocation2 + $0x16] sm:$0x1] %v2875
        %s2878 = scalar_lea.vmem %s616, 1344 [#allocation4]
        %v2879 = vld [vmem:[%s2878] sm:$0xf]
        %v2880 = vld [vmem:[%s2878 + $0x4] sm:$0xf]
        %v2881 = vld [vmem:[%s2878 + $0x8] sm:$0xf]
        %v2882 = vld [vmem:[%s2878 + $0xc] sm:$0xf]
        %v2883 = vld [vmem:[%s2878 + $0x10] sm:$0xf]
        %v2884 = vld [vmem:[%s2878 + $0x14] sm:$0xf]
        %v2885 = vld [vmem:[%s2878 + $0x18] sm:$0xf]
        %v2886 = vld [vmem:[%s2878 + $0x1c] sm:$0xf]
        %v2887 = vld [vmem:[%s2878 + $0x20] sm:$0xf]
        %v2888 = vld [vmem:[%s2878 + $0x24] sm:$0xf]
        %v2889 = vld [vmem:[%s2878 + $0x28] sm:$0xf]
        %v2890 = vld [vmem:[%s2878 + $0x2c] sm:$0xf]
        %v2891 = vld [vmem:[%s2878 + $0x30] sm:$0xf]
        %v2892 = vld [vmem:[%s2878 + $0x34] sm:$0xf]
        %v2893 = vld [vmem:[%s2878 + $0x38] sm:$0xf]
        %v2894 = vld [vmem:[%s2878 + $0x3c] sm:$0xf]
        %v2895 = vld [vmem:[%s2878 + $0x40] sm:$0xf]
        %v2896 = vld [vmem:[%s2878 + $0x44] sm:$0xf]
        %v2897 = vld [vmem:[%s2878 + $0x48] sm:$0xf]
        %v2898 = vld [vmem:[%s2878 + $0x4c] sm:$0xf]
        %v2899 = vld [vmem:[%s2878 + $0x50] sm:$0xf]
        %v2900 = vld [vmem:[%s2878 + $0x54] sm:$0xf]
        %v2901 = vld [vmem:[%s2878 + $0x58] sm:$0xf]
        %v2902 = vld [vmem:[%s2878 + $0x5c] sm:$0xf]
        %v2903 = vld [vmem:[%s2878 + $0x60] sm:$0xf]
        %v2904 = vld [vmem:[%s2878 + $0x64] sm:$0xf]
        %v2905 = vld [vmem:[%s2878 + $0x68] sm:$0xf]
        %v2906 = vld [vmem:[%s2878 + $0x6c] sm:$0xf]
        %v2907 = vld [vmem:[%s2878 + $0x70] sm:$0xf]
        %v2908 = vld [vmem:[%s2878 + $0x74] sm:$0xf]
        %v2909 = vld [vmem:[%s2878 + $0x78] sm:$0xf]
        %v2910 = vld [vmem:[%s2878 + $0x7c] sm:$0xf]
        %v2911 = vld [vmem:[%s2878 + $0x80] sm:$0xf]
        %v2912 = vld [vmem:[%s2878 + $0x84] sm:$0xf]
        %v2913 = vld [vmem:[%s2878 + $0x88] sm:$0xf]
        %v2914 = vld [vmem:[%s2878 + $0x8c] sm:$0xf]
        %v2915 = vld [vmem:[%s2878 + $0x90] sm:$0xf]
        %v2916 = vld [vmem:[%s2878 + $0x94] sm:$0xf]
        %v2917 = vld [vmem:[%s2878 + $0x98] sm:$0xf]
        %v2918 = vld [vmem:[%s2878 + $0x9c] sm:$0xf]
        %v2919 = vld [vmem:[%s2878 + $0xa0] sm:$0xf]
        %v2920 = vld [vmem:[%s2878 + $0xa4] sm:$0xf]
        %v2921 = vld [vmem:[%s2878 + $0xa8] sm:$0xf]
        %v2922 = vld [vmem:[%s2878 + $0xac] sm:$0xf]
        %v2923 = vld [vmem:[%s2878 + $0xb0] sm:$0xf]
        %v2924 = vld [vmem:[%s2878 + $0xb4] sm:$0xf]
        %v2925 = vld [vmem:[%s2878 + $0xb8] sm:$0xf]
        %v2926 = vld [vmem:[%s2878 + $0xbc] sm:$0xf]
        %v2927 = vunpack.c.l.bf16 %v2879
        %v2928 = vunpack.c.l.bf16 %v2880
        %v2929 = vunpack.c.l.bf16 %v2881
        %v2930 = vunpack.c.l.bf16 %v2882
        %v2931 = vunpack.c.l.bf16 %v2883
        %v2932 = vunpack.c.l.bf16 %v2884
        %v2933 = vunpack.c.l.bf16 %v2885
        %v2934 = vunpack.c.l.bf16 %v2886
        %v2935 = vunpack.c.l.bf16 %v2887
        %v2936 = vunpack.c.l.bf16 %v2888
        %v2937 = vunpack.c.l.bf16 %v2889
        %v2938 = vunpack.c.l.bf16 %v2890
        %v2939 = vunpack.c.l.bf16 %v2891
        %v2940 = vunpack.c.l.bf16 %v2892
        %v2941 = vunpack.c.l.bf16 %v2893
        %v2942 = vunpack.c.l.bf16 %v2894
        %v2943 = vunpack.c.l.bf16 %v2895
        %v2944 = vunpack.c.l.bf16 %v2896
        %v2945 = vunpack.c.l.bf16 %v2897
        %v2946 = vunpack.c.l.bf16 %v2898
        %v2947 = vunpack.c.l.bf16 %v2899
        %v2948 = vunpack.c.l.bf16 %v2900
        %v2949 = vunpack.c.l.bf16 %v2901
        %v2950 = vunpack.c.l.bf16 %v2902
        %v2951 = vunpack.c.l.bf16 %v2903
        %v2952 = vunpack.c.l.bf16 %v2904
        %v2953 = vunpack.c.l.bf16 %v2905
        %v2954 = vunpack.c.l.bf16 %v2906
        %v2955 = vunpack.c.l.bf16 %v2907
        %v2956 = vunpack.c.l.bf16 %v2908
        %v2957 = vunpack.c.l.bf16 %v2909
        %v2958 = vunpack.c.l.bf16 %v2910
        %v2959 = vunpack.c.l.bf16 %v2911
        %v2960 = vunpack.c.l.bf16 %v2912
        %v2961 = vunpack.c.l.bf16 %v2913
        %v2962 = vunpack.c.l.bf16 %v2914
        %v2963 = vunpack.c.l.bf16 %v2915
        %v2964 = vunpack.c.l.bf16 %v2916
        %v2965 = vunpack.c.l.bf16 %v2917
        %v2966 = vunpack.c.l.bf16 %v2918
        %v2967 = vunpack.c.l.bf16 %v2919
        %v2968 = vunpack.c.l.bf16 %v2920
        %v2969 = vunpack.c.l.bf16 %v2921
        %v2970 = vunpack.c.l.bf16 %v2922
        %v2971 = vunpack.c.l.bf16 %v2923
        %v2972 = vunpack.c.l.bf16 %v2924
        %v2973 = vunpack.c.l.bf16 %v2925
        %v2974 = vunpack.c.l.bf16 %v2926
        %v2975 = vld [vmem:[#allocation2 + $0x7] sm:$0x1]
        %v2976 = vld [vmem:[#allocation2 + $0x17] sm:$0x1]
        %v2977 = vmul.f32 %v648, %v2927
        %v2978 = vmul.f32 %v649, %v2928
        %v2979 = vmul.f32 %v650, %v2929
        %v2980 = vmul.f32 %v651, %v2930
        %v2981 = vmul.f32 %v652, %v2931
        %v2982 = vmul.f32 %v653, %v2932
        %v2983 = vmul.f32 %v654, %v2933
        %v2984 = vmul.f32 %v655, %v2934
        %v2985 = vmul.f32 %v656, %v2935
        %v2986 = vmul.f32 %v657, %v2936
        %v2987 = vmul.f32 %v658, %v2937
        %v2988 = vmul.f32 %v659, %v2938
        %v2989 = vmul.f32 %v660, %v2939
        %v2990 = vmul.f32 %v661, %v2940
        %v2991 = vmul.f32 %v662, %v2941
        %v2992 = vmul.f32 %v663, %v2942
        %v2993 = vmul.f32 %v664, %v2943
        %v2994 = vmul.f32 %v665, %v2944
        %v2995 = vmul.f32 %v666, %v2945
        %v2996 = vmul.f32 %v667, %v2946
        %v2997 = vmul.f32 %v668, %v2947
        %v2998 = vmul.f32 %v669, %v2948
        %v2999 = vmul.f32 %v670, %v2949
        %v3000 = vmul.f32 %v671, %v2950
        %v3001 = vmul.f32 %v672, %v2951
        %v3002 = vmul.f32 %v673, %v2952
        %v3003 = vmul.f32 %v674, %v2953
        %v3004 = vmul.f32 %v675, %v2954
        %v3005 = vmul.f32 %v676, %v2955
        %v3006 = vmul.f32 %v677, %v2956
        %v3007 = vmul.f32 %v678, %v2957
        %v3008 = vmul.f32 %v679, %v2958
        %v3009 = vmul.f32 %v680, %v2959
        %v3010 = vmul.f32 %v681, %v2960
        %v3011 = vmul.f32 %v682, %v2961
        %v3012 = vmul.f32 %v683, %v2962
        %v3013 = vmul.f32 %v684, %v2963
        %v3014 = vmul.f32 %v685, %v2964
        %v3015 = vmul.f32 %v686, %v2965
        %v3016 = vmul.f32 %v687, %v2966
        %v3017 = vmul.f32 %v688, %v2967
        %v3018 = vmul.f32 %v689, %v2968
        %v3019 = vmul.f32 %v690, %v2969
        %v3020 = vmul.f32 %v691, %v2970
        %v3021 = vmul.f32 %v692, %v2971
        %v3022 = vmul.f32 %v693, %v2972
        %v3023 = vmul.f32 %v694, %v2973
        %v3024 = vmul.f32 %v695, %v2974
        %v3025 = vmul.f32 %v696, %v2927
        %v3026 = vmul.f32 %v697, %v2928
        %v3027 = vmul.f32 %v698, %v2929
        %v3028 = vmul.f32 %v699, %v2930
        %v3029 = vmul.f32 %v700, %v2931
        %v3030 = vmul.f32 %v701, %v2932
        %v3031 = vmul.f32 %v702, %v2933
        %v3032 = vmul.f32 %v703, %v2934
        %v3033 = vmul.f32 %v704, %v2935
        %v3034 = vmul.f32 %v705, %v2936
        %v3035 = vmul.f32 %v706, %v2937
        %v3036 = vmul.f32 %v707, %v2938
        %v3037 = vmul.f32 %v708, %v2939
        %v3038 = vmul.f32 %v709, %v2940
        %v3039 = vmul.f32 %v710, %v2941
        %v3040 = vmul.f32 %v711, %v2942
        %v3041 = vmul.f32 %v712, %v2943
        %v3042 = vmul.f32 %v713, %v2944
        %v3043 = vmul.f32 %v714, %v2945
        %v3044 = vmul.f32 %v715, %v2946
        %v3045 = vmul.f32 %v716, %v2947
        %v3046 = vmul.f32 %v717, %v2948
        %v3047 = vmul.f32 %v718, %v2949
        %v3048 = vmul.f32 %v719, %v2950
        %v3049 = vmul.f32 %v720, %v2951
        %v3050 = vmul.f32 %v721, %v2952
        %v3051 = vmul.f32 %v722, %v2953
        %v3052 = vmul.f32 %v723, %v2954
        %v3053 = vmul.f32 %v724, %v2955
        %v3054 = vmul.f32 %v725, %v2956
        %v3055 = vmul.f32 %v726, %v2957
        %v3056 = vmul.f32 %v727, %v2958
        %v3057 = vmul.f32 %v728, %v2959
        %v3058 = vmul.f32 %v729, %v2960
        %v3059 = vmul.f32 %v730, %v2961
        %v3060 = vmul.f32 %v731, %v2962
        %v3061 = vmul.f32 %v732, %v2963
        %v3062 = vmul.f32 %v733, %v2964
        %v3063 = vmul.f32 %v734, %v2965
        %v3064 = vmul.f32 %v735, %v2966
        %v3065 = vmul.f32 %v736, %v2967
        %v3066 = vmul.f32 %v737, %v2968
        %v3067 = vmul.f32 %v738, %v2969
        %v3068 = vmul.f32 %v739, %v2970
        %v3069 = vmul.f32 %v740, %v2971
        %v3070 = vmul.f32 %v741, %v2972
        %v3071 = vmul.f32 %v742, %v2973
        %v3072 = vmul.f32 %v743, %v2974
        %v3073 = vadd.f32 %v2977, %v2978
        %v3074 = vadd.f32 %v3073, %v2979
        %v3075 = vadd.f32 %v3074, %v2980
        %v3076 = vadd.f32 %v3075, %v2981
        %v3077 = vadd.f32 %v3076, %v2982
        %v3078 = vadd.f32 %v3077, %v2983
        %v3079 = vadd.f32 %v3078, %v2984
        %v3080 = vadd.f32 %v3079, %v2985
        %v3081 = vadd.f32 %v3080, %v2986
        %v3082 = vadd.f32 %v3081, %v2987
        %v3083 = vadd.f32 %v3082, %v2988
        %v3084 = vadd.f32 %v3083, %v2989
        %v3085 = vadd.f32 %v3084, %v2990
        %v3086 = vadd.f32 %v3085, %v2991
        %v3087 = vadd.f32 %v3086, %v2992
        %v3088 = vadd.f32 %v3087, %v2993
        %v3089 = vadd.f32 %v3088, %v2994
        %v3090 = vadd.f32 %v3089, %v2995
        %v3091 = vadd.f32 %v3090, %v2996
        %v3092 = vadd.f32 %v3091, %v2997
        %v3093 = vadd.f32 %v3092, %v2998
        %v3094 = vadd.f32 %v3093, %v2999
        %v3095 = vadd.f32 %v3094, %v3000
        %v3096 = vadd.f32 %v3095, %v3001
        %v3097 = vadd.f32 %v3096, %v3002
        %v3098 = vadd.f32 %v3097, %v3003
        %v3099 = vadd.f32 %v3098, %v3004
        %v3100 = vadd.f32 %v3099, %v3005
        %v3101 = vadd.f32 %v3100, %v3006
        %v3102 = vadd.f32 %v3101, %v3007
        %v3103 = vadd.f32 %v3102, %v3008
        %v3104 = vadd.f32 %v3103, %v3009
        %v3105 = vadd.f32 %v3104, %v3010
        %v3106 = vadd.f32 %v3105, %v3011
        %v3107 = vadd.f32 %v3106, %v3012
        %v3108 = vadd.f32 %v3107, %v3013
        %v3109 = vadd.f32 %v3108, %v3014
        %v3110 = vadd.f32 %v3109, %v3015
        %v3111 = vadd.f32 %v3110, %v3016
        %v3112 = vadd.f32 %v3111, %v3017
        %v3113 = vadd.f32 %v3112, %v3018
        %v3114 = vadd.f32 %v3113, %v3019
        %v3115 = vadd.f32 %v3114, %v3020
        %v3116 = vadd.f32 %v3115, %v3021
        %v3117 = vadd.f32 %v3116, %v3022
        %v3118 = vadd.f32 %v3117, %v3023
        %v3119 = vadd.f32 %v3118, %v3024
        %v3120 = vrot.slane %v3119, 4
        %v3121 = vadd.f32 %v3119, %v3120
        %v3122 = vrot.slane %v3121, 2
        %v3123 = vadd.f32 %v3121, %v3122
        %v3124 = vrot.slane %v3123, 1
        %v3125 = vadd.f32 %v3123, %v3124
        %v3126 = vadd.f32 %v3025, %v3026
        %v3127 = vadd.f32 %v3126, %v3027
        %v3128 = vadd.f32 %v3127, %v3028
        %v3129 = vadd.f32 %v3128, %v3029
        %v3130 = vadd.f32 %v3129, %v3030
        %v3131 = vadd.f32 %v3130, %v3031
        %v3132 = vadd.f32 %v3131, %v3032
        %v3133 = vadd.f32 %v3132, %v3033
        %v3134 = vadd.f32 %v3133, %v3034
        %v3135 = vadd.f32 %v3134, %v3035
        %v3136 = vadd.f32 %v3135, %v3036
        %v3137 = vadd.f32 %v3136, %v3037
        %v3138 = vadd.f32 %v3137, %v3038
        %v3139 = vadd.f32 %v3138, %v3039
        %v3140 = vadd.f32 %v3139, %v3040
        %v3141 = vadd.f32 %v3140, %v3041
        %v3142 = vadd.f32 %v3141, %v3042
        %v3143 = vadd.f32 %v3142, %v3043
        %v3144 = vadd.f32 %v3143, %v3044
        %v3145 = vadd.f32 %v3144, %v3045
        %v3146 = vadd.f32 %v3145, %v3046
        %v3147 = vadd.f32 %v3146, %v3047
        %v3148 = vadd.f32 %v3147, %v3048
        %v3149 = vadd.f32 %v3148, %v3049
        %v3150 = vadd.f32 %v3149, %v3050
        %v3151 = vadd.f32 %v3150, %v3051
        %v3152 = vadd.f32 %v3151, %v3052
        %v3153 = vadd.f32 %v3152, %v3053
        %v3154 = vadd.f32 %v3153, %v3054
        %v3155 = vadd.f32 %v3154, %v3055
        %v3156 = vadd.f32 %v3155, %v3056
        %v3157 = vadd.f32 %v3156, %v3057
        %v3158 = vadd.f32 %v3157, %v3058
        %v3159 = vadd.f32 %v3158, %v3059
        %v3160 = vadd.f32 %v3159, %v3060
        %v3161 = vadd.f32 %v3160, %v3061
        %v3162 = vadd.f32 %v3161, %v3062
        %v3163 = vadd.f32 %v3162, %v3063
        %v3164 = vadd.f32 %v3163, %v3064
        %v3165 = vadd.f32 %v3164, %v3065
        %v3166 = vadd.f32 %v3165, %v3066
        %v3167 = vadd.f32 %v3166, %v3067
        %v3168 = vadd.f32 %v3167, %v3068
        %v3169 = vadd.f32 %v3168, %v3069
        %v3170 = vadd.f32 %v3169, %v3070
        %v3171 = vadd.f32 %v3170, %v3071
        %v3172 = vadd.f32 %v3171, %v3072
        %v3173 = vrot.slane %v3172, 4
        %v3174 = vadd.f32 %v3172, %v3173
        %v3175 = vrot.slane %v3174, 2
        %v3176 = vadd.f32 %v3174, %v3175
        %v3177 = vrot.slane %v3176, 1
        %v3178 = vadd.f32 %v3176, %v3177
        %v3179 = vadd.f32 %v2975, %v3125
        %v3180 = vadd.f32 %v2976, %v3178
        %3181 = vst [vmem:[#allocation2 + $0x7] sm:$0x1] %v3179
        %3182 = vst [vmem:[#allocation2 + $0x17] sm:$0x1] %v3180
        %s3183 = scalar_lea.vmem %s616, 1536 [#allocation4]
        %v3184 = vld [vmem:[%s3183] sm:$0xf]
        %v3185 = vld [vmem:[%s3183 + $0x4] sm:$0xf]
        %v3186 = vld [vmem:[%s3183 + $0x8] sm:$0xf]
        %v3187 = vld [vmem:[%s3183 + $0xc] sm:$0xf]
        %v3188 = vld [vmem:[%s3183 + $0x10] sm:$0xf]
        %v3189 = vld [vmem:[%s3183 + $0x14] sm:$0xf]
        %v3190 = vld [vmem:[%s3183 + $0x18] sm:$0xf]
        %v3191 = vld [vmem:[%s3183 + $0x1c] sm:$0xf]
        %v3192 = vld [vmem:[%s3183 + $0x20] sm:$0xf]
        %v3193 = vld [vmem:[%s3183 + $0x24] sm:$0xf]
        %v3194 = vld [vmem:[%s3183 + $0x28] sm:$0xf]
        %v3195 = vld [vmem:[%s3183 + $0x2c] sm:$0xf]
        %v3196 = vld [vmem:[%s3183 + $0x30] sm:$0xf]
        %v3197 = vld [vmem:[%s3183 + $0x34] sm:$0xf]
        %v3198 = vld [vmem:[%s3183 + $0x38] sm:$0xf]
        %v3199 = vld [vmem:[%s3183 + $0x3c] sm:$0xf]
        %v3200 = vld [vmem:[%s3183 + $0x40] sm:$0xf]
        %v3201 = vld [vmem:[%s3183 + $0x44] sm:$0xf]
        %v3202 = vld [vmem:[%s3183 + $0x48] sm:$0xf]
        %v3203 = vld [vmem:[%s3183 + $0x4c] sm:$0xf]
        %v3204 = vld [vmem:[%s3183 + $0x50] sm:$0xf]
        %v3205 = vld [vmem:[%s3183 + $0x54] sm:$0xf]
        %v3206 = vld [vmem:[%s3183 + $0x58] sm:$0xf]
        %v3207 = vld [vmem:[%s3183 + $0x5c] sm:$0xf]
        %v3208 = vld [vmem:[%s3183 + $0x60] sm:$0xf]
        %v3209 = vld [vmem:[%s3183 + $0x64] sm:$0xf]
        %v3210 = vld [vmem:[%s3183 + $0x68] sm:$0xf]
        %v3211 = vld [vmem:[%s3183 + $0x6c] sm:$0xf]
        %v3212 = vld [vmem:[%s3183 + $0x70] sm:$0xf]
        %v3213 = vld [vmem:[%s3183 + $0x74] sm:$0xf]
        %v3214 = vld [vmem:[%s3183 + $0x78] sm:$0xf]
        %v3215 = vld [vmem:[%s3183 + $0x7c] sm:$0xf]
        %v3216 = vld [vmem:[%s3183 + $0x80] sm:$0xf]
        %v3217 = vld [vmem:[%s3183 + $0x84] sm:$0xf]
        %v3218 = vld [vmem:[%s3183 + $0x88] sm:$0xf]
        %v3219 = vld [vmem:[%s3183 + $0x8c] sm:$0xf]
        %v3220 = vld [vmem:[%s3183 + $0x90] sm:$0xf]
        %v3221 = vld [vmem:[%s3183 + $0x94] sm:$0xf]
        %v3222 = vld [vmem:[%s3183 + $0x98] sm:$0xf]
        %v3223 = vld [vmem:[%s3183 + $0x9c] sm:$0xf]
        %v3224 = vld [vmem:[%s3183 + $0xa0] sm:$0xf]
        %v3225 = vld [vmem:[%s3183 + $0xa4] sm:$0xf]
        %v3226 = vld [vmem:[%s3183 + $0xa8] sm:$0xf]
        %v3227 = vld [vmem:[%s3183 + $0xac] sm:$0xf]
        %v3228 = vld [vmem:[%s3183 + $0xb0] sm:$0xf]
        %v3229 = vld [vmem:[%s3183 + $0xb4] sm:$0xf]
        %v3230 = vld [vmem:[%s3183 + $0xb8] sm:$0xf]
        %v3231 = vld [vmem:[%s3183 + $0xbc] sm:$0xf]
        %v3232 = vunpack.c.l.bf16 %v3184
        %v3233 = vunpack.c.l.bf16 %v3185
        %v3234 = vunpack.c.l.bf16 %v3186
        %v3235 = vunpack.c.l.bf16 %v3187
        %v3236 = vunpack.c.l.bf16 %v3188
        %v3237 = vunpack.c.l.bf16 %v3189
        %v3238 = vunpack.c.l.bf16 %v3190
        %v3239 = vunpack.c.l.bf16 %v3191
        %v3240 = vunpack.c.l.bf16 %v3192
        %v3241 = vunpack.c.l.bf16 %v3193
        %v3242 = vunpack.c.l.bf16 %v3194
        %v3243 = vunpack.c.l.bf16 %v3195
        %v3244 = vunpack.c.l.bf16 %v3196
        %v3245 = vunpack.c.l.bf16 %v3197
        %v3246 = vunpack.c.l.bf16 %v3198
        %v3247 = vunpack.c.l.bf16 %v3199
        %v3248 = vunpack.c.l.bf16 %v3200
        %v3249 = vunpack.c.l.bf16 %v3201
        %v3250 = vunpack.c.l.bf16 %v3202
        %v3251 = vunpack.c.l.bf16 %v3203
        %v3252 = vunpack.c.l.bf16 %v3204
        %v3253 = vunpack.c.l.bf16 %v3205
        %v3254 = vunpack.c.l.bf16 %v3206
        %v3255 = vunpack.c.l.bf16 %v3207
        %v3256 = vunpack.c.l.bf16 %v3208
        %v3257 = vunpack.c.l.bf16 %v3209
        %v3258 = vunpack.c.l.bf16 %v3210
        %v3259 = vunpack.c.l.bf16 %v3211
        %v3260 = vunpack.c.l.bf16 %v3212
        %v3261 = vunpack.c.l.bf16 %v3213
        %v3262 = vunpack.c.l.bf16 %v3214
        %v3263 = vunpack.c.l.bf16 %v3215
        %v3264 = vunpack.c.l.bf16 %v3216
        %v3265 = vunpack.c.l.bf16 %v3217
        %v3266 = vunpack.c.l.bf16 %v3218
        %v3267 = vunpack.c.l.bf16 %v3219
        %v3268 = vunpack.c.l.bf16 %v3220
        %v3269 = vunpack.c.l.bf16 %v3221
        %v3270 = vunpack.c.l.bf16 %v3222
        %v3271 = vunpack.c.l.bf16 %v3223
        %v3272 = vunpack.c.l.bf16 %v3224
        %v3273 = vunpack.c.l.bf16 %v3225
        %v3274 = vunpack.c.l.bf16 %v3226
        %v3275 = vunpack.c.l.bf16 %v3227
        %v3276 = vunpack.c.l.bf16 %v3228
        %v3277 = vunpack.c.l.bf16 %v3229
        %v3278 = vunpack.c.l.bf16 %v3230
        %v3279 = vunpack.c.l.bf16 %v3231
        %v3280 = vld [vmem:[#allocation2 + $0x8] sm:$0x1]
        %v3281 = vld [vmem:[#allocation2 + $0x18] sm:$0x1]
        %v3282 = vmul.f32 %v648, %v3232
        %v3283 = vmul.f32 %v649, %v3233
        %v3284 = vmul.f32 %v650, %v3234
        %v3285 = vmul.f32 %v651, %v3235
        %v3286 = vmul.f32 %v652, %v3236
        %v3287 = vmul.f32 %v653, %v3237
        %v3288 = vmul.f32 %v654, %v3238
        %v3289 = vmul.f32 %v655, %v3239
        %v3290 = vmul.f32 %v656, %v3240
        %v3291 = vmul.f32 %v657, %v3241
        %v3292 = vmul.f32 %v658, %v3242
        %v3293 = vmul.f32 %v659, %v3243
        %v3294 = vmul.f32 %v660, %v3244
        %v3295 = vmul.f32 %v661, %v3245
        %v3296 = vmul.f32 %v662, %v3246
        %v3297 = vmul.f32 %v663, %v3247
        %v3298 = vmul.f32 %v664, %v3248
        %v3299 = vmul.f32 %v665, %v3249
        %v3300 = vmul.f32 %v666, %v3250
        %v3301 = vmul.f32 %v667, %v3251
        %v3302 = vmul.f32 %v668, %v3252
        %v3303 = vmul.f32 %v669, %v3253
        %v3304 = vmul.f32 %v670, %v3254
        %v3305 = vmul.f32 %v671, %v3255
        %v3306 = vmul.f32 %v672, %v3256
        %v3307 = vmul.f32 %v673, %v3257
        %v3308 = vmul.f32 %v674, %v3258
        %v3309 = vmul.f32 %v675, %v3259
        %v3310 = vmul.f32 %v676, %v3260
        %v3311 = vmul.f32 %v677, %v3261
        %v3312 = vmul.f32 %v678, %v3262
        %v3313 = vmul.f32 %v679, %v3263
        %v3314 = vmul.f32 %v680, %v3264
        %v3315 = vmul.f32 %v681, %v3265
        %v3316 = vmul.f32 %v682, %v3266
        %v3317 = vmul.f32 %v683, %v3267
        %v3318 = vmul.f32 %v684, %v3268
        %v3319 = vmul.f32 %v685, %v3269
        %v3320 = vmul.f32 %v686, %v3270
        %v3321 = vmul.f32 %v687, %v3271
        %v3322 = vmul.f32 %v688, %v3272
        %v3323 = vmul.f32 %v689, %v3273
        %v3324 = vmul.f32 %v690, %v3274
        %v3325 = vmul.f32 %v691, %v3275
        %v3326 = vmul.f32 %v692, %v3276
        %v3327 = vmul.f32 %v693, %v3277
        %v3328 = vmul.f32 %v694, %v3278
        %v3329 = vmul.f32 %v695, %v3279
        %v3330 = vmul.f32 %v696, %v3232
        %v3331 = vmul.f32 %v697, %v3233
        %v3332 = vmul.f32 %v698, %v3234
        %v3333 = vmul.f32 %v699, %v3235
        %v3334 = vmul.f32 %v700, %v3236
        %v3335 = vmul.f32 %v701, %v3237
        %v3336 = vmul.f32 %v702, %v3238
        %v3337 = vmul.f32 %v703, %v3239
        %v3338 = vmul.f32 %v704, %v3240
        %v3339 = vmul.f32 %v705, %v3241
        %v3340 = vmul.f32 %v706, %v3242
        %v3341 = vmul.f32 %v707, %v3243
        %v3342 = vmul.f32 %v708, %v3244
        %v3343 = vmul.f32 %v709, %v3245
        %v3344 = vmul.f32 %v710, %v3246
        %v3345 = vmul.f32 %v711, %v3247
        %v3346 = vmul.f32 %v712, %v3248
        %v3347 = vmul.f32 %v713, %v3249
        %v3348 = vmul.f32 %v714, %v3250
        %v3349 = vmul.f32 %v715, %v3251
        %v3350 = vmul.f32 %v716, %v3252
        %v3351 = vmul.f32 %v717, %v3253
        %v3352 = vmul.f32 %v718, %v3254
        %v3353 = vmul.f32 %v719, %v3255
        %v3354 = vmul.f32 %v720, %v3256
        %v3355 = vmul.f32 %v721, %v3257
        %v3356 = vmul.f32 %v722, %v3258
        %v3357 = vmul.f32 %v723, %v3259
        %v3358 = vmul.f32 %v724, %v3260
        %v3359 = vmul.f32 %v725, %v3261
        %v3360 = vmul.f32 %v726, %v3262
        %v3361 = vmul.f32 %v727, %v3263
        %v3362 = vmul.f32 %v728, %v3264
        %v3363 = vmul.f32 %v729, %v3265
        %v3364 = vmul.f32 %v730, %v3266
        %v3365 = vmul.f32 %v731, %v3267
        %v3366 = vmul.f32 %v732, %v3268
        %v3367 = vmul.f32 %v733, %v3269
        %v3368 = vmul.f32 %v734, %v3270
        %v3369 = vmul.f32 %v735, %v3271
        %v3370 = vmul.f32 %v736, %v3272
        %v3371 = vmul.f32 %v737, %v3273
        %v3372 = vmul.f32 %v738, %v3274
        %v3373 = vmul.f32 %v739, %v3275
        %v3374 = vmul.f32 %v740, %v3276
        %v3375 = vmul.f32 %v741, %v3277
        %v3376 = vmul.f32 %v742, %v3278
        %v3377 = vmul.f32 %v743, %v3279
        %v3378 = vadd.f32 %v3282, %v3283
        %v3379 = vadd.f32 %v3378, %v3284
        %v3380 = vadd.f32 %v3379, %v3285
        %v3381 = vadd.f32 %v3380, %v3286
        %v3382 = vadd.f32 %v3381, %v3287
        %v3383 = vadd.f32 %v3382, %v3288
        %v3384 = vadd.f32 %v3383, %v3289
        %v3385 = vadd.f32 %v3384, %v3290
        %v3386 = vadd.f32 %v3385, %v3291
        %v3387 = vadd.f32 %v3386, %v3292
        %v3388 = vadd.f32 %v3387, %v3293
        %v3389 = vadd.f32 %v3388, %v3294
        %v3390 = vadd.f32 %v3389, %v3295
        %v3391 = vadd.f32 %v3390, %v3296
        %v3392 = vadd.f32 %v3391, %v3297
        %v3393 = vadd.f32 %v3392, %v3298
        %v3394 = vadd.f32 %v3393, %v3299
        %v3395 = vadd.f32 %v3394, %v3300
        %v3396 = vadd.f32 %v3395, %v3301
        %v3397 = vadd.f32 %v3396, %v3302
        %v3398 = vadd.f32 %v3397, %v3303
        %v3399 = vadd.f32 %v3398, %v3304
        %v3400 = vadd.f32 %v3399, %v3305
        %v3401 = vadd.f32 %v3400, %v3306
        %v3402 = vadd.f32 %v3401, %v3307
        %v3403 = vadd.f32 %v3402, %v3308
        %v3404 = vadd.f32 %v3403, %v3309
        %v3405 = vadd.f32 %v3404, %v3310
        %v3406 = vadd.f32 %v3405, %v3311
        %v3407 = vadd.f32 %v3406, %v3312
        %v3408 = vadd.f32 %v3407, %v3313
        %v3409 = vadd.f32 %v3408, %v3314
        %v3410 = vadd.f32 %v3409, %v3315
        %v3411 = vadd.f32 %v3410, %v3316
        %v3412 = vadd.f32 %v3411, %v3317
        %v3413 = vadd.f32 %v3412, %v3318
        %v3414 = vadd.f32 %v3413, %v3319
        %v3415 = vadd.f32 %v3414, %v3320
        %v3416 = vadd.f32 %v3415, %v3321
        %v3417 = vadd.f32 %v3416, %v3322
        %v3418 = vadd.f32 %v3417, %v3323
        %v3419 = vadd.f32 %v3418, %v3324
        %v3420 = vadd.f32 %v3419, %v3325
        %v3421 = vadd.f32 %v3420, %v3326
        %v3422 = vadd.f32 %v3421, %v3327
        %v3423 = vadd.f32 %v3422, %v3328
        %v3424 = vadd.f32 %v3423, %v3329
        %v3425 = vrot.slane %v3424, 4
        %v3426 = vadd.f32 %v3424, %v3425
        %v3427 = vrot.slane %v3426, 2
        %v3428 = vadd.f32 %v3426, %v3427
        %v3429 = vrot.slane %v3428, 1
        %v3430 = vadd.f32 %v3428, %v3429
        %v3431 = vadd.f32 %v3330, %v3331
        %v3432 = vadd.f32 %v3431, %v3332
        %v3433 = vadd.f32 %v3432, %v3333
        %v3434 = vadd.f32 %v3433, %v3334
        %v3435 = vadd.f32 %v3434, %v3335
        %v3436 = vadd.f32 %v3435, %v3336
        %v3437 = vadd.f32 %v3436, %v3337
        %v3438 = vadd.f32 %v3437, %v3338
        %v3439 = vadd.f32 %v3438, %v3339
        %v3440 = vadd.f32 %v3439, %v3340
        %v3441 = vadd.f32 %v3440, %v3341
        %v3442 = vadd.f32 %v3441, %v3342
        %v3443 = vadd.f32 %v3442, %v3343
        %v3444 = vadd.f32 %v3443, %v3344
        %v3445 = vadd.f32 %v3444, %v3345
        %v3446 = vadd.f32 %v3445, %v3346
        %v3447 = vadd.f32 %v3446, %v3347
        %v3448 = vadd.f32 %v3447, %v3348
        %v3449 = vadd.f32 %v3448, %v3349
        %v3450 = vadd.f32 %v3449, %v3350
        %v3451 = vadd.f32 %v3450, %v3351
        %v3452 = vadd.f32 %v3451, %v3352
        %v3453 = vadd.f32 %v3452, %v3353
        %v3454 = vadd.f32 %v3453, %v3354
        %v3455 = vadd.f32 %v3454, %v3355
        %v3456 = vadd.f32 %v3455, %v3356
        %v3457 = vadd.f32 %v3456, %v3357
        %v3458 = vadd.f32 %v3457, %v3358
        %v3459 = vadd.f32 %v3458, %v3359
        %v3460 = vadd.f32 %v3459, %v3360
        %v3461 = vadd.f32 %v3460, %v3361
        %v3462 = vadd.f32 %v3461, %v3362
        %v3463 = vadd.f32 %v3462, %v3363
        %v3464 = vadd.f32 %v3463, %v3364
        %v3465 = vadd.f32 %v3464, %v3365
        %v3466 = vadd.f32 %v3465, %v3366
        %v3467 = vadd.f32 %v3466, %v3367
        %v3468 = vadd.f32 %v3467, %v3368
        %v3469 = vadd.f32 %v3468, %v3369
        %v3470 = vadd.f32 %v3469, %v3370
        %v3471 = vadd.f32 %v3470, %v3371
        %v3472 = vadd.f32 %v3471, %v3372
        %v3473 = vadd.f32 %v3472, %v3373
        %v3474 = vadd.f32 %v3473, %v3374
        %v3475 = vadd.f32 %v3474, %v3375
        %v3476 = vadd.f32 %v3475, %v3376
        %v3477 = vadd.f32 %v3476, %v3377
        %v3478 = vrot.slane %v3477, 4
        %v3479 = vadd.f32 %v3477, %v3478
        %v3480 = vrot.slane %v3479, 2
        %v3481 = vadd.f32 %v3479, %v3480
        %v3482 = vrot.slane %v3481, 1
        %v3483 = vadd.f32 %v3481, %v3482
        %v3484 = vadd.f32 %v3280, %v3430
        %v3485 = vadd.f32 %v3281, %v3483
        %3486 = vst [vmem:[#allocation2 + $0x8] sm:$0x1] %v3484
        %3487 = vst [vmem:[#allocation2 + $0x18] sm:$0x1] %v3485
        %s3488 = scalar_lea.vmem %s616, 1728 [#allocation4]
        %v3489 = vld [vmem:[%s3488] sm:$0xf]
        %v3490 = vld [vmem:[%s3488 + $0x4] sm:$0xf]
        %v3491 = vld [vmem:[%s3488 + $0x8] sm:$0xf]
        %v3492 = vld [vmem:[%s3488 + $0xc] sm:$0xf]
        %v3493 = vld [vmem:[%s3488 + $0x10] sm:$0xf]
        %v3494 = vld [vmem:[%s3488 + $0x14] sm:$0xf]
        %v3495 = vld [vmem:[%s3488 + $0x18] sm:$0xf]
        %v3496 = vld [vmem:[%s3488 + $0x1c] sm:$0xf]
        %v3497 = vld [vmem:[%s3488 + $0x20] sm:$0xf]
        %v3498 = vld [vmem:[%s3488 + $0x24] sm:$0xf]
        %v3499 = vld [vmem:[%s3488 + $0x28] sm:$0xf]
        %v3500 = vld [vmem:[%s3488 + $0x2c] sm:$0xf]
        %v3501 = vld [vmem:[%s3488 + $0x30] sm:$0xf]
        %v3502 = vld [vmem:[%s3488 + $0x34] sm:$0xf]
        %v3503 = vld [vmem:[%s3488 + $0x38] sm:$0xf]
        %v3504 = vld [vmem:[%s3488 + $0x3c] sm:$0xf]
        %v3505 = vld [vmem:[%s3488 + $0x40] sm:$0xf]
        %v3506 = vld [vmem:[%s3488 + $0x44] sm:$0xf]
        %v3507 = vld [vmem:[%s3488 + $0x48] sm:$0xf]
        %v3508 = vld [vmem:[%s3488 + $0x4c] sm:$0xf]
        %v3509 = vld [vmem:[%s3488 + $0x50] sm:$0xf]
        %v3510 = vld [vmem:[%s3488 + $0x54] sm:$0xf]
        %v3511 = vld [vmem:[%s3488 + $0x58] sm:$0xf]
        %v3512 = vld [vmem:[%s3488 + $0x5c] sm:$0xf]
        %v3513 = vld [vmem:[%s3488 + $0x60] sm:$0xf]
        %v3514 = vld [vmem:[%s3488 + $0x64] sm:$0xf]
        %v3515 = vld [vmem:[%s3488 + $0x68] sm:$0xf]
        %v3516 = vld [vmem:[%s3488 + $0x6c] sm:$0xf]
        %v3517 = vld [vmem:[%s3488 + $0x70] sm:$0xf]
        %v3518 = vld [vmem:[%s3488 + $0x74] sm:$0xf]
        %v3519 = vld [vmem:[%s3488 + $0x78] sm:$0xf]
        %v3520 = vld [vmem:[%s3488 + $0x7c] sm:$0xf]
        %v3521 = vld [vmem:[%s3488 + $0x80] sm:$0xf]
        %v3522 = vld [vmem:[%s3488 + $0x84] sm:$0xf]
        %v3523 = vld [vmem:[%s3488 + $0x88] sm:$0xf]
        %v3524 = vld [vmem:[%s3488 + $0x8c] sm:$0xf]
        %v3525 = vld [vmem:[%s3488 + $0x90] sm:$0xf]
        %v3526 = vld [vmem:[%s3488 + $0x94] sm:$0xf]
        %v3527 = vld [vmem:[%s3488 + $0x98] sm:$0xf]
        %v3528 = vld [vmem:[%s3488 + $0x9c] sm:$0xf]
        %v3529 = vld [vmem:[%s3488 + $0xa0] sm:$0xf]
        %v3530 = vld [vmem:[%s3488 + $0xa4] sm:$0xf]
        %v3531 = vld [vmem:[%s3488 + $0xa8] sm:$0xf]
        %v3532 = vld [vmem:[%s3488 + $0xac] sm:$0xf]
        %v3533 = vld [vmem:[%s3488 + $0xb0] sm:$0xf]
        %v3534 = vld [vmem:[%s3488 + $0xb4] sm:$0xf]
        %v3535 = vld [vmem:[%s3488 + $0xb8] sm:$0xf]
        %v3536 = vld [vmem:[%s3488 + $0xbc] sm:$0xf]
        %v3537 = vunpack.c.l.bf16 %v3489
        %v3538 = vunpack.c.l.bf16 %v3490
        %v3539 = vunpack.c.l.bf16 %v3491
        %v3540 = vunpack.c.l.bf16 %v3492
        %v3541 = vunpack.c.l.bf16 %v3493
        %v3542 = vunpack.c.l.bf16 %v3494
        %v3543 = vunpack.c.l.bf16 %v3495
        %v3544 = vunpack.c.l.bf16 %v3496
        %v3545 = vunpack.c.l.bf16 %v3497
        %v3546 = vunpack.c.l.bf16 %v3498
        %v3547 = vunpack.c.l.bf16 %v3499
        %v3548 = vunpack.c.l.bf16 %v3500
        %v3549 = vunpack.c.l.bf16 %v3501
        %v3550 = vunpack.c.l.bf16 %v3502
        %v3551 = vunpack.c.l.bf16 %v3503
        %v3552 = vunpack.c.l.bf16 %v3504
        %v3553 = vunpack.c.l.bf16 %v3505
        %v3554 = vunpack.c.l.bf16 %v3506
        %v3555 = vunpack.c.l.bf16 %v3507
        %v3556 = vunpack.c.l.bf16 %v3508
        %v3557 = vunpack.c.l.bf16 %v3509
        %v3558 = vunpack.c.l.bf16 %v3510
        %v3559 = vunpack.c.l.bf16 %v3511
        %v3560 = vunpack.c.l.bf16 %v3512
        %v3561 = vunpack.c.l.bf16 %v3513
        %v3562 = vunpack.c.l.bf16 %v3514
        %v3563 = vunpack.c.l.bf16 %v3515
        %v3564 = vunpack.c.l.bf16 %v3516
        %v3565 = vunpack.c.l.bf16 %v3517
        %v3566 = vunpack.c.l.bf16 %v3518
        %v3567 = vunpack.c.l.bf16 %v3519
        %v3568 = vunpack.c.l.bf16 %v3520
        %v3569 = vunpack.c.l.bf16 %v3521
        %v3570 = vunpack.c.l.bf16 %v3522
        %v3571 = vunpack.c.l.bf16 %v3523
        %v3572 = vunpack.c.l.bf16 %v3524
        %v3573 = vunpack.c.l.bf16 %v3525
        %v3574 = vunpack.c.l.bf16 %v3526
        %v3575 = vunpack.c.l.bf16 %v3527
        %v3576 = vunpack.c.l.bf16 %v3528
        %v3577 = vunpack.c.l.bf16 %v3529
        %v3578 = vunpack.c.l.bf16 %v3530
        %v3579 = vunpack.c.l.bf16 %v3531
        %v3580 = vunpack.c.l.bf16 %v3532
        %v3581 = vunpack.c.l.bf16 %v3533
        %v3582 = vunpack.c.l.bf16 %v3534
        %v3583 = vunpack.c.l.bf16 %v3535
        %v3584 = vunpack.c.l.bf16 %v3536
        %v3585 = vld [vmem:[#allocation2 + $0x9] sm:$0x1]
        %v3586 = vld [vmem:[#allocation2 + $0x19] sm:$0x1]
        %v3587 = vmul.f32 %v648, %v3537
        %v3588 = vmul.f32 %v649, %v3538
        %v3589 = vmul.f32 %v650, %v3539
        %v3590 = vmul.f32 %v651, %v3540
        %v3591 = vmul.f32 %v652, %v3541
        %v3592 = vmul.f32 %v653, %v3542
        %v3593 = vmul.f32 %v654, %v3543
        %v3594 = vmul.f32 %v655, %v3544
        %v3595 = vmul.f32 %v656, %v3545
        %v3596 = vmul.f32 %v657, %v3546
        %v3597 = vmul.f32 %v658, %v3547
        %v3598 = vmul.f32 %v659, %v3548
        %v3599 = vmul.f32 %v660, %v3549
        %v3600 = vmul.f32 %v661, %v3550
        %v3601 = vmul.f32 %v662, %v3551
        %v3602 = vmul.f32 %v663, %v3552
        %v3603 = vmul.f32 %v664, %v3553
        %v3604 = vmul.f32 %v665, %v3554
        %v3605 = vmul.f32 %v666, %v3555
        %v3606 = vmul.f32 %v667, %v3556
        %v3607 = vmul.f32 %v668, %v3557
        %v3608 = vmul.f32 %v669, %v3558
        %v3609 = vmul.f32 %v670, %v3559
        %v3610 = vmul.f32 %v671, %v3560
        %v3611 = vmul.f32 %v672, %v3561
        %v3612 = vmul.f32 %v673, %v3562
        %v3613 = vmul.f32 %v674, %v3563
        %v3614 = vmul.f32 %v675, %v3564
        %v3615 = vmul.f32 %v676, %v3565
        %v3616 = vmul.f32 %v677, %v3566
        %v3617 = vmul.f32 %v678, %v3567
        %v3618 = vmul.f32 %v679, %v3568
        %v3619 = vmul.f32 %v680, %v3569
        %v3620 = vmul.f32 %v681, %v3570
        %v3621 = vmul.f32 %v682, %v3571
        %v3622 = vmul.f32 %v683, %v3572
        %v3623 = vmul.f32 %v684, %v3573
        %v3624 = vmul.f32 %v685, %v3574
        %v3625 = vmul.f32 %v686, %v3575
        %v3626 = vmul.f32 %v687, %v3576
        %v3627 = vmul.f32 %v688, %v3577
        %v3628 = vmul.f32 %v689, %v3578
        %v3629 = vmul.f32 %v690, %v3579
        %v3630 = vmul.f32 %v691, %v3580
        %v3631 = vmul.f32 %v692, %v3581
        %v3632 = vmul.f32 %v693, %v3582
        %v3633 = vmul.f32 %v694, %v3583
        %v3634 = vmul.f32 %v695, %v3584
        %v3635 = vmul.f32 %v696, %v3537
        %v3636 = vmul.f32 %v697, %v3538
        %v3637 = vmul.f32 %v698, %v3539
        %v3638 = vmul.f32 %v699, %v3540
        %v3639 = vmul.f32 %v700, %v3541
        %v3640 = vmul.f32 %v701, %v3542
        %v3641 = vmul.f32 %v702, %v3543
        %v3642 = vmul.f32 %v703, %v3544
        %v3643 = vmul.f32 %v704, %v3545
        %v3644 = vmul.f32 %v705, %v3546
        %v3645 = vmul.f32 %v706, %v3547
        %v3646 = vmul.f32 %v707, %v3548
        %v3647 = vmul.f32 %v708, %v3549
        %v3648 = vmul.f32 %v709, %v3550
        %v3649 = vmul.f32 %v710, %v3551
        %v3650 = vmul.f32 %v711, %v3552
        %v3651 = vmul.f32 %v712, %v3553
        %v3652 = vmul.f32 %v713, %v3554
        %v3653 = vmul.f32 %v714, %v3555
        %v3654 = vmul.f32 %v715, %v3556
        %v3655 = vmul.f32 %v716, %v3557
        %v3656 = vmul.f32 %v717, %v3558
        %v3657 = vmul.f32 %v718, %v3559
        %v3658 = vmul.f32 %v719, %v3560
        %v3659 = vmul.f32 %v720, %v3561
        %v3660 = vmul.f32 %v721, %v3562
        %v3661 = vmul.f32 %v722, %v3563
        %v3662 = vmul.f32 %v723, %v3564
        %v3663 = vmul.f32 %v724, %v3565
        %v3664 = vmul.f32 %v725, %v3566
        %v3665 = vmul.f32 %v726, %v3567
        %v3666 = vmul.f32 %v727, %v3568
        %v3667 = vmul.f32 %v728, %v3569
        %v3668 = vmul.f32 %v729, %v3570
        %v3669 = vmul.f32 %v730, %v3571
        %v3670 = vmul.f32 %v731, %v3572
        %v3671 = vmul.f32 %v732, %v3573
        %v3672 = vmul.f32 %v733, %v3574
        %v3673 = vmul.f32 %v734, %v3575
        %v3674 = vmul.f32 %v735, %v3576
        %v3675 = vmul.f32 %v736, %v3577
        %v3676 = vmul.f32 %v737, %v3578
        %v3677 = vmul.f32 %v738, %v3579
        %v3678 = vmul.f32 %v739, %v3580
        %v3679 = vmul.f32 %v740, %v3581
        %v3680 = vmul.f32 %v741, %v3582
        %v3681 = vmul.f32 %v742, %v3583
        %v3682 = vmul.f32 %v743, %v3584
        %v3683 = vadd.f32 %v3587, %v3588
        %v3684 = vadd.f32 %v3683, %v3589
        %v3685 = vadd.f32 %v3684, %v3590
        %v3686 = vadd.f32 %v3685, %v3591
        %v3687 = vadd.f32 %v3686, %v3592
        %v3688 = vadd.f32 %v3687, %v3593
        %v3689 = vadd.f32 %v3688, %v3594
        %v3690 = vadd.f32 %v3689, %v3595
        %v3691 = vadd.f32 %v3690, %v3596
        %v3692 = vadd.f32 %v3691, %v3597
        %v3693 = vadd.f32 %v3692, %v3598
        %v3694 = vadd.f32 %v3693, %v3599
        %v3695 = vadd.f32 %v3694, %v3600
        %v3696 = vadd.f32 %v3695, %v3601
        %v3697 = vadd.f32 %v3696, %v3602
        %v3698 = vadd.f32 %v3697, %v3603
        %v3699 = vadd.f32 %v3698, %v3604
        %v3700 = vadd.f32 %v3699, %v3605
        %v3701 = vadd.f32 %v3700, %v3606
        %v3702 = vadd.f32 %v3701, %v3607
        %v3703 = vadd.f32 %v3702, %v3608
        %v3704 = vadd.f32 %v3703, %v3609
        %v3705 = vadd.f32 %v3704, %v3610
        %v3706 = vadd.f32 %v3705, %v3611
        %v3707 = vadd.f32 %v3706, %v3612
        %v3708 = vadd.f32 %v3707, %v3613
        %v3709 = vadd.f32 %v3708, %v3614
        %v3710 = vadd.f32 %v3709, %v3615
        %v3711 = vadd.f32 %v3710, %v3616
        %v3712 = vadd.f32 %v3711, %v3617
        %v3713 = vadd.f32 %v3712, %v3618
        %v3714 = vadd.f32 %v3713, %v3619
        %v3715 = vadd.f32 %v3714, %v3620
        %v3716 = vadd.f32 %v3715, %v3621
        %v3717 = vadd.f32 %v3716, %v3622
        %v3718 = vadd.f32 %v3717, %v3623
        %v3719 = vadd.f32 %v3718, %v3624
        %v3720 = vadd.f32 %v3719, %v3625
        %v3721 = vadd.f32 %v3720, %v3626
        %v3722 = vadd.f32 %v3721, %v3627
        %v3723 = vadd.f32 %v3722, %v3628
        %v3724 = vadd.f32 %v3723, %v3629
        %v3725 = vadd.f32 %v3724, %v3630
        %v3726 = vadd.f32 %v3725, %v3631
        %v3727 = vadd.f32 %v3726, %v3632
        %v3728 = vadd.f32 %v3727, %v3633
        %v3729 = vadd.f32 %v3728, %v3634
        %v3730 = vrot.slane %v3729, 4
        %v3731 = vadd.f32 %v3729, %v3730
        %v3732 = vrot.slane %v3731, 2
        %v3733 = vadd.f32 %v3731, %v3732
        %v3734 = vrot.slane %v3733, 1
        %v3735 = vadd.f32 %v3733, %v3734
        %v3736 = vadd.f32 %v3635, %v3636
        %v3737 = vadd.f32 %v3736, %v3637
        %v3738 = vadd.f32 %v3737, %v3638
        %v3739 = vadd.f32 %v3738, %v3639
        %v3740 = vadd.f32 %v3739, %v3640
        %v3741 = vadd.f32 %v3740, %v3641
        %v3742 = vadd.f32 %v3741, %v3642
        %v3743 = vadd.f32 %v3742, %v3643
        %v3744 = vadd.f32 %v3743, %v3644
        %v3745 = vadd.f32 %v3744, %v3645
        %v3746 = vadd.f32 %v3745, %v3646
        %v3747 = vadd.f32 %v3746, %v3647
        %v3748 = vadd.f32 %v3747, %v3648
        %v3749 = vadd.f32 %v3748, %v3649
        %v3750 = vadd.f32 %v3749, %v3650
        %v3751 = vadd.f32 %v3750, %v3651
        %v3752 = vadd.f32 %v3751, %v3652
        %v3753 = vadd.f32 %v3752, %v3653
        %v3754 = vadd.f32 %v3753, %v3654
        %v3755 = vadd.f32 %v3754, %v3655
        %v3756 = vadd.f32 %v3755, %v3656
        %v3757 = vadd.f32 %v3756, %v3657
        %v3758 = vadd.f32 %v3757, %v3658
        %v3759 = vadd.f32 %v3758, %v3659
        %v3760 = vadd.f32 %v3759, %v3660
        %v3761 = vadd.f32 %v3760, %v3661
        %v3762 = vadd.f32 %v3761, %v3662
        %v3763 = vadd.f32 %v3762, %v3663
        %v3764 = vadd.f32 %v3763, %v3664
        %v3765 = vadd.f32 %v3764, %v3665
        %v3766 = vadd.f32 %v3765, %v3666
        %v3767 = vadd.f32 %v3766, %v3667
        %v3768 = vadd.f32 %v3767, %v3668
        %v3769 = vadd.f32 %v3768, %v3669
        %v3770 = vadd.f32 %v3769, %v3670
        %v3771 = vadd.f32 %v3770, %v3671
        %v3772 = vadd.f32 %v3771, %v3672
        %v3773 = vadd.f32 %v3772, %v3673
        %v3774 = vadd.f32 %v3773, %v3674
        %v3775 = vadd.f32 %v3774, %v3675
        %v3776 = vadd.f32 %v3775, %v3676
        %v3777 = vadd.f32 %v3776, %v3677
        %v3778 = vadd.f32 %v3777, %v3678
        %v3779 = vadd.f32 %v3778, %v3679
        %v3780 = vadd.f32 %v3779, %v3680
        %v3781 = vadd.f32 %v3780, %v3681
        %v3782 = vadd.f32 %v3781, %v3682
        %v3783 = vrot.slane %v3782, 4
        %v3784 = vadd.f32 %v3782, %v3783
        %v3785 = vrot.slane %v3784, 2
        %v3786 = vadd.f32 %v3784, %v3785
        %v3787 = vrot.slane %v3786, 1
        %v3788 = vadd.f32 %v3786, %v3787
        %v3789 = vadd.f32 %v3585, %v3735
        %v3790 = vadd.f32 %v3586, %v3788
        %3791 = vst [vmem:[#allocation2 + $0x9] sm:$0x1] %v3789
        %3792 = vst [vmem:[#allocation2 + $0x19] sm:$0x1] %v3790
        %p3793 = scmp.eq.s32.totalorder %s18, 3
        // Predicated region
        $region79: #{net_forward.1} parent=65 // pred_check
          %p3794 = pneg %p3793
        $region80: #{net_forward.1} parent=65 // pred_check_branch
          %3796 = sbr.rel (%p3794) target = $region82
        $region81: #{net_forward.1} parent=65 // pred_region
          %v3797 = vld [vmem:[#allocation2] sm:$0xff]
          %v3798 = vld [vmem:[#allocation2 + $0x8] sm:$0x3]
          %v3799 = vld [vmem:[#allocation2 + $0x10] sm:$0xff]
          %v3800 = vld [vmem:[#allocation2 + $0x18] sm:$0x3]
          %3801 = vadd.xlane.f32.xlu0 %v3797
          %v3802 = vpop.xlane.xlu0 %3801
          %vm3803 = vcmask 1041408
          %v3804 = vsel %vm3803, %v3798, 0.0
          %3805 = vadd.xlane.f32.xlu0 %v3804
          %v3806 = vpop.xlane.xlu0 %3805
          %3807 = vadd.xlane.f32.xlu0 %v3799
          %v3808 = vpop.xlane.xlu0 %3807
          %v3809 = vsel %vm3803, %v3800, 0.0
          %3810 = vadd.xlane.f32.xlu0 %v3809
          %v3811 = vpop.xlane.xlu0 %3810
          %v3812 = vld [vmem:[%s2] sm:$0x1]
          %v3814 = vlaneseq
          %v3815 = vshrl.u32 %v3814, 7
          %v3816 = vsub.s32 0, %v3815
          %v3817 = vrot.slane %v3812, %v3816
          %3819 = vbcast.lane.b32.xlu0 %v3817, 256
          %v3820 = vpop.permute.xlu0 %3819
          %s3822 = sor.u32 256, 8
          %3823 = vbcast.lane.b32.xlu0 %v3817, %s3822
          %v3824 = vpop.permute.xlu0 %3823
          %v3827 = vadd.f32 %v3802, %v3820
          %v3828 = vadd.f32 %v3806, %v3824
          %v3829 = vadd.f32 %v3808, %v3820
          %v3830 = vadd.f32 %v3811, %v3824
          %3835 = vset.pattern.permute.xlu0 0
          %3836 = vperm.xlu0 %3835, %v3827
          %v3837 = vpop.permute.xlu0 %3836
          %3838 = vset.pattern.permute.xlu0 0
          %3839 = vperm.xlu0 %3838, %v3828
          %v3840 = vpop.permute.xlu0 %3839
          %3841 = vset.pattern.permute.xlu0 0
          %3842 = vperm.xlu0 %3841, %v3829
          %v3843 = vpop.permute.xlu0 %3842
          %3844 = vset.pattern.permute.xlu0 0
          %3845 = vperm.xlu0 %3844, %v3830
          %v3846 = vpop.permute.xlu0 %3845
          %v3847 = vlaneseq
          %v3848 = vand.u32 %v3847, 127
          %v3849 = vlaneseq
          %v3850 = vshrl.u32 %v3849, 7
          %v3851 = vsub.s32 %v3848, %v3850
          %v3852 = vrot.slane %v3837, %v3851
          %v3853 = vadd.s32 %v3848, 4294967288
          %v3854 = vlaneseq
          %v3855 = vshrl.u32 %v3854, 7
          %v3856 = vsub.s32 %v3853, %v3855
          %v3857 = vrot.slane %v3840, %v3856
          %vm3858 = vcmask 130112
          %v3859 = vsel %vm3858, %v3857, %v3852
          %v3860 = vlaneseq
          %v3861 = vshrl.u32 %v3860, 7
          %v3862 = vsub.s32 %v3848, %v3861
          %v3863 = vrot.slane %v3843, %v3862
          %v3864 = vlaneseq
          %v3865 = vshrl.u32 %v3864, 7
          %v3866 = vsub.s32 %v3853, %v3865
          %v3867 = vrot.slane %v3846, %v3866
          %v3868 = vsel %vm3858, %v3867, %v3863
          %vm3869 = vcmask 1041409
          %v3870 = vsel %vm3869, %v3868, %v3859
          %vm3872 = vcmask 74752
          %3873 = vst.msk [vmem:[#allocation7] sm:$0x3] %vm3872, %v3870
        $region82: #{net_forward.1} parent=65 // pred_fallthru
          _
        // Predicated region
        $region83: #{net_forward.1} parent=65 // pred_check
          %p3874 = pneg %p104
        $region84: #{net_forward.1} parent=65 // pred_check_branch
          %3876 = sbr.rel (%p3874) target = $region86
        $region85: #{net_forward.1} parent=65 // pred_region
          %s3878 = ssub.s32 32, 32
          %3879 = vsyncadd [#allocation6], %s3878
          %s3881 = sshll.u32 [#allocation7], 4
          %s3882 = int_to_ptr.vmem [resolvable:$true] %s3881
          %3884 = dma.vmem_to_hbm [thread:$0]  %s3882, 32, %s3, [#allocation6]
        $region86: #{net_forward.1} parent=65 // pred_fallthru
          _
        // Predicated region
        $region87: #{net_forward.1} parent=65 // pred_check
          %p3885 = pneg %p104
        $region88: #{net_forward.1} parent=65 // pred_check_branch
          %3887 = sbr.rel (%p3885) target = $region90
        $region89: #{net_forward.1} parent=65 // pred_region
          %3888 = dma.done [#allocation6], 32
        $region90: #{net_forward.1} parent=65 // pred_fallthru
          _
      $region66: #{net_forward.1} parent=5 // pred_fallthru
        _
      %p3889 = scmp.le.s32.totalorder 2, %s13
      // Predicated region
      $region91: #{net_forward.1} parent=5 // pred_check
        %p3890 = pneg %p3889
      $region92: #{net_forward.1} parent=5 // pred_check_branch
        %3892 = sbr.rel (%p3890) target = $region94
      $region93: #{net_forward.1} parent=5 // pred_region
        %s3893 = ssub.s32 %s13, 2
      $region94: #{net_forward.1} parent=5 // pred_fallthru
        _
    $region6: #{net_forward.1} parent=1 // loop_footer
      %s17 = sadd.s32 1, %s13
    $region7: #{net_forward.1} parent=1 // loop_footer_branch
      %12 = sbr.rel target = $region3
    $region8: #{net_forward.1} parent=1 // loop_exit
      _
    %3894 = vsyncpa [#allocation5], 1
    %s3895 = scalar_lea.sflag [#allocation5], 1
    %3896 = vsyncpa %s3895, 1
    %3897 = vsyncpa [#allocation6], 1
    %s3898 = scalar_lea.sflag [#allocation6], 1
    %3899 = vsyncpa %s3898, 1

</llo_original>
